<compile_context>
chip_gen: v5e
topology: v5e:2x2
jax: 0.10.0
libtpu: 0.0.40
codegen_flags: <defaults>
</compile_context>

<pallas_src>
import jax
import jax.numpy as jnp
from jax import lax
from jax.experimental import pallas as pl
from jax.experimental.pallas import tpu as pltpu


# ----------------------------------------------------------------------------- kernel
def contextnet_kernel(
    x_ref,                          # [S, TB, D]   time-major input tile
    h0_ref, c0_ref,                 # [3, TB, H]   initial LSTM state
    wih0_ref, whh0_ref, b0_ref,     # layer 0: [D, 4H], [H, 4H], [1, 4H] (i/f/o cols *0.5)
    wih1_ref, whh1_ref, b1_ref,     # layer 1: [H, 4H], [H, 4H], [1, 4H]
    wih2_ref, whh2_ref, b2_ref,     # layer 2: [H, 4H], [H, 4H], [1, 4H]
    wl_ref, bl_ref,                 # linear_one: [H, H], [1, H]
    wo_ref, bo_ref,                 # out_layer : [H, OUT], [1, OUT]  (unpadded)
    y_ref,                          # [S, TB, OUT]
    h_out_ref, c_out_ref,           # [3, TB, H]
    seq_ref,                        # VMEM scratch [S, TB, H]   current layer's hidden seq
    gates_ref,                      # VMEM scratch [S, TB, 4H]  input-side gate pre-acts
):
    S, TB, D = x_ref.shape
    H = h0_ref.shape[2]
    f32 = jnp.float32

    def input_projection(src, in_dim, wih_ref, b_ref):
        # One big MXU call per layer, off the serial path:
        #   gates_in[t, b, :] = src[t, b, :] @ W_ih^T + (b_ih + b_hh)   (i/f/o pre-scaled)
        flat = src.reshape(S * TB, in_dim)
        g = jnp.dot(flat, wih_ref[...], preferred_element_type=f32) + b_ref[...]
        gates_ref[...] = g.reshape(S, TB, 4 * H)

    def recurrence(layer, whh_ref):
        w_hh = whh_ref[...]

        def step(t, carry):
            h, c = carry
            gates = gates_ref[t] + jnp.dot(h, w_hh, preferred_element_type=f32)
            # Single lane-dense tanh over all 4H gate columns. The i/f/o columns were
            # pre-scaled by 0.5 in the wrapper, so sigmoid(v) = 0.5 * (tanh(v/2) + 1).
            a = jnp.tanh(gates)
            i_g = 0.5 * (a[:, 0 * H:1 * H] + 1.0)
            f_g = 0.5 * (a[:, 1 * H:2 * H] + 1.0)
            g_g = a[:, 2 * H:3 * H]
            o_g = 0.5 * (a[:, 3 * H:4 * H] + 1.0)
            c_new = f_g * c + i_g * g_g
            h_new = o_g * jnp.tanh(c_new)
            seq_ref[t] = h_new
            return h_new, c_new

        h_fin, c_fin = lax.fori_loop(0, S, step, (h0_ref[layer], c0_ref[layer]),
                                     unroll=S <= 64)
        h_out_ref[layer] = h_fin
        c_out_ref[layer] = c_fin

    # Layer 0 consumes x; layers 1/2 consume the previous layer's hidden sequence.
    # gates_ref is filled from seq_ref BEFORE the recurrence overwrites seq_ref, and
    # lives in a separate scratch -> no read-after-write hazard.
    input_projection(x_ref[...], D, wih0_ref, b0_ref)
    recurrence(0, whh0_ref)
    input_projection(seq_ref[...], H, wih1_ref, b1_ref)
    recurrence(1, whh1_ref)
    input_projection(seq_ref[...], H, wih2_ref, b2_ref)
    recurrence(2, whh2_ref)

    # Fused head, hoisted out of the time loop: two large MXU matmuls + one dense store.
    seq_flat = seq_ref[...].reshape(S * TB, H)
    z = jnp.tanh(jnp.dot(seq_flat, wl_ref[...], preferred_element_type=f32) + bl_ref[...])
    y = jnp.dot(z, wo_ref[...], preferred_element_type=f32) + bo_ref[...]
    y_ref[...] = y.reshape(S, TB, y_ref.shape[2]).astype(y_ref.dtype)


# ----------------------------------------------------------------------------- wrapper
_VMEM_TILE_BUDGET = 24 * 1024 * 1024     # bytes for pipelined blocks + scratch per step
_VMEM_LIMIT_BYTES = 44 * 1024 * 1024     # scoped-VMEM request (< v7x's 64 MiB physical)


def _round_up(n, m):
    return -(-n // m) * m


def _pick_tile_b(B, S, D, H, out_dim):
    """Largest sublane-aligned batch tile that (a) fits the VMEM budget, counting lane
    (128) / sublane (8) padding of every buffer, and (b) leaves >= 2 grid steps when
    possible so both v7x TensorCores get work and DMA/compute pipelining is active."""
    def tile_bytes(tb):
        tbp = _round_up(tb, 8)
        elems = (2 * S * tbp * _round_up(D, 128)            # x block, double-buffered
                 + 2 * S * tbp * _round_up(out_dim, 128)    # y block, double-buffered
                 + 4 * 2 * 3 * tbp * _round_up(H, 128)      # h0/c0/h_n/c_n blocks
                 + S * tbp * _round_up(H, 128)              # seq scratch
                 + S * tbp * _round_up(4 * H, 128))         # gates scratch
        return 4 * elems
    cands = [c for c in (256, 128, 64, 32, 16, 8) if c <= B and B % c == 0]
    if not cands:
        return B                                  # small / odd batch: one full-extent block
    fitting = [c for c in cands if tile_bytes(c) <= _VMEM_TILE_BUDGET] or [cands[-1]]
    for c in fitting:                             # largest fitting tile with >= 2 steps
        if B // c >= 2:
            return c
    return fitting[0]


def _prep_lstm_layer(w_ih, w_hh, b_ih, b_hh, H):
    """PyTorch LSTM layout ([4H, in] / [4H, H], gate order i,f,g,o) -> [in, 4H] / [H, 4H]
    with bias_ih + bias_hh fused and the i/f/o gate columns pre-scaled by 0.5 so the
    kernel can evaluate all gates with one lane-dense tanh."""
    f32 = jnp.float32
    scale = jnp.concatenate([jnp.full((H,), 0.5), jnp.full((H,), 0.5),
                             jnp.ones((H,)), jnp.full((H,), 0.5)]).astype(f32)
    wih = jnp.asarray(w_ih, f32).T * scale
    whh = jnp.asarray(w_hh, f32).T * scale
    b = ((jnp.asarray(b_ih, f32) + jnp.asarray(b_hh, f32)) * scale).reshape(1, 4 * H)
    return wih, whh, b


def contextnet_forward(x, lstm_params, w_lin1, b_lin1, w_out, b_out,
                       hc=None, *, tile_b=None, interpret=False):
    """Pallas forward of ContextNet.

    x:           [B, S, input_dim]   (batch_first, like the PyTorch module)
    lstm_params: 3 tuples (w_ih [4H, in], w_hh [4H, H], b_ih [4H], b_hh [4H]).
    w_lin1 [H, H], b_lin1 [H]; w_out [out, H], b_out [out]   (PyTorch [out, in]).
    hc:          optional (h0 [3, B, H], c0 [3, B, H]); zeros if None.
    Returns (y [B, S, out], (h_n [3, B, H], c_n [3, B, H])).
    """
    f32 = jnp.float32
    B, S, D = x.shape
    H = w_lin1.shape[0]
    out_dim = w_out.shape[0]

    wih0, whh0, b0 = _prep_lstm_layer(*lstm_params[0], H)
    wih1, whh1, b1 = _prep_lstm_layer(*lstm_params[1], H)
    wih2, whh2, b2 = _prep_lstm_layer(*lstm_params[2], H)
    wl = jnp.asarray(w_lin1, f32).T
    bl = jnp.asarray(b_lin1, f32).reshape(1, H)
    wo = jnp.asarray(w_out, f32).T                       # [H, out] — unpadded
    bo = jnp.asarray(b_out, f32).reshape(1, out_dim)

    if hc is None:
        h0 = jnp.zeros((3, B, H), f32)
        c0 = jnp.zeros((3, B, H), f32)
    else:
        h0 = jnp.asarray(hc[0], f32)
        c0 = jnp.asarray(hc[1], f32)

    # Time-major input so the per-step gate read indexes the leading (major) axis.
    x_tm = jnp.transpose(jnp.asarray(x, f32), (1, 0, 2))     # [S, B, D]

    if tile_b is None:
        tile_b = _pick_tile_b(B, S, D, H, out_dim)
    assert B % tile_b == 0, "batch must be divisible by tile_b"
    grid = (B // tile_b,)

    def batch_tile(shape):          # block over batch axis (axis 1), full extent elsewhere
        return pl.BlockSpec(shape, lambda i: (0, i, 0))

    def resident(shape):            # same block every grid step -> stays VMEM-resident
        return pl.BlockSpec(shape, lambda i: (0, 0))

    in_specs = [
        batch_tile((S, tile_b, D)),          # x
        batch_tile((3, tile_b, H)),          # h0
        batch_tile((3, tile_b, H)),          # c0
        resident((D, 4 * H)), resident((H, 4 * H)), resident((1, 4 * H)),   # layer 0
        resident((H, 4 * H)), resident((H, 4 * H)), resident((1, 4 * H)),   # layer 1
        resident((H, 4 * H)), resident((H, 4 * H)), resident((1, 4 * H)),   # layer 2
        resident((H, H)), resident((1, H)),                                 # linear_one
        resident((H, out_dim)), resident((1, out_dim)),                     # out_layer
    ]
    out_specs = (
        batch_tile((S, tile_b, out_dim)),    # y (time-major, unpadded)
        batch_tile((3, tile_b, H)),          # h_n
        batch_tile((3, tile_b, H)),          # c_n
    )
    out_shape = (
        jax.ShapeDtypeStruct((S, B, out_dim), f32),
        jax.ShapeDtypeStruct((3, B, H), f32),
        jax.ShapeDtypeStruct((3, B, H), f32),
    )

    weight_elems = sum(int(a.size) for a in
                       (wih0, whh0, b0, wih1, whh1, b1, wih2, whh2, b2, wl, bl, wo, bo))
    flops = (2 * B * S * 4 * H * D                 # layer-0 input projection
             + 2 * 2 * B * S * 4 * H * H           # layer-1/2 input projections
             + 3 * 2 * B * S * 4 * H * H           # recurrent h @ W_hh
             + 2 * B * S * (H * H + H * out_dim))  # head
    cost = pl.CostEstimate(
        flops=int(flops),
        transcendentals=int(B * S * 16 * H),
        bytes_accessed=int(4 * (x_tm.size + h0.size + c0.size + weight_elems
                                + S * B * out_dim + 2 * 3 * B * H)),
    )

    y_tm, h_n, c_n = pl.pallas_call(
        contextnet_kernel,
        out_shape=out_shape,
        grid_spec=pltpu.PrefetchScalarGridSpec(
            num_scalar_prefetch=0,
            grid=grid,
            in_specs=in_specs,
            out_specs=out_specs,
            scratch_shapes=[
                pltpu.VMEM((S, tile_b, H), f32),        # hidden-sequence buffer
                pltpu.VMEM((S, tile_b, 4 * H), f32),    # precomputed input-side gates
            ],
        ),
        compiler_params=pltpu.CompilerParams(
            dimension_semantics=("parallel",),          # batch tiles across TensorCores
            vmem_limit_bytes=_VMEM_LIMIT_BYTES,
        ),
        cost_estimate=cost,
        interpret=interpret,
    )(x_tm, h0, c0, wih0, whh0, b0, wih1, whh1, b1, wih2, whh2, b2, wl, bl, wo, bo)

    # Unpadded (out_dim-wide) transpose back to batch_first; 16x cheaper than the old
    # lane-padded writeback + transpose.
    y = jnp.transpose(y_tm, (1, 0, 2))
    return y, (h_n, c_n)


# --------------------------------------------------------------------------- reference
def contextnet_ref(x, lstm_params, w_lin1, b_lin1, w_out, b_out, hc=None):
    """Pure-JAX reference mirroring torch semantics (true sigmoid, gate order i,f,g,o)."""
    B, S, _ = x.shape
    H = w_lin1.shape[0]
    if hc is None:
        h0 = jnp.zeros((3, B, H), jnp.float32)
        c0 = jnp.zeros((3, B, H), jnp.float32)
    else:
        h0, c0 = hc
    seq = jnp.asarray(x, jnp.float32)
    h_last, c_last = [], []
    for layer, (w_ih, w_hh, b_ih, b_hh) in enumerate(lstm_params):
        h, c = h0[layer], c0[layer]
        outs = []
        for t in range(S):
            gates = seq[:, t, :] @ w_ih.T + b_ih + h @ w_hh.T + b_hh
            i_g, f_g, g_g, o_g = jnp.split(gates, 4, axis=-1)
            i_g, f_g, o_g = jax.nn.sigmoid(i_g), jax.nn.sigmoid(f_g), jax.nn.sigmoid(o_g)
            g_g = jnp.tanh(g_g)
            c = f_g * c + i_g * g_g
            h = o_g * jnp.tanh(c)
            outs.append(h)
        seq = jnp.stack(outs, axis=1)
        h_last.append(h)
        c_last.append(c)
    z = jnp.tanh(seq @ w_lin1.T + b_lin1)
    y = z @ w_out.T + b_out
    return y, (jnp.stack(h_last), jnp.stack(c_last))


# --------------------------------------------------------------------------------- main
if __name__ == "__main__":
    batch, seq_len, input_dim, hidden_dim, output_dim = 8, 10, 16, 32, 8

    key = jax.random.PRNGKey(0)
    keys = jax.random.split(key, 20)
    ki = iter(keys)

    def uniform(k, shape, bound):
        return jax.random.uniform(k, shape, jnp.float32, -bound, bound)

    x = jax.random.normal(next(ki), (batch, seq_len, input_dim), jnp.float32)

    # nn.LSTM init: U(-1/sqrt(H), 1/sqrt(H)) for all weights/biases.
    lstm_params = []
    for layer in range(3):
        in_dim = input_dim if layer == 0 else hidden_dim
        bound = 1.0 / (hidden_dim ** 0.5)
        lstm_params.append((
            uniform(next(ki), (4 * hidden_dim, in_dim), bound),
            uniform(next(ki), (4 * hidden_dim, hidden_dim), bound),
            uniform(next(ki), (4 * hidden_dim,), bound),
            uniform(next(ki), (4 * hidden_dim,), bound),
        ))

    bound = 1.0 / (hidden_dim ** 0.5)
    w_lin1 = uniform(next(ki), (hidden_dim, hidden_dim), bound)
    b_lin1 = uniform(next(ki), (hidden_dim,), bound)
    w_out = uniform(next(ki), (output_dim, hidden_dim), bound)
    b_out = uniform(next(ki), (output_dim,), bound)

    # Path 1: hc=None (module default).
    y, (h_n, c_n) = contextnet_forward(x, lstm_params, w_lin1, b_lin1, w_out, b_out)
    y, h_n, c_n = jax.block_until_ready((y, h_n, c_n))
    y_r, (h_r, c_r) = contextnet_ref(x, lstm_params, w_lin1, b_lin1, w_out, b_out)
    assert y.shape == (batch, seq_len, output_dim)
    assert h_n.shape == (3, batch, hidden_dim) and c_n.shape == (3, batch, hidden_dim)
    assert jnp.allclose(y, y_r, atol=1e-4, rtol=1e-4)
    assert jnp.allclose(h_n, h_r, atol=1e-4, rtol=1e-4)
    assert jnp.allclose(c_n, c_r, atol=1e-4, rtol=1e-4)

    # Path 2: explicit initial (h, c).
    h0 = jax.random.normal(next(ki), (3, batch, hidden_dim), jnp.float32)
    c0 = jax.random.normal(next(ki), (3, batch, hidden_dim), jnp.float32)
    y2, (h2, c2) = contextnet_forward(x, lstm_params, w_lin1, b_lin1, w_out, b_out,
                                      hc=(h0, c0))
    y2, h2, c2 = jax.block_until_ready((y2, h2, c2))
    y2_r, (h2_r, c2_r) = contextnet_ref(x, lstm_params, w_lin1, b_lin1, w_out, b_out,
                                        hc=(h0, c0))
    assert jnp.allclose(y2, y2_r, atol=1e-4, rtol=1e-4)
    assert jnp.allclose(h2, h2_r, atol=1e-4, rtol=1e-4)
    assert jnp.allclose(c2, c2_r, atol=1e-4, rtol=1e-4)

    print("KERNEL_OK")
</pallas_src>

<mosaic_0001>
module attributes {stable_mosaic.version = 11 : i64} {
  func.func @contextnet_kernel(%arg0: i32, %arg1: memref<10x8x16xf32, #tpu.memory_space<vmem>>, %arg2: memref<3x8x32xf32, #tpu.memory_space<vmem>>, %arg3: memref<3x8x32xf32, #tpu.memory_space<vmem>>, %arg4: memref<16x128xf32, #tpu.memory_space<vmem>>, %arg5: memref<32x128xf32, #tpu.memory_space<vmem>>, %arg6: memref<1x128xf32, #tpu.memory_space<vmem>>, %arg7: memref<32x128xf32, #tpu.memory_space<vmem>>, %arg8: memref<32x128xf32, #tpu.memory_space<vmem>>, %arg9: memref<1x128xf32, #tpu.memory_space<vmem>>, %arg10: memref<32x128xf32, #tpu.memory_space<vmem>>, %arg11: memref<32x128xf32, #tpu.memory_space<vmem>>, %arg12: memref<1x128xf32, #tpu.memory_space<vmem>>, %arg13: memref<32x32xf32, #tpu.memory_space<vmem>>, %arg14: memref<1x32xf32, #tpu.memory_space<vmem>>, %arg15: memref<32x8xf32, #tpu.memory_space<vmem>>, %arg16: memref<1x8xf32, #tpu.memory_space<vmem>>, %arg17: memref<10x8x8xf32, #tpu.memory_space<vmem>>, %arg18: memref<3x8x32xf32, #tpu.memory_space<vmem>>, %arg19: memref<3x8x32xf32, #tpu.memory_space<vmem>>, %arg20: memref<10x8x32xf32, #tpu.memory_space<vmem>>, %arg21: memref<10x8x128xf32, #tpu.memory_space<vmem>>) attributes {dimension_semantics = [#tpu.dimension_semantics<parallel>], iteration_bounds = array<i64: 1>, scalar_prefetch = 0 : i64, scratch_operands = 2 : i64, tpu.core_type = #tpu.core_type<tc>, window_params = [{transform_indices = @transform_0, window_bounds = array<i64: 10, 8, 16>}, {transform_indices = @transform_1, window_bounds = array<i64: 3, 8, 32>}, {transform_indices = @transform_2, window_bounds = array<i64: 3, 8, 32>}, {pipeline_mode = #tpu.pipeline_mode<synchronous>, transform_indices = @transform_3, window_bounds = array<i64: 16, 128>}, {pipeline_mode = #tpu.pipeline_mode<synchronous>, transform_indices = @transform_4, window_bounds = array<i64: 32, 128>}, {pipeline_mode = #tpu.pipeline_mode<synchronous>, transform_indices = @transform_5, window_bounds = array<i64: 1, 128>}, {pipeline_mode = #tpu.pipeline_mode<synchronous>, transform_indices = @transform_6, window_bounds = array<i64: 32, 128>}, {pipeline_mode = #tpu.pipeline_mode<synchronous>, transform_indices = @transform_7, window_bounds = array<i64: 32, 128>}, {pipeline_mode = #tpu.pipeline_mode<synchronous>, transform_indices = @transform_8, window_bounds = array<i64: 1, 128>}, {pipeline_mode = #tpu.pipeline_mode<synchronous>, transform_indices = @transform_9, window_bounds = array<i64: 32, 128>}, {pipeline_mode = #tpu.pipeline_mode<synchronous>, transform_indices = @transform_10, window_bounds = array<i64: 32, 128>}, {pipeline_mode = #tpu.pipeline_mode<synchronous>, transform_indices = @transform_11, window_bounds = array<i64: 1, 128>}, {pipeline_mode = #tpu.pipeline_mode<synchronous>, transform_indices = @transform_12, window_bounds = array<i64: 32, 32>}, {pipeline_mode = #tpu.pipeline_mode<synchronous>, transform_indices = @transform_13, window_bounds = array<i64: 1, 32>}, {pipeline_mode = #tpu.pipeline_mode<synchronous>, transform_indices = @transform_14, window_bounds = array<i64: 32, 8>}, {pipeline_mode = #tpu.pipeline_mode<synchronous>, transform_indices = @transform_15, window_bounds = array<i64: 1, 8>}, {transform_indices = @transform_16, window_bounds = array<i64: 10, 8, 8>}, {transform_indices = @transform_17, window_bounds = array<i64: 3, 8, 32>}, {transform_indices = @transform_18, window_bounds = array<i64: 3, 8, 32>}]} {
    %c0 = arith.constant 0 : index
    %c0_0 = arith.constant 0 : index
    %c0_1 = arith.constant 0 : index
    %0 = vector.load %arg1[%c0, %c0_0, %c0_1] : memref<10x8x16xf32, #tpu.memory_space<vmem>>, vector<10x8x16xf32>
    %1 = vector.shape_cast %0 : vector<10x8x16xf32> to vector<80x16xf32>
    %c0_2 = arith.constant 0 : index
    %c0_3 = arith.constant 0 : index
    %2 = vector.load %arg4[%c0_2, %c0_3] : memref<16x128xf32, #tpu.memory_space<vmem>>, vector<16x128xf32>
    %cst = arith.constant dense<0.000000e+00> : vector<80x128xf32>
    %3 = tpu.matmul %1, %2, %cst {dimension_numbers = #tpu.dot_dimension_numbers<[1], [0], [0], [1], [0, 0, 1, 1], [], []>} : vector<80x16xf32>, vector<16x128xf32>, vector<80x128xf32> -> vector<80x128xf32>
    %c0_4 = arith.constant 0 : index
    %c0_5 = arith.constant 0 : index
    %4 = vector.load %arg6[%c0_4, %c0_5] : memref<1x128xf32, #tpu.memory_space<vmem>>, vector<1x128xf32>
    %5 = vector.broadcast %4 : vector<1x128xf32> to vector<80x128xf32>
    %6 = arith.addf %3, %5 : vector<80x128xf32>
    %7 = vector.shape_cast %6 : vector<80x128xf32> to vector<10x8x128xf32>
    %c0_6 = arith.constant 0 : index
    %c0_7 = arith.constant 0 : index
    %c0_8 = arith.constant 0 : index
    %8 = vector.load %arg21[%c0_6, %c0_7, %c0_8] : memref<10x8x128xf32, #tpu.memory_space<vmem>>, vector<10x8x128xf32>
    tpu.vector_store %arg21[%c0_6, %c0_7, %c0_8], %7 {strides = array<i32>} : memref<10x8x128xf32, #tpu.memory_space<vmem>>, vector<10x8x128xf32>,
    %c0_9 = arith.constant 0 : index
    %c0_10 = arith.constant 0 : index
    %9 = vector.load %arg5[%c0_9, %c0_10] : memref<32x128xf32, #tpu.memory_space<vmem>>, vector<32x128xf32>
    %c0_11 = arith.constant 0 : index
    %c0_12 = arith.constant 0 : index
    %c0_13 = arith.constant 0 : index
    %10 = vector.load %arg2[%c0_11, %c0_12, %c0_13] : memref<3x8x32xf32, #tpu.memory_space<vmem>>, vector<1x8x32xf32>
    %11 = vector.shape_cast %10 : vector<1x8x32xf32> to vector<8x32xf32>
    %c0_14 = arith.constant 0 : index
    %c0_15 = arith.constant 0 : index
    %c0_16 = arith.constant 0 : index
    %12 = vector.load %arg3[%c0_14, %c0_15, %c0_16] : memref<3x8x32xf32, #tpu.memory_space<vmem>>, vector<1x8x32xf32>
    %13 = vector.shape_cast %12 : vector<1x8x32xf32> to vector<8x32xf32>
    %c0_i32 = arith.constant 0 : i32
    %14 = arith.index_cast %c0_i32 : i32 to index
    %c0_17 = arith.constant 0 : index
    %c0_18 = arith.constant 0 : index
    %15 = vector.load %arg21[%14, %c0_17, %c0_18] : memref<10x8x128xf32, #tpu.memory_space<vmem>>, vector<1x8x128xf32>
    %16 = vector.shape_cast %15 : vector<1x8x128xf32> to vector<8x128xf32>
    %cst_19 = arith.constant dense<0.000000e+00> : vector<8x128xf32>
    %17 = tpu.matmul %11, %9, %cst_19 {dimension_numbers = #tpu.dot_dimension_numbers<[1], [0], [0], [1], [0, 0, 1, 1], [], []>} : vector<8x32xf32>, vector<32x128xf32>, vector<8x128xf32> -> vector<8x128xf32>
    %18 = arith.addf %16, %17 : vector<8x128xf32>
    %19 = math.tanh %18 : vector<8x128xf32>
    %20 = vector.extract_strided_slice %19 {offsets = [0, 0], sizes = [8, 32], strides = [1, 1]} : vector<8x128xf32> to vector<8x32xf32>
    %cst_20 = arith.constant 1.000000e+00 : f32
    %21 = vector.broadcast %cst_20 : f32 to vector<8x32xf32>
    %22 = arith.addf %20, %21 : vector<8x32xf32>
    %cst_21 = arith.constant 5.000000e-01 : f32
    %23 = vector.broadcast %cst_21 : f32 to vector<8x32xf32>
    %24 = arith.mulf %23, %22 : vector<8x32xf32>
    %25 = vector.extract_strided_slice %19 {offsets = [0, 32], sizes = [8, 32], strides = [1, 1]} : vector<8x128xf32> to vector<8x32xf32>
    %cst_22 = arith.constant 1.000000e+00 : f32
    %26 = vector.broadcast %cst_22 : f32 to vector<8x32xf32>
    %27 = arith.addf %25, %26 : vector<8x32xf32>
    %cst_23 = arith.constant 5.000000e-01 : f32
    %28 = vector.broadcast %cst_23 : f32 to vector<8x32xf32>
    %29 = arith.mulf %28, %27 : vector<8x32xf32>
    %30 = vector.extract_strided_slice %19 {offsets = [0, 64], sizes = [8, 32], strides = [1, 1]} : vector<8x128xf32> to vector<8x32xf32>
    %31 = vector.extract_strided_slice %19 {offsets = [0, 96], sizes = [8, 32], strides = [1, 1]} : vector<8x128xf32> to vector<8x32xf32>
    %cst_24 = arith.constant 1.000000e+00 : f32
    %32 = vector.broadcast %cst_24 : f32 to vector<8x32xf32>
    %33 = arith.addf %31, %32 : vector<8x32xf32>
    %cst_25 = arith.constant 5.000000e-01 : f32
    %34 = vector.broadcast %cst_25 : f32 to vector<8x32xf32>
    %35 = arith.mulf %34, %33 : vector<8x32xf32>
    %36 = arith.mulf %29, %13 : vector<8x32xf32>
    %37 = arith.mulf %24, %30 : vector<8x32xf32>
    %38 = arith.addf %36, %37 : vector<8x32xf32>
    %39 = math.tanh %38 : vector<8x32xf32>
    %40 = arith.mulf %35, %39 : vector<8x32xf32>
    %41 = arith.index_cast %c0_i32 : i32 to index
    %c0_26 = arith.constant 0 : index
    %c0_27 = arith.constant 0 : index
    %42 = vector.load %arg20[%41, %c0_26, %c0_27] : memref<10x8x32xf32, #tpu.memory_space<vmem>>, vector<1x8x32xf32>
    %43 = vector.shape_cast %42 : vector<1x8x32xf32> to vector<8x32xf32>
    %44 = vector.shape_cast %40 : vector<8x32xf32> to vector<1x8x32xf32>
    tpu.vector_store %arg20[%41, %c0_26, %c0_27], %44 {strides = array<i32>} : memref<10x8x32xf32, #tpu.memory_space<vmem>>, vector<1x8x32xf32>,
    %c1_i32 = arith.constant 1 : i32
    %45 = arith.index_cast %c1_i32 : i32 to index
    %c0_28 = arith.constant 0 : index
    %c0_29 = arith.constant 0 : index
    %46 = vector.load %arg21[%45, %c0_28, %c0_29] : memref<10x8x128xf32, #tpu.memory_space<vmem>>, vector<1x8x128xf32>
    %47 = vector.shape_cast %46 : vector<1x8x128xf32> to vector<8x128xf32>
    %cst_30 = arith.constant dense<0.000000e+00> : vector<8x128xf32>
    %48 = tpu.matmul %40, %9, %cst_30 {dimension_numbers = #tpu.dot_dimension_numbers<[1], [0], [0], [1], [0, 0, 1, 1], [], []>} : vector<8x32xf32>, vector<32x128xf32>, vector<8x128xf32> -> vector<8x128xf32>
    %49 = arith.addf %47, %48 : vector<8x128xf32>
    %50 = math.tanh %49 : vector<8x128xf32>
    %51 = vector.extract_strided_slice %50 {offsets = [0, 0], sizes = [8, 32], strides = [1, 1]} : vector<8x128xf32> to vector<8x32xf32>
    %cst_31 = arith.constant 1.000000e+00 : f32
    %52 = vector.broadcast %cst_31 : f32 to vector<8x32xf32>
    %53 = arith.addf %51, %52 : vector<8x32xf32>
    %cst_32 = arith.constant 5.000000e-01 : f32
    %54 = vector.broadcast %cst_32 : f32 to vector<8x32xf32>
    %55 = arith.mulf %54, %53 : vector<8x32xf32>
    %56 = vector.extract_strided_slice %50 {offsets = [0, 32], sizes = [8, 32], strides = [1, 1]} : vector<8x128xf32> to vector<8x32xf32>
    %cst_33 = arith.constant 1.000000e+00 : f32
    %57 = vector.broadcast %cst_33 : f32 to vector<8x32xf32>
    %58 = arith.addf %56, %57 : vector<8x32xf32>
    %cst_34 = arith.constant 5.000000e-01 : f32
    %59 = vector.broadcast %cst_34 : f32 to vector<8x32xf32>
    %60 = arith.mulf %59, %58 : vector<8x32xf32>
    %61 = vector.extract_strided_slice %50 {offsets = [0, 64], sizes = [8, 32], strides = [1, 1]} : vector<8x128xf32> to vector<8x32xf32>
    %62 = vector.extract_strided_slice %50 {offsets = [0, 96], sizes = [8, 32], strides = [1, 1]} : vector<8x128xf32> to vector<8x32xf32>
    %cst_35 = arith.constant 1.000000e+00 : f32
    %63 = vector.broadcast %cst_35 : f32 to vector<8x32xf32>
    %64 = arith.addf %62, %63 : vector<8x32xf32>
    %cst_36 = arith.constant 5.000000e-01 : f32
    %65 = vector.broadcast %cst_36 : f32 to vector<8x32xf32>
    %66 = arith.mulf %65, %64 : vector<8x32xf32>
    %67 = arith.mulf %60, %38 : vector<8x32xf32>
    %68 = arith.mulf %55, %61 : vector<8x32xf32>
    %69 = arith.addf %67, %68 : vector<8x32xf32>
    %70 = math.tanh %69 : vector<8x32xf32>
    %71 = arith.mulf %66, %70 : vector<8x32xf32>
    %72 = arith.index_cast %c1_i32 : i32 to index
    %c0_37 = arith.constant 0 : index
    %c0_38 = arith.constant 0 : index
    %73 = vector.load %arg20[%72, %c0_37, %c0_38] : memref<10x8x32xf32, #tpu.memory_space<vmem>>, vector<1x8x32xf32>
    %74 = vector.shape_cast %73 : vector<1x8x32xf32> to vector<8x32xf32>
    %75 = vector.shape_cast %71 : vector<8x32xf32> to vector<1x8x32xf32>
    tpu.vector_store %arg20[%72, %c0_37, %c0_38], %75 {strides = array<i32>} : memref<10x8x32xf32, #tpu.memory_space<vmem>>, vector<1x8x32xf32>,
    %c2_i32 = arith.constant 2 : i32
    %76 = arith.index_cast %c2_i32 : i32 to index
    %c0_39 = arith.constant 0 : index
    %c0_40 = arith.constant 0 : index
    %77 = vector.load %arg21[%76, %c0_39, %c0_40] : memref<10x8x128xf32, #tpu.memory_space<vmem>>, vector<1x8x128xf32>
    %78 = vector.shape_cast %77 : vector<1x8x128xf32> to vector<8x128xf32>
    %cst_41 = arith.constant dense<0.000000e+00> : vector<8x128xf32>
    %79 = tpu.matmul %71, %9, %cst_41 {dimension_numbers = #tpu.dot_dimension_numbers<[1], [0], [0], [1], [0, 0, 1, 1], [], []>} : vector<8x32xf32>, vector<32x128xf32>, vector<8x128xf32> -> vector<8x128xf32>
    %80 = arith.addf %78, %79 : vector<8x128xf32>
    %81 = math.tanh %80 : vector<8x128xf32>
    %82 = vector.extract_strided_slice %81 {offsets = [0, 0], sizes = [8, 32], strides = [1, 1]} : vector<8x128xf32> to vector<8x32xf32>
    %cst_42 = arith.constant 1.000000e+00 : f32
    %83 = vector.broadcast %cst_42 : f32 to vector<8x32xf32>
    %84 = arith.addf %82, %83 : vector<8x32xf32>
    %cst_43 = arith.constant 5.000000e-01 : f32
    %85 = vector.broadcast %cst_43 : f32 to vector<8x32xf32>
    %86 = arith.mulf %85, %84 : vector<8x32xf32>
    %87 = vector.extract_strided_slice %81 {offsets = [0, 32], sizes = [8, 32], strides = [1, 1]} : vector<8x128xf32> to vector<8x32xf32>
    %cst_44 = arith.constant 1.000000e+00 : f32
    %88 = vector.broadcast %cst_44 : f32 to vector<8x32xf32>
    %89 = arith.addf %87, %88 : vector<8x32xf32>
    %cst_45 = arith.constant 5.000000e-01 : f32
    %90 = vector.broadcast %cst_45 : f32 to vector<8x32xf32>
    %91 = arith.mulf %90, %89 : vector<8x32xf32>
    %92 = vector.extract_strided_slice %81 {offsets = [0, 64], sizes = [8, 32], strides = [1, 1]} : vector<8x128xf32> to vector<8x32xf32>
    %93 = vector.extract_strided_slice %81 {offsets = [0, 96], sizes = [8, 32], strides = [1, 1]} : vector<8x128xf32> to vector<8x32xf32>
    %cst_46 = arith.constant 1.000000e+00 : f32
    %94 = vector.broadcast %cst_46 : f32 to vector<8x32xf32>
    %95 = arith.addf %93, %94 : vector<8x32xf32>
    %cst_47 = arith.constant 5.000000e-01 : f32
    %96 = vector.broadcast %cst_47 : f32 to vector<8x32xf32>
    %97 = arith.mulf %96, %95 : vector<8x32xf32>
    %98 = arith.mulf %91, %69 : vector<8x32xf32>
    %99 = arith.mulf %86, %92 : vector<8x32xf32>
    %100 = arith.addf %98, %99 : vector<8x32xf32>
    %101 = math.tanh %100 : vector<8x32xf32>
    %102 = arith.mulf %97, %101 : vector<8x32xf32>
    %103 = arith.index_cast %c2_i32 : i32 to index
    %c0_48 = arith.constant 0 : index
    %c0_49 = arith.constant 0 : index
    %104 = vector.load %arg20[%103, %c0_48, %c0_49] : memref<10x8x32xf32, #tpu.memory_space<vmem>>, vector<1x8x32xf32>
    %105 = vector.shape_cast %104 : vector<1x8x32xf32> to vector<8x32xf32>
    %106 = vector.shape_cast %102 : vector<8x32xf32> to vector<1x8x32xf32>
    tpu.vector_store %arg20[%103, %c0_48, %c0_49], %106 {strides = array<i32>} : memref<10x8x32xf32, #tpu.memory_space<vmem>>, vector<1x8x32xf32>,
    %c3_i32 = arith.constant 3 : i32
    %107 = arith.index_cast %c3_i32 : i32 to index
    %c0_50 = arith.constant 0 : index
    %c0_51 = arith.constant 0 : index
    %108 = vector.load %arg21[%107, %c0_50, %c0_51] : memref<10x8x128xf32, #tpu.memory_space<vmem>>, vector<1x8x128xf32>
    %109 = vector.shape_cast %108 : vector<1x8x128xf32> to vector<8x128xf32>
    %cst_52 = arith.constant dense<0.000000e+00> : vector<8x128xf32>
    %110 = tpu.matmul %102, %9, %cst_52 {dimension_numbers = #tpu.dot_dimension_numbers<[1], [0], [0], [1], [0, 0, 1, 1], [], []>} : vector<8x32xf32>, vector<32x128xf32>, vector<8x128xf32> -> vector<8x128xf32>
    %111 = arith.addf %109, %110 : vector<8x128xf32>
    %112 = math.tanh %111 : vector<8x128xf32>
    %113 = vector.extract_strided_slice %112 {offsets = [0, 0], sizes = [8, 32], strides = [1, 1]} : vector<8x128xf32> to vector<8x32xf32>
    %cst_53 = arith.constant 1.000000e+00 : f32
    %114 = vector.broadcast %cst_53 : f32 to vector<8x32xf32>
    %115 = arith.addf %113, %114 : vector<8x32xf32>
    %cst_54 = arith.constant 5.000000e-01 : f32
    %116 = vector.broadcast %cst_54 : f32 to vector<8x32xf32>
    %117 = arith.mulf %116, %115 : vector<8x32xf32>
    %118 = vector.extract_strided_slice %112 {offsets = [0, 32], sizes = [8, 32], strides = [1, 1]} : vector<8x128xf32> to vector<8x32xf32>
    %cst_55 = arith.constant 1.000000e+00 : f32
    %119 = vector.broadcast %cst_55 : f32 to vector<8x32xf32>
    %120 = arith.addf %118, %119 : vector<8x32xf32>
    %cst_56 = arith.constant 5.000000e-01 : f32
    %121 = vector.broadcast %cst_56 : f32 to vector<8x32xf32>
    %122 = arith.mulf %121, %120 : vector<8x32xf32>
    %123 = vector.extract_strided_slice %112 {offsets = [0, 64], sizes = [8, 32], strides = [1, 1]} : vector<8x128xf32> to vector<8x32xf32>
    %124 = vector.extract_strided_slice %112 {offsets = [0, 96], sizes = [8, 32], strides = [1, 1]} : vector<8x128xf32> to vector<8x32xf32>
    %cst_57 = arith.constant 1.000000e+00 : f32
    %125 = vector.broadcast %cst_57 : f32 to vector<8x32xf32>
    %126 = arith.addf %124, %125 : vector<8x32xf32>
    %cst_58 = arith.constant 5.000000e-01 : f32
    %127 = vector.broadcast %cst_58 : f32 to vector<8x32xf32>
    %128 = arith.mulf %127, %126 : vector<8x32xf32>
    %129 = arith.mulf %122, %100 : vector<8x32xf32>
    %130 = arith.mulf %117, %123 : vector<8x32xf32>
    %131 = arith.addf %129, %130 : vector<8x32xf32>
    %132 = math.tanh %131 : vector<8x32xf32>
    %133 = arith.mulf %128, %132 : vector<8x32xf32>
    %134 = arith.index_cast %c3_i32 : i32 to index
    %c0_59 = arith.constant 0 : index
    %c0_60 = arith.constant 0 : index
    %135 = vector.load %arg20[%134, %c0_59, %c0_60] : memref<10x8x32xf32, #tpu.memory_space<vmem>>, vector<1x8x32xf32>
    %136 = vector.shape_cast %135 : vector<1x8x32xf32> to vector<8x32xf32>
    %137 = vector.shape_cast %133 : vector<8x32xf32> to vector<1x8x32xf32>
    tpu.vector_store %arg20[%134, %c0_59, %c0_60], %137 {strides = array<i32>} : memref<10x8x32xf32, #tpu.memory_space<vmem>>, vector<1x8x32xf32>,
    %c4_i32 = arith.constant 4 : i32
    %138 = arith.index_cast %c4_i32 : i32 to index
    %c0_61 = arith.constant 0 : index
    %c0_62 = arith.constant 0 : index
    %139 = vector.load %arg21[%138, %c0_61, %c0_62] : memref<10x8x128xf32, #tpu.memory_space<vmem>>, vector<1x8x128xf32>
    %140 = vector.shape_cast %139 : vector<1x8x128xf32> to vector<8x128xf32>
    %cst_63 = arith.constant dense<0.000000e+00> : vector<8x128xf32>
    %141 = tpu.matmul %133, %9, %cst_63 {dimension_numbers = #tpu.dot_dimension_numbers<[1], [0], [0], [1], [0, 0, 1, 1], [], []>} : vector<8x32xf32>, vector<32x128xf32>, vector<8x128xf32> -> vector<8x128xf32>
    %142 = arith.addf %140, %141 : vector<8x128xf32>
    %143 = math.tanh %142 : vector<8x128xf32>
    %144 = vector.extract_strided_slice %143 {offsets = [0, 0], sizes = [8, 32], strides = [1, 1]} : vector<8x128xf32> to vector<8x32xf32>
    %cst_64 = arith.constant 1.000000e+00 : f32
    %145 = vector.broadcast %cst_64 : f32 to vector<8x32xf32>
    %146 = arith.addf %144, %145 : vector<8x32xf32>
    %cst_65 = arith.constant 5.000000e-01 : f32
    %147 = vector.broadcast %cst_65 : f32 to vector<8x32xf32>
    %148 = arith.mulf %147, %146 : vector<8x32xf32>
    %149 = vector.extract_strided_slice %143 {offsets = [0, 32], sizes = [8, 32], strides = [1, 1]} : vector<8x128xf32> to vector<8x32xf32>
    %cst_66 = arith.constant 1.000000e+00 : f32
    %150 = vector.broadcast %cst_66 : f32 to vector<8x32xf32>
    %151 = arith.addf %149, %150 : vector<8x32xf32>
    %cst_67 = arith.constant 5.000000e-01 : f32
    %152 = vector.broadcast %cst_67 : f32 to vector<8x32xf32>
    %153 = arith.mulf %152, %151 : vector<8x32xf32>
    %154 = vector.extract_strided_slice %143 {offsets = [0, 64], sizes = [8, 32], strides = [1, 1]} : vector<8x128xf32> to vector<8x32xf32>
    %155 = vector.extract_strided_slice %143 {offsets = [0, 96], sizes = [8, 32], strides = [1, 1]} : vector<8x128xf32> to vector<8x32xf32>
    %cst_68 = arith.constant 1.000000e+00 : f32
    %156 = vector.broadcast %cst_68 : f32 to vector<8x32xf32>
    %157 = arith.addf %155, %156 : vector<8x32xf32>
    %cst_69 = arith.constant 5.000000e-01 : f32
    %158 = vector.broadcast %cst_69 : f32 to vector<8x32xf32>
    %159 = arith.mulf %158, %157 : vector<8x32xf32>
    %160 = arith.mulf %153, %131 : vector<8x32xf32>
    %161 = arith.mulf %148, %154 : vector<8x32xf32>
    %162 = arith.addf %160, %161 : vector<8x32xf32>
    %163 = math.tanh %162 : vector<8x32xf32>
    %164 = arith.mulf %159, %163 : vector<8x32xf32>
    %165 = arith.index_cast %c4_i32 : i32 to index
    %c0_70 = arith.constant 0 : index
    %c0_71 = arith.constant 0 : index
    %166 = vector.load %arg20[%165, %c0_70, %c0_71] : memref<10x8x32xf32, #tpu.memory_space<vmem>>, vector<1x8x32xf32>
    %167 = vector.shape_cast %166 : vector<1x8x32xf32> to vector<8x32xf32>
    %168 = vector.shape_cast %164 : vector<8x32xf32> to vector<1x8x32xf32>
    tpu.vector_store %arg20[%165, %c0_70, %c0_71], %168 {strides = array<i32>} : memref<10x8x32xf32, #tpu.memory_space<vmem>>, vector<1x8x32xf32>,
    %c5_i32 = arith.constant 5 : i32
    %169 = arith.index_cast %c5_i32 : i32 to index
    %c0_72 = arith.constant 0 : index
    %c0_73 = arith.constant 0 : index
    %170 = vector.load %arg21[%169, %c0_72, %c0_73] : memref<10x8x128xf32, #tpu.memory_space<vmem>>, vector<1x8x128xf32>
    %171 = vector.shape_cast %170 : vector<1x8x128xf32> to vector<8x128xf32>
    %cst_74 = arith.constant dense<0.000000e+00> : vector<8x128xf32>
    %172 = tpu.matmul %164, %9, %cst_74 {dimension_numbers = #tpu.dot_dimension_numbers<[1], [0], [0], [1], [0, 0, 1, 1], [], []>} : vector<8x32xf32>, vector<32x128xf32>, vector<8x128xf32> -> vector<8x128xf32>
    %173 = arith.addf %171, %172 : vector<8x128xf32>
    %174 = math.tanh %173 : vector<8x128xf32>
    %175 = vector.extract_strided_slice %174 {offsets = [0, 0], sizes = [8, 32], strides = [1, 1]} : vector<8x128xf32> to vector<8x32xf32>
    %cst_75 = arith.constant 1.000000e+00 : f32
    %176 = vector.broadcast %cst_75 : f32 to vector<8x32xf32>
    %177 = arith.addf %175, %176 : vector<8x32xf32>
    %cst_76 = arith.constant 5.000000e-01 : f32
    %178 = vector.broadcast %cst_76 : f32 to vector<8x32xf32>
    %179 = arith.mulf %178, %177 : vector<8x32xf32>
    %180 = vector.extract_strided_slice %174 {offsets = [0, 32], sizes = [8, 32], strides = [1, 1]} : vector<8x128xf32> to vector<8x32xf32>
    %cst_77 = arith.constant 1.000000e+00 : f32
    %181 = vector.broadcast %cst_77 : f32 to vector<8x32xf32>
    %182 = arith.addf %180, %181 : vector<8x32xf32>
    %cst_78 = arith.constant 5.000000e-01 : f32
    %183 = vector.broadcast %cst_78 : f32 to vector<8x32xf32>
    %184 = arith.mulf %183, %182 : vector<8x32xf32>
    %185 = vector.extract_strided_slice %174 {offsets = [0, 64], sizes = [8, 32], strides = [1, 1]} : vector<8x128xf32> to vector<8x32xf32>
    %186 = vector.extract_strided_slice %174 {offsets = [0, 96], sizes = [8, 32], strides = [1, 1]} : vector<8x128xf32> to vector<8x32xf32>
    %cst_79 = arith.constant 1.000000e+00 : f32
    %187 = vector.broadcast %cst_79 : f32 to vector<8x32xf32>
    %188 = arith.addf %186, %187 : vector<8x32xf32>
    %cst_80 = arith.constant 5.000000e-01 : f32
    %189 = vector.broadcast %cst_80 : f32 to vector<8x32xf32>
    %190 = arith.mulf %189, %188 : vector<8x32xf32>
    %191 = arith.mulf %184, %162 : vector<8x32xf32>
    %192 = arith.mulf %179, %185 : vector<8x32xf32>
    %193 = arith.addf %191, %192 : vector<8x32xf32>
    %194 = math.tanh %193 : vector<8x32xf32>
    %195 = arith.mulf %190, %194 : vector<8x32xf32>
    %196 = arith.index_cast %c5_i32 : i32 to index
    %c0_81 = arith.constant 0 : index
    %c0_82 = arith.constant 0 : index
    %197 = vector.load %arg20[%196, %c0_81, %c0_82] : memref<10x8x32xf32, #tpu.memory_space<vmem>>, vector<1x8x32xf32>
    %198 = vector.shape_cast %197 : vector<1x8x32xf32> to vector<8x32xf32>
    %199 = vector.shape_cast %195 : vector<8x32xf32> to vector<1x8x32xf32>
    tpu.vector_store %arg20[%196, %c0_81, %c0_82], %199 {strides = array<i32>} : memref<10x8x32xf32, #tpu.memory_space<vmem>>, vector<1x8x32xf32>,
    %c6_i32 = arith.constant 6 : i32
    %200 = arith.index_cast %c6_i32 : i32 to index
    %c0_83 = arith.constant 0 : index
    %c0_84 = arith.constant 0 : index
    %201 = vector.load %arg21[%200, %c0_83, %c0_84] : memref<10x8x128xf32, #tpu.memory_space<vmem>>, vector<1x8x128xf32>
    %202 = vector.shape_cast %201 : vector<1x8x128xf32> to vector<8x128xf32>
    %cst_85 = arith.constant dense<0.000000e+00> : vector<8x128xf32>
    %203 = tpu.matmul %195, %9, %cst_85 {dimension_numbers = #tpu.dot_dimension_numbers<[1], [0], [0], [1], [0, 0, 1, 1], [], []>} : vector<8x32xf32>, vector<32x128xf32>, vector<8x128xf32> -> vector<8x128xf32>
    %204 = arith.addf %202, %203 : vector<8x128xf32>
    %205 = math.tanh %204 : vector<8x128xf32>
    %206 = vector.extract_strided_slice %205 {offsets = [0, 0], sizes = [8, 32], strides = [1, 1]} : vector<8x128xf32> to vector<8x32xf32>
    %cst_86 = arith.constant 1.000000e+00 : f32
    %207 = vector.broadcast %cst_86 : f32 to vector<8x32xf32>
    %208 = arith.addf %206, %207 : vector<8x32xf32>
    %cst_87 = arith.constant 5.000000e-01 : f32
    %209 = vector.broadcast %cst_87 : f32 to vector<8x32xf32>
    %210 = arith.mulf %209, %208 : vector<8x32xf32>
    %211 = vector.extract_strided_slice %205 {offsets = [0, 32], sizes = [8, 32], strides = [1, 1]} : vector<8x128xf32> to vector<8x32xf32>
    %cst_88 = arith.constant 1.000000e+00 : f32
    %212 = vector.broadcast %cst_88 : f32 to vector<8x32xf32>
    %213 = arith.addf %211, %212 : vector<8x32xf32>
    %cst_89 = arith.constant 5.000000e-01 : f32
    %214 = vector.broadcast %cst_89 : f32 to vector<8x32xf32>
    %215 = arith.mulf %214, %213 : vector<8x32xf32>
    %216 = vector.extract_strided_slice %205 {offsets = [0, 64], sizes = [8, 32], strides = [1, 1]} : vector<8x128xf32> to vector<8x32xf32>
    %217 = vector.extract_strided_slice %205 {offsets = [0, 96], sizes = [8, 32], strides = [1, 1]} : vector<8x128xf32> to vector<8x32xf32>
    %cst_90 = arith.constant 1.000000e+00 : f32
    %218 = vector.broadcast %cst_90 : f32 to vector<8x32xf32>
    %219 = arith.addf %217, %218 : vector<8x32xf32>
    %cst_91 = arith.constant 5.000000e-01 : f32
    %220 = vector.broadcast %cst_91 : f32 to vector<8x32xf32>
    %221 = arith.mulf %220, %219 : vector<8x32xf32>
    %222 = arith.mulf %215, %193 : vector<8x32xf32>
    %223 = arith.mulf %210, %216 : vector<8x32xf32>
    %224 = arith.addf %222, %223 : vector<8x32xf32>
    %225 = math.tanh %224 : vector<8x32xf32>
    %226 = arith.mulf %221, %225 : vector<8x32xf32>
    %227 = arith.index_cast %c6_i32 : i32 to index
    %c0_92 = arith.constant 0 : index
    %c0_93 = arith.constant 0 : index
    %228 = vector.load %arg20[%227, %c0_92, %c0_93] : memref<10x8x32xf32, #tpu.memory_space<vmem>>, vector<1x8x32xf32>
    %229 = vector.shape_cast %228 : vector<1x8x32xf32> to vector<8x32xf32>
    %230 = vector.shape_cast %226 : vector<8x32xf32> to vector<1x8x32xf32>
    tpu.vector_store %arg20[%227, %c0_92, %c0_93], %230 {strides = array<i32>} : memref<10x8x32xf32, #tpu.memory_space<vmem>>, vector<1x8x32xf32>,
    %c7_i32 = arith.constant 7 : i32
    %231 = arith.index_cast %c7_i32 : i32 to index
    %c0_94 = arith.constant 0 : index
    %c0_95 = arith.constant 0 : index
    %232 = vector.load %arg21[%231, %c0_94, %c0_95] : memref<10x8x128xf32, #tpu.memory_space<vmem>>, vector<1x8x128xf32>
    %233 = vector.shape_cast %232 : vector<1x8x128xf32> to vector<8x128xf32>
    %cst_96 = arith.constant dense<0.000000e+00> : vector<8x128xf32>
    %234 = tpu.matmul %226, %9, %cst_96 {dimension_numbers = #tpu.dot_dimension_numbers<[1], [0], [0], [1], [0, 0, 1, 1], [], []>} : vector<8x32xf32>, vector<32x128xf32>, vector<8x128xf32> -> vector<8x128xf32>
    %235 = arith.addf %233, %234 : vector<8x128xf32>
    %236 = math.tanh %235 : vector<8x128xf32>
    %237 = vector.extract_strided_slice %236 {offsets = [0, 0], sizes = [8, 32], strides = [1, 1]} : vector<8x128xf32> to vector<8x32xf32>
    %cst_97 = arith.constant 1.000000e+00 : f32
    %238 = vector.broadcast %cst_97 : f32 to vector<8x32xf32>
    %239 = arith.addf %237, %238 : vector<8x32xf32>
    %cst_98 = arith.constant 5.000000e-01 : f32
    %240 = vector.broadcast %cst_98 : f32 to vector<8x32xf32>
    %241 = arith.mulf %240, %239 : vector<8x32xf32>
    %242 = vector.extract_strided_slice %236 {offsets = [0, 32], sizes = [8, 32], strides = [1, 1]} : vector<8x128xf32> to vector<8x32xf32>
    %cst_99 = arith.constant 1.000000e+00 : f32
    %243 = vector.broadcast %cst_99 : f32 to vector<8x32xf32>
    %244 = arith.addf %242, %243 : vector<8x32xf32>
    %cst_100 = arith.constant 5.000000e-01 : f32
    %245 = vector.broadcast %cst_100 : f32 to vector<8x32xf32>
    %246 = arith.mulf %245, %244 : vector<8x32xf32>
    %247 = vector.extract_strided_slice %236 {offsets = [0, 64], sizes = [8, 32], strides = [1, 1]} : vector<8x128xf32> to vector<8x32xf32>
    %248 = vector.extract_strided_slice %236 {offsets = [0, 96], sizes = [8, 32], strides = [1, 1]} : vector<8x128xf32> to vector<8x32xf32>
    %cst_101 = arith.constant 1.000000e+00 : f32
    %249 = vector.broadcast %cst_101 : f32 to vector<8x32xf32>
    %250 = arith.addf %248, %249 : vector<8x32xf32>
    %cst_102 = arith.constant 5.000000e-01 : f32
    %251 = vector.broadcast %cst_102 : f32 to vector<8x32xf32>
    %252 = arith.mulf %251, %250 : vector<8x32xf32>
    %253 = arith.mulf %246, %224 : vector<8x32xf32>
    %254 = arith.mulf %241, %247 : vector<8x32xf32>
    %255 = arith.addf %253, %254 : vector<8x32xf32>
    %256 = math.tanh %255 : vector<8x32xf32>
    %257 = arith.mulf %252, %256 : vector<8x32xf32>
    %258 = arith.index_cast %c7_i32 : i32 to index
    %c0_103 = arith.constant 0 : index
    %c0_104 = arith.constant 0 : index
    %259 = vector.load %arg20[%258, %c0_103, %c0_104] : memref<10x8x32xf32, #tpu.memory_space<vmem>>, vector<1x8x32xf32>
    %260 = vector.shape_cast %259 : vector<1x8x32xf32> to vector<8x32xf32>
    %261 = vector.shape_cast %257 : vector<8x32xf32> to vector<1x8x32xf32>
    tpu.vector_store %arg20[%258, %c0_103, %c0_104], %261 {strides = array<i32>} : memref<10x8x32xf32, #tpu.memory_space<vmem>>, vector<1x8x32xf32>,
    %c8_i32 = arith.constant 8 : i32
    %262 = arith.index_cast %c8_i32 : i32 to index
    %c0_105 = arith.constant 0 : index
    %c0_106 = arith.constant 0 : index
    %263 = vector.load %arg21[%262, %c0_105, %c0_106] : memref<10x8x128xf32, #tpu.memory_space<vmem>>, vector<1x8x128xf32>
    %264 = vector.shape_cast %263 : vector<1x8x128xf32> to vector<8x128xf32>
    %cst_107 = arith.constant dense<0.000000e+00> : vector<8x128xf32>
    %265 = tpu.matmul %257, %9, %cst_107 {dimension_numbers = #tpu.dot_dimension_numbers<[1], [0], [0], [1], [0, 0, 1, 1], [], []>} : vector<8x32xf32>, vector<32x128xf32>, vector<8x128xf32> -> vector<8x128xf32>
    %266 = arith.addf %264, %265 : vector<8x128xf32>
    %267 = math.tanh %266 : vector<8x128xf32>
    %268 = vector.extract_strided_slice %267 {offsets = [0, 0], sizes = [8, 32], strides = [1, 1]} : vector<8x128xf32> to vector<8x32xf32>
    %cst_108 = arith.constant 1.000000e+00 : f32
    %269 = vector.broadcast %cst_108 : f32 to vector<8x32xf32>
    %270 = arith.addf %268, %269 : vector<8x32xf32>
    %cst_109 = arith.constant 5.000000e-01 : f32
    %271 = vector.broadcast %cst_109 : f32 to vector<8x32xf32>
    %272 = arith.mulf %271, %270 : vector<8x32xf32>
    %273 = vector.extract_strided_slice %267 {offsets = [0, 32], sizes = [8, 32], strides = [1, 1]} : vector<8x128xf32> to vector<8x32xf32>
    %cst_110 = arith.constant 1.000000e+00 : f32
    %274 = vector.broadcast %cst_110 : f32 to vector<8x32xf32>
    %275 = arith.addf %273, %274 : vector<8x32xf32>
    %cst_111 = arith.constant 5.000000e-01 : f32
    %276 = vector.broadcast %cst_111 : f32 to vector<8x32xf32>
    %277 = arith.mulf %276, %275 : vector<8x32xf32>
    %278 = vector.extract_strided_slice %267 {offsets = [0, 64], sizes = [8, 32], strides = [1, 1]} : vector<8x128xf32> to vector<8x32xf32>
    %279 = vector.extract_strided_slice %267 {offsets = [0, 96], sizes = [8, 32], strides = [1, 1]} : vector<8x128xf32> to vector<8x32xf32>
    %cst_112 = arith.constant 1.000000e+00 : f32
    %280 = vector.broadcast %cst_112 : f32 to vector<8x32xf32>
    %281 = arith.addf %279, %280 : vector<8x32xf32>
    %cst_113 = arith.constant 5.000000e-01 : f32
    %282 = vector.broadcast %cst_113 : f32 to vector<8x32xf32>
    %283 = arith.mulf %282, %281 : vector<8x32xf32>
    %284 = arith.mulf %277, %255 : vector<8x32xf32>
    %285 = arith.mulf %272, %278 : vector<8x32xf32>
    %286 = arith.addf %284, %285 : vector<8x32xf32>
    %287 = math.tanh %286 : vector<8x32xf32>
    %288 = arith.mulf %283, %287 : vector<8x32xf32>
    %289 = arith.index_cast %c8_i32 : i32 to index
    %c0_114 = arith.constant 0 : index
    %c0_115 = arith.constant 0 : index
    %290 = vector.load %arg20[%289, %c0_114, %c0_115] : memref<10x8x32xf32, #tpu.memory_space<vmem>>, vector<1x8x32xf32>
    %291 = vector.shape_cast %290 : vector<1x8x32xf32> to vector<8x32xf32>
    %292 = vector.shape_cast %288 : vector<8x32xf32> to vector<1x8x32xf32>
    tpu.vector_store %arg20[%289, %c0_114, %c0_115], %292 {strides = array<i32>} : memref<10x8x32xf32, #tpu.memory_space<vmem>>, vector<1x8x32xf32>,
    %c9_i32 = arith.constant 9 : i32
    %293 = arith.index_cast %c9_i32 : i32 to index
    %c0_116 = arith.constant 0 : index
    %c0_117 = arith.constant 0 : index
    %294 = vector.load %arg21[%293, %c0_116, %c0_117] : memref<10x8x128xf32, #tpu.memory_space<vmem>>, vector<1x8x128xf32>
    %295 = vector.shape_cast %294 : vector<1x8x128xf32> to vector<8x128xf32>
    %cst_118 = arith.constant dense<0.000000e+00> : vector<8x128xf32>
    %296 = tpu.matmul %288, %9, %cst_118 {dimension_numbers = #tpu.dot_dimension_numbers<[1], [0], [0], [1], [0, 0, 1, 1], [], []>} : vector<8x32xf32>, vector<32x128xf32>, vector<8x128xf32> -> vector<8x128xf32>
    %297 = arith.addf %295, %296 : vector<8x128xf32>
    %298 = math.tanh %297 : vector<8x128xf32>
    %299 = vector.extract_strided_slice %298 {offsets = [0, 0], sizes = [8, 32], strides = [1, 1]} : vector<8x128xf32> to vector<8x32xf32>
    %cst_119 = arith.constant 1.000000e+00 : f32
    %300 = vector.broadcast %cst_119 : f32 to vector<8x32xf32>
    %301 = arith.addf %299, %300 : vector<8x32xf32>
    %cst_120 = arith.constant 5.000000e-01 : f32
    %302 = vector.broadcast %cst_120 : f32 to vector<8x32xf32>
    %303 = arith.mulf %302, %301 : vector<8x32xf32>
    %304 = vector.extract_strided_slice %298 {offsets = [0, 32], sizes = [8, 32], strides = [1, 1]} : vector<8x128xf32> to vector<8x32xf32>
    %cst_121 = arith.constant 1.000000e+00 : f32
    %305 = vector.broadcast %cst_121 : f32 to vector<8x32xf32>
    %306 = arith.addf %304, %305 : vector<8x32xf32>
    %cst_122 = arith.constant 5.000000e-01 : f32
    %307 = vector.broadcast %cst_122 : f32 to vector<8x32xf32>
    %308 = arith.mulf %307, %306 : vector<8x32xf32>
    %309 = vector.extract_strided_slice %298 {offsets = [0, 64], sizes = [8, 32], strides = [1, 1]} : vector<8x128xf32> to vector<8x32xf32>
    %310 = vector.extract_strided_slice %298 {offsets = [0, 96], sizes = [8, 32], strides = [1, 1]} : vector<8x128xf32> to vector<8x32xf32>
    %cst_123 = arith.constant 1.000000e+00 : f32
    %311 = vector.broadcast %cst_123 : f32 to vector<8x32xf32>
    %312 = arith.addf %310, %311 : vector<8x32xf32>
    %cst_124 = arith.constant 5.000000e-01 : f32
    %313 = vector.broadcast %cst_124 : f32 to vector<8x32xf32>
    %314 = arith.mulf %313, %312 : vector<8x32xf32>
    %315 = arith.mulf %308, %286 : vector<8x32xf32>
    %316 = arith.mulf %303, %309 : vector<8x32xf32>
    %317 = arith.addf %315, %316 : vector<8x32xf32>
    %318 = math.tanh %317 : vector<8x32xf32>
    %319 = arith.mulf %314, %318 : vector<8x32xf32>
    %320 = arith.index_cast %c9_i32 : i32 to index
    %c0_125 = arith.constant 0 : index
    %c0_126 = arith.constant 0 : index
    %321 = vector.load %arg20[%320, %c0_125, %c0_126] : memref<10x8x32xf32, #tpu.memory_space<vmem>>, vector<1x8x32xf32>
    %322 = vector.shape_cast %321 : vector<1x8x32xf32> to vector<8x32xf32>
    %323 = vector.shape_cast %319 : vector<8x32xf32> to vector<1x8x32xf32>
    tpu.vector_store %arg20[%320, %c0_125, %c0_126], %323 {strides = array<i32>} : memref<10x8x32xf32, #tpu.memory_space<vmem>>, vector<1x8x32xf32>,
    %c10_i32 = arith.constant 10 : i32
    %c0_127 = arith.constant 0 : index
    %c0_128 = arith.constant 0 : index
    %c0_129 = arith.constant 0 : index
    %324 = vector.load %arg18[%c0_127, %c0_128, %c0_129] : memref<3x8x32xf32, #tpu.memory_space<vmem>>, vector<1x8x32xf32>
    %325 = vector.shape_cast %324 : vector<1x8x32xf32> to vector<8x32xf32>
    %326 = vector.shape_cast %319 : vector<8x32xf32> to vector<1x8x32xf32>
    tpu.vector_store %arg18[%c0_127, %c0_128, %c0_129], %326 {strides = array<i32>} : memref<3x8x32xf32, #tpu.memory_space<vmem>>, vector<1x8x32xf32>,
    %c0_130 = arith.constant 0 : index
    %c0_131 = arith.constant 0 : index
    %c0_132 = arith.constant 0 : index
    %327 = vector.load %arg19[%c0_130, %c0_131, %c0_132] : memref<3x8x32xf32, #tpu.memory_space<vmem>>, vector<1x8x32xf32>
    %328 = vector.shape_cast %327 : vector<1x8x32xf32> to vector<8x32xf32>
    %329 = vector.shape_cast %317 : vector<8x32xf32> to vector<1x8x32xf32>
    tpu.vector_store %arg19[%c0_130, %c0_131, %c0_132], %329 {strides = array<i32>} : memref<3x8x32xf32, #tpu.memory_space<vmem>>, vector<1x8x32xf32>,
    %c0_133 = arith.constant 0 : index
    %c0_134 = arith.constant 0 : index
    %c0_135 = arith.constant 0 : index
    %330 = vector.load %arg20[%c0_133, %c0_134, %c0_135] : memref<10x8x32xf32, #tpu.memory_space<vmem>>, vector<10x8x32xf32>
    %331 = vector.shape_cast %330 : vector<10x8x32xf32> to vector<80x32xf32>
    %c0_136 = arith.constant 0 : index
    %c0_137 = arith.constant 0 : index
    %332 = vector.load %arg7[%c0_136, %c0_137] : memref<32x128xf32, #tpu.memory_space<vmem>>, vector<32x128xf32>
    %cst_138 = arith.constant dense<0.000000e+00> : vector<80x128xf32>
    %333 = tpu.matmul %331, %332, %cst_138 {dimension_numbers = #tpu.dot_dimension_numbers<[1], [0], [0], [1], [0, 0, 1, 1], [], []>} : vector<80x32xf32>, vector<32x128xf32>, vector<80x128xf32> -> vector<80x128xf32>
    %c0_139 = arith.constant 0 : index
    %c0_140 = arith.constant 0 : index
    %334 = vector.load %arg9[%c0_139, %c0_140] : memref<1x128xf32, #tpu.memory_space<vmem>>, vector<1x128xf32>
    %335 = vector.broadcast %334 : vector<1x128xf32> to vector<80x128xf32>
    %336 = arith.addf %333, %335 : vector<80x128xf32>
    %337 = vector.shape_cast %336 : vector<80x128xf32> to vector<10x8x128xf32>
    %c0_141 = arith.constant 0 : index
    %c0_142 = arith.constant 0 : index
    %c0_143 = arith.constant 0 : index
    %338 = vector.load %arg21[%c0_141, %c0_142, %c0_143] : memref<10x8x128xf32, #tpu.memory_space<vmem>>, vector<10x8x128xf32>
    tpu.vector_store %arg21[%c0_141, %c0_142, %c0_143], %337 {strides = array<i32>} : memref<10x8x128xf32, #tpu.memory_space<vmem>>, vector<10x8x128xf32>,
    %c0_144 = arith.constant 0 : index
    %c0_145 = arith.constant 0 : index
    %339 = vector.load %arg8[%c0_144, %c0_145] : memref<32x128xf32, #tpu.memory_space<vmem>>, vector<32x128xf32>
    %c1 = arith.constant 1 : index
    %c0_146 = arith.constant 0 : index
    %c0_147 = arith.constant 0 : index
    %340 = vector.load %arg2[%c1, %c0_146, %c0_147] : memref<3x8x32xf32, #tpu.memory_space<vmem>>, vector<1x8x32xf32>
    %341 = vector.shape_cast %340 : vector<1x8x32xf32> to vector<8x32xf32>
    %c1_148 = arith.constant 1 : index
    %c0_149 = arith.constant 0 : index
    %c0_150 = arith.constant 0 : index
    %342 = vector.load %arg3[%c1_148, %c0_149, %c0_150] : memref<3x8x32xf32, #tpu.memory_space<vmem>>, vector<1x8x32xf32>
    %343 = vector.shape_cast %342 : vector<1x8x32xf32> to vector<8x32xf32>
    %c0_i32_151 = arith.constant 0 : i32
    %344 = arith.index_cast %c0_i32_151 : i32 to index
    %c0_152 = arith.constant 0 : index
    %c0_153 = arith.constant 0 : index
    %345 = vector.load %arg21[%344, %c0_152, %c0_153] : memref<10x8x128xf32, #tpu.memory_space<vmem>>, vector<1x8x128xf32>
    %346 = vector.shape_cast %345 : vector<1x8x128xf32> to vector<8x128xf32>
    %cst_154 = arith.constant dense<0.000000e+00> : vector<8x128xf32>
    %347 = tpu.matmul %341, %339, %cst_154 {dimension_numbers = #tpu.dot_dimension_numbers<[1], [0], [0], [1], [0, 0, 1, 1], [], []>} : vector<8x32xf32>, vector<32x128xf32>, vector<8x128xf32> -> vector<8x128xf32>
    %348 = arith.addf %346, %347 : vector<8x128xf32>
    %349 = math.tanh %348 : vector<8x128xf32>
    %350 = vector.extract_strided_slice %349 {offsets = [0, 0], sizes = [8, 32], strides = [1, 1]} : vector<8x128xf32> to vector<8x32xf32>
    %cst_155 = arith.constant 1.000000e+00 : f32
    %351 = vector.broadcast %cst_155 : f32 to vector<8x32xf32>
    %352 = arith.addf %350, %351 : vector<8x32xf32>
    %cst_156 = arith.constant 5.000000e-01 : f32
    %353 = vector.broadcast %cst_156 : f32 to vector<8x32xf32>
    %354 = arith.mulf %353, %352 : vector<8x32xf32>
    %355 = vector.extract_strided_slice %349 {offsets = [0, 32], sizes = [8, 32], strides = [1, 1]} : vector<8x128xf32> to vector<8x32xf32>
    %cst_157 = arith.constant 1.000000e+00 : f32
    %356 = vector.broadcast %cst_157 : f32 to vector<8x32xf32>
    %357 = arith.addf %355, %356 : vector<8x32xf32>
    %cst_158 = arith.constant 5.000000e-01 : f32
    %358 = vector.broadcast %cst_158 : f32 to vector<8x32xf32>
    %359 = arith.mulf %358, %357 : vector<8x32xf32>
    %360 = vector.extract_strided_slice %349 {offsets = [0, 64], sizes = [8, 32], strides = [1, 1]} : vector<8x128xf32> to vector<8x32xf32>
    %361 = vector.extract_strided_slice %349 {offsets = [0, 96], sizes = [8, 32], strides = [1, 1]} : vector<8x128xf32> to vector<8x32xf32>
    %cst_159 = arith.constant 1.000000e+00 : f32
    %362 = vector.broadcast %cst_159 : f32 to vector<8x32xf32>
    %363 = arith.addf %361, %362 : vector<8x32xf32>
    %cst_160 = arith.constant 5.000000e-01 : f32
    %364 = vector.broadcast %cst_160 : f32 to vector<8x32xf32>
    %365 = arith.mulf %364, %363 : vector<8x32xf32>
    %366 = arith.mulf %359, %343 : vector<8x32xf32>
    %367 = arith.mulf %354, %360 : vector<8x32xf32>
    %368 = arith.addf %366, %367 : vector<8x32xf32>
    %369 = math.tanh %368 : vector<8x32xf32>
    %370 = arith.mulf %365, %369 : vector<8x32xf32>
    %371 = arith.index_cast %c0_i32_151 : i32 to index
    %c0_161 = arith.constant 0 : index
    %c0_162 = arith.constant 0 : index
    %372 = vector.load %arg20[%371, %c0_161, %c0_162] : memref<10x8x32xf32, #tpu.memory_space<vmem>>, vector<1x8x32xf32>
    %373 = vector.shape_cast %372 : vector<1x8x32xf32> to vector<8x32xf32>
    %374 = vector.shape_cast %370 : vector<8x32xf32> to vector<1x8x32xf32>
    tpu.vector_store %arg20[%371, %c0_161, %c0_162], %374 {strides = array<i32>} : memref<10x8x32xf32, #tpu.memory_space<vmem>>, vector<1x8x32xf32>,
    %c1_i32_163 = arith.constant 1 : i32
    %375 = arith.index_cast %c1_i32_163 : i32 to index
    %c0_164 = arith.constant 0 : index
    %c0_165 = arith.constant 0 : index
    %376 = vector.load %arg21[%375, %c0_164, %c0_165] : memref<10x8x128xf32, #tpu.memory_space<vmem>>, vector<1x8x128xf32>
    %377 = vector.shape_cast %376 : vector<1x8x128xf32> to vector<8x128xf32>
    %cst_166 = arith.constant dense<0.000000e+00> : vector<8x128xf32>
    %378 = tpu.matmul %370, %339, %cst_166 {dimension_numbers = #tpu.dot_dimension_numbers<[1], [0], [0], [1], [0, 0, 1, 1], [], []>} : vector<8x32xf32>, vector<32x128xf32>, vector<8x128xf32> -> vector<8x128xf32>
    %379 = arith.addf %377, %378 : vector<8x128xf32>
    %380 = math.tanh %379 : vector<8x128xf32>
    %381 = vector.extract_strided_slice %380 {offsets = [0, 0], sizes = [8, 32], strides = [1, 1]} : vector<8x128xf32> to vector<8x32xf32>
    %cst_167 = arith.constant 1.000000e+00 : f32
    %382 = vector.broadcast %cst_167 : f32 to vector<8x32xf32>
    %383 = arith.addf %381, %382 : vector<8x32xf32>
    %cst_168 = arith.constant 5.000000e-01 : f32
    %384 = vector.broadcast %cst_168 : f32 to vector<8x32xf32>
    %385 = arith.mulf %384, %383 : vector<8x32xf32>
    %386 = vector.extract_strided_slice %380 {offsets = [0, 32], sizes = [8, 32], strides = [1, 1]} : vector<8x128xf32> to vector<8x32xf32>
    %cst_169 = arith.constant 1.000000e+00 : f32
    %387 = vector.broadcast %cst_169 : f32 to vector<8x32xf32>
    %388 = arith.addf %386, %387 : vector<8x32xf32>
    %cst_170 = arith.constant 5.000000e-01 : f32
    %389 = vector.broadcast %cst_170 : f32 to vector<8x32xf32>
    %390 = arith.mulf %389, %388 : vector<8x32xf32>
    %391 = vector.extract_strided_slice %380 {offsets = [0, 64], sizes = [8, 32], strides = [1, 1]} : vector<8x128xf32> to vector<8x32xf32>
    %392 = vector.extract_strided_slice %380 {offsets = [0, 96], sizes = [8, 32], strides = [1, 1]} : vector<8x128xf32> to vector<8x32xf32>
    %cst_171 = arith.constant 1.000000e+00 : f32
    %393 = vector.broadcast %cst_171 : f32 to vector<8x32xf32>
    %394 = arith.addf %392, %393 : vector<8x32xf32>
    %cst_172 = arith.constant 5.000000e-01 : f32
    %395 = vector.broadcast %cst_172 : f32 to vector<8x32xf32>
    %396 = arith.mulf %395, %394 : vector<8x32xf32>
    %397 = arith.mulf %390, %368 : vector<8x32xf32>
    %398 = arith.mulf %385, %391 : vector<8x32xf32>
    %399 = arith.addf %397, %398 : vector<8x32xf32>
    %400 = math.tanh %399 : vector<8x32xf32>
    %401 = arith.mulf %396, %400 : vector<8x32xf32>
    %402 = arith.index_cast %c1_i32_163 : i32 to index
    %c0_173 = arith.constant 0 : index
    %c0_174 = arith.constant 0 : index
    %403 = vector.load %arg20[%402, %c0_173, %c0_174] : memref<10x8x32xf32, #tpu.memory_space<vmem>>, vector<1x8x32xf32>
    %404 = vector.shape_cast %403 : vector<1x8x32xf32> to vector<8x32xf32>
    %405 = vector.shape_cast %401 : vector<8x32xf32> to vector<1x8x32xf32>
    tpu.vector_store %arg20[%402, %c0_173, %c0_174], %405 {strides = array<i32>} : memref<10x8x32xf32, #tpu.memory_space<vmem>>, vector<1x8x32xf32>,
    %c2_i32_175 = arith.constant 2 : i32
    %406 = arith.index_cast %c2_i32_175 : i32 to index
    %c0_176 = arith.constant 0 : index
    %c0_177 = arith.constant 0 : index
    %407 = vector.load %arg21[%406, %c0_176, %c0_177] : memref<10x8x128xf32, #tpu.memory_space<vmem>>, vector<1x8x128xf32>
    %408 = vector.shape_cast %407 : vector<1x8x128xf32> to vector<8x128xf32>
    %cst_178 = arith.constant dense<0.000000e+00> : vector<8x128xf32>
    %409 = tpu.matmul %401, %339, %cst_178 {dimension_numbers = #tpu.dot_dimension_numbers<[1], [0], [0], [1], [0, 0, 1, 1], [], []>} : vector<8x32xf32>, vector<32x128xf32>, vector<8x128xf32> -> vector<8x128xf32>
    %410 = arith.addf %408, %409 : vector<8x128xf32>
    %411 = math.tanh %410 : vector<8x128xf32>
    %412 = vector.extract_strided_slice %411 {offsets = [0, 0], sizes = [8, 32], strides = [1, 1]} : vector<8x128xf32> to vector<8x32xf32>
    %cst_179 = arith.constant 1.000000e+00 : f32
    %413 = vector.broadcast %cst_179 : f32 to vector<8x32xf32>
    %414 = arith.addf %412, %413 : vector<8x32xf32>
    %cst_180 = arith.constant 5.000000e-01 : f32
    %415 = vector.broadcast %cst_180 : f32 to vector<8x32xf32>
    %416 = arith.mulf %415, %414 : vector<8x32xf32>
    %417 = vector.extract_strided_slice %411 {offsets = [0, 32], sizes = [8, 32], strides = [1, 1]} : vector<8x128xf32> to vector<8x32xf32>
    %cst_181 = arith.constant 1.000000e+00 : f32
    %418 = vector.broadcast %cst_181 : f32 to vector<8x32xf32>
    %419 = arith.addf %417, %418 : vector<8x32xf32>
    %cst_182 = arith.constant 5.000000e-01 : f32
    %420 = vector.broadcast %cst_182 : f32 to vector<8x32xf32>
    %421 = arith.mulf %420, %419 : vector<8x32xf32>
    %422 = vector.extract_strided_slice %411 {offsets = [0, 64], sizes = [8, 32], strides = [1, 1]} : vector<8x128xf32> to vector<8x32xf32>
    %423 = vector.extract_strided_slice %411 {offsets = [0, 96], sizes = [8, 32], strides = [1, 1]} : vector<8x128xf32> to vector<8x32xf32>
    %cst_183 = arith.constant 1.000000e+00 : f32
    %424 = vector.broadcast %cst_183 : f32 to vector<8x32xf32>
    %425 = arith.addf %423, %424 : vector<8x32xf32>
    %cst_184 = arith.constant 5.000000e-01 : f32
    %426 = vector.broadcast %cst_184 : f32 to vector<8x32xf32>
    %427 = arith.mulf %426, %425 : vector<8x32xf32>
    %428 = arith.mulf %421, %399 : vector<8x32xf32>
    %429 = arith.mulf %416, %422 : vector<8x32xf32>
    %430 = arith.addf %428, %429 : vector<8x32xf32>
    %431 = math.tanh %430 : vector<8x32xf32>
    %432 = arith.mulf %427, %431 : vector<8x32xf32>
    %433 = arith.index_cast %c2_i32_175 : i32 to index
    %c0_185 = arith.constant 0 : index
    %c0_186 = arith.constant 0 : index
    %434 = vector.load %arg20[%433, %c0_185, %c0_186] : memref<10x8x32xf32, #tpu.memory_space<vmem>>, vector<1x8x32xf32>
    %435 = vector.shape_cast %434 : vector<1x8x32xf32> to vector<8x32xf32>
    %436 = vector.shape_cast %432 : vector<8x32xf32> to vector<1x8x32xf32>
    tpu.vector_store %arg20[%433, %c0_185, %c0_186], %436 {strides = array<i32>} : memref<10x8x32xf32, #tpu.memory_space<vmem>>, vector<1x8x32xf32>,
    %c3_i32_187 = arith.constant 3 : i32
    %437 = arith.index_cast %c3_i32_187 : i32 to index
    %c0_188 = arith.constant 0 : index
    %c0_189 = arith.constant 0 : index
    %438 = vector.load %arg21[%437, %c0_188, %c0_189] : memref<10x8x128xf32, #tpu.memory_space<vmem>>, vector<1x8x128xf32>
    %439 = vector.shape_cast %438 : vector<1x8x128xf32> to vector<8x128xf32>
    %cst_190 = arith.constant dense<0.000000e+00> : vector<8x128xf32>
    %440 = tpu.matmul %432, %339, %cst_190 {dimension_numbers = #tpu.dot_dimension_numbers<[1], [0], [0], [1], [0, 0, 1, 1], [], []>} : vector<8x32xf32>, vector<32x128xf32>, vector<8x128xf32> -> vector<8x128xf32>
    %441 = arith.addf %439, %440 : vector<8x128xf32>
    %442 = math.tanh %441 : vector<8x128xf32>
    %443 = vector.extract_strided_slice %442 {offsets = [0, 0], sizes = [8, 32], strides = [1, 1]} : vector<8x128xf32> to vector<8x32xf32>
    %cst_191 = arith.constant 1.000000e+00 : f32
    %444 = vector.broadcast %cst_191 : f32 to vector<8x32xf32>
    %445 = arith.addf %443, %444 : vector<8x32xf32>
    %cst_192 = arith.constant 5.000000e-01 : f32
    %446 = vector.broadcast %cst_192 : f32 to vector<8x32xf32>
    %447 = arith.mulf %446, %445 : vector<8x32xf32>
    %448 = vector.extract_strided_slice %442 {offsets = [0, 32], sizes = [8, 32], strides = [1, 1]} : vector<8x128xf32> to vector<8x32xf32>
    %cst_193 = arith.constant 1.000000e+00 : f32
    %449 = vector.broadcast %cst_193 : f32 to vector<8x32xf32>
    %450 = arith.addf %448, %449 : vector<8x32xf32>
    %cst_194 = arith.constant 5.000000e-01 : f32
    %451 = vector.broadcast %cst_194 : f32 to vector<8x32xf32>
    %452 = arith.mulf %451, %450 : vector<8x32xf32>
    %453 = vector.extract_strided_slice %442 {offsets = [0, 64], sizes = [8, 32], strides = [1, 1]} : vector<8x128xf32> to vector<8x32xf32>
    %454 = vector.extract_strided_slice %442 {offsets = [0, 96], sizes = [8, 32], strides = [1, 1]} : vector<8x128xf32> to vector<8x32xf32>
    %cst_195 = arith.constant 1.000000e+00 : f32
    %455 = vector.broadcast %cst_195 : f32 to vector<8x32xf32>
    %456 = arith.addf %454, %455 : vector<8x32xf32>
    %cst_196 = arith.constant 5.000000e-01 : f32
    %457 = vector.broadcast %cst_196 : f32 to vector<8x32xf32>
    %458 = arith.mulf %457, %456 : vector<8x32xf32>
    %459 = arith.mulf %452, %430 : vector<8x32xf32>
    %460 = arith.mulf %447, %453 : vector<8x32xf32>
    %461 = arith.addf %459, %460 : vector<8x32xf32>
    %462 = math.tanh %461 : vector<8x32xf32>
    %463 = arith.mulf %458, %462 : vector<8x32xf32>
    %464 = arith.index_cast %c3_i32_187 : i32 to index
    %c0_197 = arith.constant 0 : index
    %c0_198 = arith.constant 0 : index
    %465 = vector.load %arg20[%464, %c0_197, %c0_198] : memref<10x8x32xf32, #tpu.memory_space<vmem>>, vector<1x8x32xf32>
    %466 = vector.shape_cast %465 : vector<1x8x32xf32> to vector<8x32xf32>
    %467 = vector.shape_cast %463 : vector<8x32xf32> to vector<1x8x32xf32>
    tpu.vector_store %arg20[%464, %c0_197, %c0_198], %467 {strides = array<i32>} : memref<10x8x32xf32, #tpu.memory_space<vmem>>, vector<1x8x32xf32>,
    %c4_i32_199 = arith.constant 4 : i32
    %468 = arith.index_cast %c4_i32_199 : i32 to index
    %c0_200 = arith.constant 0 : index
    %c0_201 = arith.constant 0 : index
    %469 = vector.load %arg21[%468, %c0_200, %c0_201] : memref<10x8x128xf32, #tpu.memory_space<vmem>>, vector<1x8x128xf32>
    %470 = vector.shape_cast %469 : vector<1x8x128xf32> to vector<8x128xf32>
    %cst_202 = arith.constant dense<0.000000e+00> : vector<8x128xf32>
    %471 = tpu.matmul %463, %339, %cst_202 {dimension_numbers = #tpu.dot_dimension_numbers<[1], [0], [0], [1], [0, 0, 1, 1], [], []>} : vector<8x32xf32>, vector<32x128xf32>, vector<8x128xf32> -> vector<8x128xf32>
    %472 = arith.addf %470, %471 : vector<8x128xf32>
    %473 = math.tanh %472 : vector<8x128xf32>
    %474 = vector.extract_strided_slice %473 {offsets = [0, 0], sizes = [8, 32], strides = [1, 1]} : vector<8x128xf32> to vector<8x32xf32>
    %cst_203 = arith.constant 1.000000e+00 : f32
    %475 = vector.broadcast %cst_203 : f32 to vector<8x32xf32>
    %476 = arith.addf %474, %475 : vector<8x32xf32>
    %cst_204 = arith.constant 5.000000e-01 : f32
    %477 = vector.broadcast %cst_204 : f32 to vector<8x32xf32>
    %478 = arith.mulf %477, %476 : vector<8x32xf32>
    %479 = vector.extract_strided_slice %473 {offsets = [0, 32], sizes = [8, 32], strides = [1, 1]} : vector<8x128xf32> to vector<8x32xf32>
    %cst_205 = arith.constant 1.000000e+00 : f32
    %480 = vector.broadcast %cst_205 : f32 to vector<8x32xf32>
    %481 = arith.addf %479, %480 : vector<8x32xf32>
    %cst_206 = arith.constant 5.000000e-01 : f32
    %482 = vector.broadcast %cst_206 : f32 to vector<8x32xf32>
    %483 = arith.mulf %482, %481 : vector<8x32xf32>
    %484 = vector.extract_strided_slice %473 {offsets = [0, 64], sizes = [8, 32], strides = [1, 1]} : vector<8x128xf32> to vector<8x32xf32>
    %485 = vector.extract_strided_slice %473 {offsets = [0, 96], sizes = [8, 32], strides = [1, 1]} : vector<8x128xf32> to vector<8x32xf32>
    %cst_207 = arith.constant 1.000000e+00 : f32
    %486 = vector.broadcast %cst_207 : f32 to vector<8x32xf32>
    %487 = arith.addf %485, %486 : vector<8x32xf32>
    %cst_208 = arith.constant 5.000000e-01 : f32
    %488 = vector.broadcast %cst_208 : f32 to vector<8x32xf32>
    %489 = arith.mulf %488, %487 : vector<8x32xf32>
    %490 = arith.mulf %483, %461 : vector<8x32xf32>
    %491 = arith.mulf %478, %484 : vector<8x32xf32>
    %492 = arith.addf %490, %491 : vector<8x32xf32>
    %493 = math.tanh %492 : vector<8x32xf32>
    %494 = arith.mulf %489, %493 : vector<8x32xf32>
    %495 = arith.index_cast %c4_i32_199 : i32 to index
    %c0_209 = arith.constant 0 : index
    %c0_210 = arith.constant 0 : index
    %496 = vector.load %arg20[%495, %c0_209, %c0_210] : memref<10x8x32xf32, #tpu.memory_space<vmem>>, vector<1x8x32xf32>
    %497 = vector.shape_cast %496 : vector<1x8x32xf32> to vector<8x32xf32>
    %498 = vector.shape_cast %494 : vector<8x32xf32> to vector<1x8x32xf32>
    tpu.vector_store %arg20[%495, %c0_209, %c0_210], %498 {strides = array<i32>} : memref<10x8x32xf32, #tpu.memory_space<vmem>>, vector<1x8x32xf32>,
    %c5_i32_211 = arith.constant 5 : i32
    %499 = arith.index_cast %c5_i32_211 : i32 to index
    %c0_212 = arith.constant 0 : index
    %c0_213 = arith.constant 0 : index
    %500 = vector.load %arg21[%499, %c0_212, %c0_213] : memref<10x8x128xf32, #tpu.memory_space<vmem>>, vector<1x8x128xf32>
    %501 = vector.shape_cast %500 : vector<1x8x128xf32> to vector<8x128xf32>
    %cst_214 = arith.constant dense<0.000000e+00> : vector<8x128xf32>
    %502 = tpu.matmul %494, %339, %cst_214 {dimension_numbers = #tpu.dot_dimension_numbers<[1], [0], [0], [1], [0, 0, 1, 1], [], []>} : vector<8x32xf32>, vector<32x128xf32>, vector<8x128xf32> -> vector<8x128xf32>
    %503 = arith.addf %501, %502 : vector<8x128xf32>
    %504 = math.tanh %503 : vector<8x128xf32>
    %505 = vector.extract_strided_slice %504 {offsets = [0, 0], sizes = [8, 32], strides = [1, 1]} : vector<8x128xf32> to vector<8x32xf32>
    %cst_215 = arith.constant 1.000000e+00 : f32
    %506 = vector.broadcast %cst_215 : f32 to vector<8x32xf32>
    %507 = arith.addf %505, %506 : vector<8x32xf32>
    %cst_216 = arith.constant 5.000000e-01 : f32
    %508 = vector.broadcast %cst_216 : f32 to vector<8x32xf32>
    %509 = arith.mulf %508, %507 : vector<8x32xf32>
    %510 = vector.extract_strided_slice %504 {offsets = [0, 32], sizes = [8, 32], strides = [1, 1]} : vector<8x128xf32> to vector<8x32xf32>
    %cst_217 = arith.constant 1.000000e+00 : f32
    %511 = vector.broadcast %cst_217 : f32 to vector<8x32xf32>
    %512 = arith.addf %510, %511 : vector<8x32xf32>
    %cst_218 = arith.constant 5.000000e-01 : f32
    %513 = vector.broadcast %cst_218 : f32 to vector<8x32xf32>
    %514 = arith.mulf %513, %512 : vector<8x32xf32>
    %515 = vector.extract_strided_slice %504 {offsets = [0, 64], sizes = [8, 32], strides = [1, 1]} : vector<8x128xf32> to vector<8x32xf32>
    %516 = vector.extract_strided_slice %504 {offsets = [0, 96], sizes = [8, 32], strides = [1, 1]} : vector<8x128xf32> to vector<8x32xf32>
    %cst_219 = arith.constant 1.000000e+00 : f32
    %517 = vector.broadcast %cst_219 : f32 to vector<8x32xf32>
    %518 = arith.addf %516, %517 : vector<8x32xf32>
    %cst_220 = arith.constant 5.000000e-01 : f32
    %519 = vector.broadcast %cst_220 : f32 to vector<8x32xf32>
    %520 = arith.mulf %519, %518 : vector<8x32xf32>
    %521 = arith.mulf %514, %492 : vector<8x32xf32>
    %522 = arith.mulf %509, %515 : vector<8x32xf32>
    %523 = arith.addf %521, %522 : vector<8x32xf32>
    %524 = math.tanh %523 : vector<8x32xf32>
    %525 = arith.mulf %520, %524 : vector<8x32xf32>
    %526 = arith.index_cast %c5_i32_211 : i32 to index
    %c0_221 = arith.constant 0 : index
    %c0_222 = arith.constant 0 : index
    %527 = vector.load %arg20[%526, %c0_221, %c0_222] : memref<10x8x32xf32, #tpu.memory_space<vmem>>, vector<1x8x32xf32>
    %528 = vector.shape_cast %527 : vector<1x8x32xf32> to vector<8x32xf32>
    %529 = vector.shape_cast %525 : vector<8x32xf32> to vector<1x8x32xf32>
    tpu.vector_store %arg20[%526, %c0_221, %c0_222], %529 {strides = array<i32>} : memref<10x8x32xf32, #tpu.memory_space<vmem>>, vector<1x8x32xf32>,
    %c6_i32_223 = arith.constant 6 : i32
    %530 = arith.index_cast %c6_i32_223 : i32 to index
    %c0_224 = arith.constant 0 : index
    %c0_225 = arith.constant 0 : index
    %531 = vector.load %arg21[%530, %c0_224, %c0_225] : memref<10x8x128xf32, #tpu.memory_space<vmem>>, vector<1x8x128xf32>
    %532 = vector.shape_cast %531 : vector<1x8x128xf32> to vector<8x128xf32>
    %cst_226 = arith.constant dense<0.000000e+00> : vector<8x128xf32>
    %533 = tpu.matmul %525, %339, %cst_226 {dimension_numbers = #tpu.dot_dimension_numbers<[1], [0], [0], [1], [0, 0, 1, 1], [], []>} : vector<8x32xf32>, vector<32x128xf32>, vector<8x128xf32> -> vector<8x128xf32>
    %534 = arith.addf %532, %533 : vector<8x128xf32>
    %535 = math.tanh %534 : vector<8x128xf32>
    %536 = vector.extract_strided_slice %535 {offsets = [0, 0], sizes = [8, 32], strides = [1, 1]} : vector<8x128xf32> to vector<8x32xf32>
    %cst_227 = arith.constant 1.000000e+00 : f32
    %537 = vector.broadcast %cst_227 : f32 to vector<8x32xf32>
    %538 = arith.addf %536, %537 : vector<8x32xf32>
    %cst_228 = arith.constant 5.000000e-01 : f32
    %539 = vector.broadcast %cst_228 : f32 to vector<8x32xf32>
    %540 = arith.mulf %539, %538 : vector<8x32xf32>
    %541 = vector.extract_strided_slice %535 {offsets = [0, 32], sizes = [8, 32], strides = [1, 1]} : vector<8x128xf32> to vector<8x32xf32>
    %cst_229 = arith.constant 1.000000e+00 : f32
    %542 = vector.broadcast %cst_229 : f32 to vector<8x32xf32>
    %543 = arith.addf %541, %542 : vector<8x32xf32>
    %cst_230 = arith.constant 5.000000e-01 : f32
    %544 = vector.broadcast %cst_230 : f32 to vector<8x32xf32>
    %545 = arith.mulf %544, %543 : vector<8x32xf32>
    %546 = vector.extract_strided_slice %535 {offsets = [0, 64], sizes = [8, 32], strides = [1, 1]} : vector<8x128xf32> to vector<8x32xf32>
    %547 = vector.extract_strided_slice %535 {offsets = [0, 96], sizes = [8, 32], strides = [1, 1]} : vector<8x128xf32> to vector<8x32xf32>
    %cst_231 = arith.constant 1.000000e+00 : f32
    %548 = vector.broadcast %cst_231 : f32 to vector<8x32xf32>
    %549 = arith.addf %547, %548 : vector<8x32xf32>
    %cst_232 = arith.constant 5.000000e-01 : f32
    %550 = vector.broadcast %cst_232 : f32 to vector<8x32xf32>
    %551 = arith.mulf %550, %549 : vector<8x32xf32>
    %552 = arith.mulf %545, %523 : vector<8x32xf32>
    %553 = arith.mulf %540, %546 : vector<8x32xf32>
    %554 = arith.addf %552, %553 : vector<8x32xf32>
    %555 = math.tanh %554 : vector<8x32xf32>
    %556 = arith.mulf %551, %555 : vector<8x32xf32>
    %557 = arith.index_cast %c6_i32_223 : i32 to index
    %c0_233 = arith.constant 0 : index
    %c0_234 = arith.constant 0 : index
    %558 = vector.load %arg20[%557, %c0_233, %c0_234] : memref<10x8x32xf32, #tpu.memory_space<vmem>>, vector<1x8x32xf32>
    %559 = vector.shape_cast %558 : vector<1x8x32xf32> to vector<8x32xf32>
    %560 = vector.shape_cast %556 : vector<8x32xf32> to vector<1x8x32xf32>
    tpu.vector_store %arg20[%557, %c0_233, %c0_234], %560 {strides = array<i32>} : memref<10x8x32xf32, #tpu.memory_space<vmem>>, vector<1x8x32xf32>,
    %c7_i32_235 = arith.constant 7 : i32
    %561 = arith.index_cast %c7_i32_235 : i32 to index
    %c0_236 = arith.constant 0 : index
    %c0_237 = arith.constant 0 : index
    %562 = vector.load %arg21[%561, %c0_236, %c0_237] : memref<10x8x128xf32, #tpu.memory_space<vmem>>, vector<1x8x128xf32>
    %563 = vector.shape_cast %562 : vector<1x8x128xf32> to vector<8x128xf32>
    %cst_238 = arith.constant dense<0.000000e+00> : vector<8x128xf32>
    %564 = tpu.matmul %556, %339, %cst_238 {dimension_numbers = #tpu.dot_dimension_numbers<[1], [0], [0], [1], [0, 0, 1, 1], [], []>} : vector<8x32xf32>, vector<32x128xf32>, vector<8x128xf32> -> vector<8x128xf32>
    %565 = arith.addf %563, %564 : vector<8x128xf32>
    %566 = math.tanh %565 : vector<8x128xf32>
    %567 = vector.extract_strided_slice %566 {offsets = [0, 0], sizes = [8, 32], strides = [1, 1]} : vector<8x128xf32> to vector<8x32xf32>
    %cst_239 = arith.constant 1.000000e+00 : f32
    %568 = vector.broadcast %cst_239 : f32 to vector<8x32xf32>
    %569 = arith.addf %567, %568 : vector<8x32xf32>
    %cst_240 = arith.constant 5.000000e-01 : f32
    %570 = vector.broadcast %cst_240 : f32 to vector<8x32xf32>
    %571 = arith.mulf %570, %569 : vector<8x32xf32>
    %572 = vector.extract_strided_slice %566 {offsets = [0, 32], sizes = [8, 32], strides = [1, 1]} : vector<8x128xf32> to vector<8x32xf32>
    %cst_241 = arith.constant 1.000000e+00 : f32
    %573 = vector.broadcast %cst_241 : f32 to vector<8x32xf32>
    %574 = arith.addf %572, %573 : vector<8x32xf32>
    %cst_242 = arith.constant 5.000000e-01 : f32
    %575 = vector.broadcast %cst_242 : f32 to vector<8x32xf32>
    %576 = arith.mulf %575, %574 : vector<8x32xf32>
    %577 = vector.extract_strided_slice %566 {offsets = [0, 64], sizes = [8, 32], strides = [1, 1]} : vector<8x128xf32> to vector<8x32xf32>
    %578 = vector.extract_strided_slice %566 {offsets = [0, 96], sizes = [8, 32], strides = [1, 1]} : vector<8x128xf32> to vector<8x32xf32>
    %cst_243 = arith.constant 1.000000e+00 : f32
    %579 = vector.broadcast %cst_243 : f32 to vector<8x32xf32>
    %580 = arith.addf %578, %579 : vector<8x32xf32>
    %cst_244 = arith.constant 5.000000e-01 : f32
    %581 = vector.broadcast %cst_244 : f32 to vector<8x32xf32>
    %582 = arith.mulf %581, %580 : vector<8x32xf32>
    %583 = arith.mulf %576, %554 : vector<8x32xf32>
    %584 = arith.mulf %571, %577 : vector<8x32xf32>
    %585 = arith.addf %583, %584 : vector<8x32xf32>
    %586 = math.tanh %585 : vector<8x32xf32>
    %587 = arith.mulf %582, %586 : vector<8x32xf32>
    %588 = arith.index_cast %c7_i32_235 : i32 to index
    %c0_245 = arith.constant 0 : index
    %c0_246 = arith.constant 0 : index
    %589 = vector.load %arg20[%588, %c0_245, %c0_246] : memref<10x8x32xf32, #tpu.memory_space<vmem>>, vector<1x8x32xf32>
    %590 = vector.shape_cast %589 : vector<1x8x32xf32> to vector<8x32xf32>
    %591 = vector.shape_cast %587 : vector<8x32xf32> to vector<1x8x32xf32>
    tpu.vector_store %arg20[%588, %c0_245, %c0_246], %591 {strides = array<i32>} : memref<10x8x32xf32, #tpu.memory_space<vmem>>, vector<1x8x32xf32>,
    %c8_i32_247 = arith.constant 8 : i32
    %592 = arith.index_cast %c8_i32_247 : i32 to index
    %c0_248 = arith.constant 0 : index
    %c0_249 = arith.constant 0 : index
    %593 = vector.load %arg21[%592, %c0_248, %c0_249] : memref<10x8x128xf32, #tpu.memory_space<vmem>>, vector<1x8x128xf32>
    %594 = vector.shape_cast %593 : vector<1x8x128xf32> to vector<8x128xf32>
    %cst_250 = arith.constant dense<0.000000e+00> : vector<8x128xf32>
    %595 = tpu.matmul %587, %339, %cst_250 {dimension_numbers = #tpu.dot_dimension_numbers<[1], [0], [0], [1], [0, 0, 1, 1], [], []>} : vector<8x32xf32>, vector<32x128xf32>, vector<8x128xf32> -> vector<8x128xf32>
    %596 = arith.addf %594, %595 : vector<8x128xf32>
    %597 = math.tanh %596 : vector<8x128xf32>
    %598 = vector.extract_strided_slice %597 {offsets = [0, 0], sizes = [8, 32], strides = [1, 1]} : vector<8x128xf32> to vector<8x32xf32>
    %cst_251 = arith.constant 1.000000e+00 : f32
    %599 = vector.broadcast %cst_251 : f32 to vector<8x32xf32>
    %600 = arith.addf %598, %599 : vector<8x32xf32>
    %cst_252 = arith.constant 5.000000e-01 : f32
    %601 = vector.broadcast %cst_252 : f32 to vector<8x32xf32>
    %602 = arith.mulf %601, %600 : vector<8x32xf32>
    %603 = vector.extract_strided_slice %597 {offsets = [0, 32], sizes = [8, 32], strides = [1, 1]} : vector<8x128xf32> to vector<8x32xf32>
    %cst_253 = arith.constant 1.000000e+00 : f32
    %604 = vector.broadcast %cst_253 : f32 to vector<8x32xf32>
    %605 = arith.addf %603, %604 : vector<8x32xf32>
    %cst_254 = arith.constant 5.000000e-01 : f32
    %606 = vector.broadcast %cst_254 : f32 to vector<8x32xf32>
    %607 = arith.mulf %606, %605 : vector<8x32xf32>
    %608 = vector.extract_strided_slice %597 {offsets = [0, 64], sizes = [8, 32], strides = [1, 1]} : vector<8x128xf32> to vector<8x32xf32>
    %609 = vector.extract_strided_slice %597 {offsets = [0, 96], sizes = [8, 32], strides = [1, 1]} : vector<8x128xf32> to vector<8x32xf32>
    %cst_255 = arith.constant 1.000000e+00 : f32
    %610 = vector.broadcast %cst_255 : f32 to vector<8x32xf32>
    %611 = arith.addf %609, %610 : vector<8x32xf32>
    %cst_256 = arith.constant 5.000000e-01 : f32
    %612 = vector.broadcast %cst_256 : f32 to vector<8x32xf32>
    %613 = arith.mulf %612, %611 : vector<8x32xf32>
    %614 = arith.mulf %607, %585 : vector<8x32xf32>
    %615 = arith.mulf %602, %608 : vector<8x32xf32>
    %616 = arith.addf %614, %615 : vector<8x32xf32>
    %617 = math.tanh %616 : vector<8x32xf32>
    %618 = arith.mulf %613, %617 : vector<8x32xf32>
    %619 = arith.index_cast %c8_i32_247 : i32 to index
    %c0_257 = arith.constant 0 : index
    %c0_258 = arith.constant 0 : index
    %620 = vector.load %arg20[%619, %c0_257, %c0_258] : memref<10x8x32xf32, #tpu.memory_space<vmem>>, vector<1x8x32xf32>
    %621 = vector.shape_cast %620 : vector<1x8x32xf32> to vector<8x32xf32>
    %622 = vector.shape_cast %618 : vector<8x32xf32> to vector<1x8x32xf32>
    tpu.vector_store %arg20[%619, %c0_257, %c0_258], %622 {strides = array<i32>} : memref<10x8x32xf32, #tpu.memory_space<vmem>>, vector<1x8x32xf32>,
    %c9_i32_259 = arith.constant 9 : i32
    %623 = arith.index_cast %c9_i32_259 : i32 to index
    %c0_260 = arith.constant 0 : index
    %c0_261 = arith.constant 0 : index
    %624 = vector.load %arg21[%623, %c0_260, %c0_261] : memref<10x8x128xf32, #tpu.memory_space<vmem>>, vector<1x8x128xf32>
    %625 = vector.shape_cast %624 : vector<1x8x128xf32> to vector<8x128xf32>
    %cst_262 = arith.constant dense<0.000000e+00> : vector<8x128xf32>
    %626 = tpu.matmul %618, %339, %cst_262 {dimension_numbers = #tpu.dot_dimension_numbers<[1], [0], [0], [1], [0, 0, 1, 1], [], []>} : vector<8x32xf32>, vector<32x128xf32>, vector<8x128xf32> -> vector<8x128xf32>
    %627 = arith.addf %625, %626 : vector<8x128xf32>
    %628 = math.tanh %627 : vector<8x128xf32>
    %629 = vector.extract_strided_slice %628 {offsets = [0, 0], sizes = [8, 32], strides = [1, 1]} : vector<8x128xf32> to vector<8x32xf32>
    %cst_263 = arith.constant 1.000000e+00 : f32
    %630 = vector.broadcast %cst_263 : f32 to vector<8x32xf32>
    %631 = arith.addf %629, %630 : vector<8x32xf32>
    %cst_264 = arith.constant 5.000000e-01 : f32
    %632 = vector.broadcast %cst_264 : f32 to vector<8x32xf32>
    %633 = arith.mulf %632, %631 : vector<8x32xf32>
    %634 = vector.extract_strided_slice %628 {offsets = [0, 32], sizes = [8, 32], strides = [1, 1]} : vector<8x128xf32> to vector<8x32xf32>
    %cst_265 = arith.constant 1.000000e+00 : f32
    %635 = vector.broadcast %cst_265 : f32 to vector<8x32xf32>
    %636 = arith.addf %634, %635 : vector<8x32xf32>
    %cst_266 = arith.constant 5.000000e-01 : f32
    %637 = vector.broadcast %cst_266 : f32 to vector<8x32xf32>
    %638 = arith.mulf %637, %636 : vector<8x32xf32>
    %639 = vector.extract_strided_slice %628 {offsets = [0, 64], sizes = [8, 32], strides = [1, 1]} : vector<8x128xf32> to vector<8x32xf32>
    %640 = vector.extract_strided_slice %628 {offsets = [0, 96], sizes = [8, 32], strides = [1, 1]} : vector<8x128xf32> to vector<8x32xf32>
    %cst_267 = arith.constant 1.000000e+00 : f32
    %641 = vector.broadcast %cst_267 : f32 to vector<8x32xf32>
    %642 = arith.addf %640, %641 : vector<8x32xf32>
    %cst_268 = arith.constant 5.000000e-01 : f32
    %643 = vector.broadcast %cst_268 : f32 to vector<8x32xf32>
    %644 = arith.mulf %643, %642 : vector<8x32xf32>
    %645 = arith.mulf %638, %616 : vector<8x32xf32>
    %646 = arith.mulf %633, %639 : vector<8x32xf32>
    %647 = arith.addf %645, %646 : vector<8x32xf32>
    %648 = math.tanh %647 : vector<8x32xf32>
    %649 = arith.mulf %644, %648 : vector<8x32xf32>
    %650 = arith.index_cast %c9_i32_259 : i32 to index
    %c0_269 = arith.constant 0 : index
    %c0_270 = arith.constant 0 : index
    %651 = vector.load %arg20[%650, %c0_269, %c0_270] : memref<10x8x32xf32, #tpu.memory_space<vmem>>, vector<1x8x32xf32>
    %652 = vector.shape_cast %651 : vector<1x8x32xf32> to vector<8x32xf32>
    %653 = vector.shape_cast %649 : vector<8x32xf32> to vector<1x8x32xf32>
    tpu.vector_store %arg20[%650, %c0_269, %c0_270], %653 {strides = array<i32>} : memref<10x8x32xf32, #tpu.memory_space<vmem>>, vector<1x8x32xf32>,
    %c10_i32_271 = arith.constant 10 : i32
    %c1_272 = arith.constant 1 : index
    %c0_273 = arith.constant 0 : index
    %c0_274 = arith.constant 0 : index
    %654 = vector.load %arg18[%c1_272, %c0_273, %c0_274] : memref<3x8x32xf32, #tpu.memory_space<vmem>>, vector<1x8x32xf32>
    %655 = vector.shape_cast %654 : vector<1x8x32xf32> to vector<8x32xf32>
    %656 = vector.shape_cast %649 : vector<8x32xf32> to vector<1x8x32xf32>
    tpu.vector_store %arg18[%c1_272, %c0_273, %c0_274], %656 {strides = array<i32>} : memref<3x8x32xf32, #tpu.memory_space<vmem>>, vector<1x8x32xf32>,
    %c1_275 = arith.constant 1 : index
    %c0_276 = arith.constant 0 : index
    %c0_277 = arith.constant 0 : index
    %657 = vector.load %arg19[%c1_275, %c0_276, %c0_277] : memref<3x8x32xf32, #tpu.memory_space<vmem>>, vector<1x8x32xf32>
    %658 = vector.shape_cast %657 : vector<1x8x32xf32> to vector<8x32xf32>
    %659 = vector.shape_cast %647 : vector<8x32xf32> to vector<1x8x32xf32>
    tpu.vector_store %arg19[%c1_275, %c0_276, %c0_277], %659 {strides = array<i32>} : memref<3x8x32xf32, #tpu.memory_space<vmem>>, vector<1x8x32xf32>,
    %c0_278 = arith.constant 0 : index
    %c0_279 = arith.constant 0 : index
    %c0_280 = arith.constant 0 : index
    %660 = vector.load %arg20[%c0_278, %c0_279, %c0_280] : memref<10x8x32xf32, #tpu.memory_space<vmem>>, vector<10x8x32xf32>
    %661 = vector.shape_cast %660 : vector<10x8x32xf32> to vector<80x32xf32>
    %c0_281 = arith.constant 0 : index
    %c0_282 = arith.constant 0 : index
    %662 = vector.load %arg10[%c0_281, %c0_282] : memref<32x128xf32, #tpu.memory_space<vmem>>, vector<32x128xf32>
    %cst_283 = arith.constant dense<0.000000e+00> : vector<80x128xf32>
    %663 = tpu.matmul %661, %662, %cst_283 {dimension_numbers = #tpu.dot_dimension_numbers<[1], [0], [0], [1], [0, 0, 1, 1], [], []>} : vector<80x32xf32>, vector<32x128xf32>, vector<80x128xf32> -> vector<80x128xf32>
    %c0_284 = arith.constant 0 : index
    %c0_285 = arith.constant 0 : index
    %664 = vector.load %arg12[%c0_284, %c0_285] : memref<1x128xf32, #tpu.memory_space<vmem>>, vector<1x128xf32>
    %665 = vector.broadcast %664 : vector<1x128xf32> to vector<80x128xf32>
    %666 = arith.addf %663, %665 : vector<80x128xf32>
    %667 = vector.shape_cast %666 : vector<80x128xf32> to vector<10x8x128xf32>
    %c0_286 = arith.constant 0 : index
    %c0_287 = arith.constant 0 : index
    %c0_288 = arith.constant 0 : index
    %668 = vector.load %arg21[%c0_286, %c0_287, %c0_288] : memref<10x8x128xf32, #tpu.memory_space<vmem>>, vector<10x8x128xf32>
    tpu.vector_store %arg21[%c0_286, %c0_287, %c0_288], %667 {strides = array<i32>} : memref<10x8x128xf32, #tpu.memory_space<vmem>>, vector<10x8x128xf32>,
    %c0_289 = arith.constant 0 : index
    %c0_290 = arith.constant 0 : index
    %669 = vector.load %arg11[%c0_289, %c0_290] : memref<32x128xf32, #tpu.memory_space<vmem>>, vector<32x128xf32>
    %c2 = arith.constant 2 : index
    %c0_291 = arith.constant 0 : index
    %c0_292 = arith.constant 0 : index
    %670 = vector.load %arg2[%c2, %c0_291, %c0_292] : memref<3x8x32xf32, #tpu.memory_space<vmem>>, vector<1x8x32xf32>
    %671 = vector.shape_cast %670 : vector<1x8x32xf32> to vector<8x32xf32>
    %c2_293 = arith.constant 2 : index
    %c0_294 = arith.constant 0 : index
    %c0_295 = arith.constant 0 : index
    %672 = vector.load %arg3[%c2_293, %c0_294, %c0_295] : memref<3x8x32xf32, #tpu.memory_space<vmem>>, vector<1x8x32xf32>
    %673 = vector.shape_cast %672 : vector<1x8x32xf32> to vector<8x32xf32>
    %c0_i32_296 = arith.constant 0 : i32
    %674 = arith.index_cast %c0_i32_296 : i32 to index
    %c0_297 = arith.constant 0 : index
    %c0_298 = arith.constant 0 : index
    %675 = vector.load %arg21[%674, %c0_297, %c0_298] : memref<10x8x128xf32, #tpu.memory_space<vmem>>, vector<1x8x128xf32>
    %676 = vector.shape_cast %675 : vector<1x8x128xf32> to vector<8x128xf32>
    %cst_299 = arith.constant dense<0.000000e+00> : vector<8x128xf32>
    %677 = tpu.matmul %671, %669, %cst_299 {dimension_numbers = #tpu.dot_dimension_numbers<[1], [0], [0], [1], [0, 0, 1, 1], [], []>} : vector<8x32xf32>, vector<32x128xf32>, vector<8x128xf32> -> vector<8x128xf32>
    %678 = arith.addf %676, %677 : vector<8x128xf32>
    %679 = math.tanh %678 : vector<8x128xf32>
    %680 = vector.extract_strided_slice %679 {offsets = [0, 0], sizes = [8, 32], strides = [1, 1]} : vector<8x128xf32> to vector<8x32xf32>
    %cst_300 = arith.constant 1.000000e+00 : f32
    %681 = vector.broadcast %cst_300 : f32 to vector<8x32xf32>
    %682 = arith.addf %680, %681 : vector<8x32xf32>
    %cst_301 = arith.constant 5.000000e-01 : f32
    %683 = vector.broadcast %cst_301 : f32 to vector<8x32xf32>
    %684 = arith.mulf %683, %682 : vector<8x32xf32>
    %685 = vector.extract_strided_slice %679 {offsets = [0, 32], sizes = [8, 32], strides = [1, 1]} : vector<8x128xf32> to vector<8x32xf32>
    %cst_302 = arith.constant 1.000000e+00 : f32
    %686 = vector.broadcast %cst_302 : f32 to vector<8x32xf32>
    %687 = arith.addf %685, %686 : vector<8x32xf32>
    %cst_303 = arith.constant 5.000000e-01 : f32
    %688 = vector.broadcast %cst_303 : f32 to vector<8x32xf32>
    %689 = arith.mulf %688, %687 : vector<8x32xf32>
    %690 = vector.extract_strided_slice %679 {offsets = [0, 64], sizes = [8, 32], strides = [1, 1]} : vector<8x128xf32> to vector<8x32xf32>
    %691 = vector.extract_strided_slice %679 {offsets = [0, 96], sizes = [8, 32], strides = [1, 1]} : vector<8x128xf32> to vector<8x32xf32>
    %cst_304 = arith.constant 1.000000e+00 : f32
    %692 = vector.broadcast %cst_304 : f32 to vector<8x32xf32>
    %693 = arith.addf %691, %692 : vector<8x32xf32>
    %cst_305 = arith.constant 5.000000e-01 : f32
    %694 = vector.broadcast %cst_305 : f32 to vector<8x32xf32>
    %695 = arith.mulf %694, %693 : vector<8x32xf32>
    %696 = arith.mulf %689, %673 : vector<8x32xf32>
    %697 = arith.mulf %684, %690 : vector<8x32xf32>
    %698 = arith.addf %696, %697 : vector<8x32xf32>
    %699 = math.tanh %698 : vector<8x32xf32>
    %700 = arith.mulf %695, %699 : vector<8x32xf32>
    %701 = arith.index_cast %c0_i32_296 : i32 to index
    %c0_306 = arith.constant 0 : index
    %c0_307 = arith.constant 0 : index
    %702 = vector.load %arg20[%701, %c0_306, %c0_307] : memref<10x8x32xf32, #tpu.memory_space<vmem>>, vector<1x8x32xf32>
    %703 = vector.shape_cast %702 : vector<1x8x32xf32> to vector<8x32xf32>
    %704 = vector.shape_cast %700 : vector<8x32xf32> to vector<1x8x32xf32>
    tpu.vector_store %arg20[%701, %c0_306, %c0_307], %704 {strides = array<i32>} : memref<10x8x32xf32, #tpu.memory_space<vmem>>, vector<1x8x32xf32>,
    %c1_i32_308 = arith.constant 1 : i32
    %705 = arith.index_cast %c1_i32_308 : i32 to index
    %c0_309 = arith.constant 0 : index
    %c0_310 = arith.constant 0 : index
    %706 = vector.load %arg21[%705, %c0_309, %c0_310] : memref<10x8x128xf32, #tpu.memory_space<vmem>>, vector<1x8x128xf32>
    %707 = vector.shape_cast %706 : vector<1x8x128xf32> to vector<8x128xf32>
    %cst_311 = arith.constant dense<0.000000e+00> : vector<8x128xf32>
    %708 = tpu.matmul %700, %669, %cst_311 {dimension_numbers = #tpu.dot_dimension_numbers<[1], [0], [0], [1], [0, 0, 1, 1], [], []>} : vector<8x32xf32>, vector<32x128xf32>, vector<8x128xf32> -> vector<8x128xf32>
    %709 = arith.addf %707, %708 : vector<8x128xf32>
    %710 = math.tanh %709 : vector<8x128xf32>
    %711 = vector.extract_strided_slice %710 {offsets = [0, 0], sizes = [8, 32], strides = [1, 1]} : vector<8x128xf32> to vector<8x32xf32>
    %cst_312 = arith.constant 1.000000e+00 : f32
    %712 = vector.broadcast %cst_312 : f32 to vector<8x32xf32>
    %713 = arith.addf %711, %712 : vector<8x32xf32>
    %cst_313 = arith.constant 5.000000e-01 : f32
    %714 = vector.broadcast %cst_313 : f32 to vector<8x32xf32>
    %715 = arith.mulf %714, %713 : vector<8x32xf32>
    %716 = vector.extract_strided_slice %710 {offsets = [0, 32], sizes = [8, 32], strides = [1, 1]} : vector<8x128xf32> to vector<8x32xf32>
    %cst_314 = arith.constant 1.000000e+00 : f32
    %717 = vector.broadcast %cst_314 : f32 to vector<8x32xf32>
    %718 = arith.addf %716, %717 : vector<8x32xf32>
    %cst_315 = arith.constant 5.000000e-01 : f32
    %719 = vector.broadcast %cst_315 : f32 to vector<8x32xf32>
    %720 = arith.mulf %719, %718 : vector<8x32xf32>
    %721 = vector.extract_strided_slice %710 {offsets = [0, 64], sizes = [8, 32], strides = [1, 1]} : vector<8x128xf32> to vector<8x32xf32>
    %722 = vector.extract_strided_slice %710 {offsets = [0, 96], sizes = [8, 32], strides = [1, 1]} : vector<8x128xf32> to vector<8x32xf32>
    %cst_316 = arith.constant 1.000000e+00 : f32
    %723 = vector.broadcast %cst_316 : f32 to vector<8x32xf32>
    %724 = arith.addf %722, %723 : vector<8x32xf32>
    %cst_317 = arith.constant 5.000000e-01 : f32
    %725 = vector.broadcast %cst_317 : f32 to vector<8x32xf32>
    %726 = arith.mulf %725, %724 : vector<8x32xf32>
    %727 = arith.mulf %720, %698 : vector<8x32xf32>
    %728 = arith.mulf %715, %721 : vector<8x32xf32>
    %729 = arith.addf %727, %728 : vector<8x32xf32>
    %730 = math.tanh %729 : vector<8x32xf32>
    %731 = arith.mulf %726, %730 : vector<8x32xf32>
    %732 = arith.index_cast %c1_i32_308 : i32 to index
    %c0_318 = arith.constant 0 : index
    %c0_319 = arith.constant 0 : index
    %733 = vector.load %arg20[%732, %c0_318, %c0_319] : memref<10x8x32xf32, #tpu.memory_space<vmem>>, vector<1x8x32xf32>
    %734 = vector.shape_cast %733 : vector<1x8x32xf32> to vector<8x32xf32>
    %735 = vector.shape_cast %731 : vector<8x32xf32> to vector<1x8x32xf32>
    tpu.vector_store %arg20[%732, %c0_318, %c0_319], %735 {strides = array<i32>} : memref<10x8x32xf32, #tpu.memory_space<vmem>>, vector<1x8x32xf32>,
    %c2_i32_320 = arith.constant 2 : i32
    %736 = arith.index_cast %c2_i32_320 : i32 to index
    %c0_321 = arith.constant 0 : index
    %c0_322 = arith.constant 0 : index
    %737 = vector.load %arg21[%736, %c0_321, %c0_322] : memref<10x8x128xf32, #tpu.memory_space<vmem>>, vector<1x8x128xf32>
    %738 = vector.shape_cast %737 : vector<1x8x128xf32> to vector<8x128xf32>
    %cst_323 = arith.constant dense<0.000000e+00> : vector<8x128xf32>
    %739 = tpu.matmul %731, %669, %cst_323 {dimension_numbers = #tpu.dot_dimension_numbers<[1], [0], [0], [1], [0, 0, 1, 1], [], []>} : vector<8x32xf32>, vector<32x128xf32>, vector<8x128xf32> -> vector<8x128xf32>
    %740 = arith.addf %738, %739 : vector<8x128xf32>
    %741 = math.tanh %740 : vector<8x128xf32>
    %742 = vector.extract_strided_slice %741 {offsets = [0, 0], sizes = [8, 32], strides = [1, 1]} : vector<8x128xf32> to vector<8x32xf32>
    %cst_324 = arith.constant 1.000000e+00 : f32
    %743 = vector.broadcast %cst_324 : f32 to vector<8x32xf32>
    %744 = arith.addf %742, %743 : vector<8x32xf32>
    %cst_325 = arith.constant 5.000000e-01 : f32
    %745 = vector.broadcast %cst_325 : f32 to vector<8x32xf32>
    %746 = arith.mulf %745, %744 : vector<8x32xf32>
    %747 = vector.extract_strided_slice %741 {offsets = [0, 32], sizes = [8, 32], strides = [1, 1]} : vector<8x128xf32> to vector<8x32xf32>
    %cst_326 = arith.constant 1.000000e+00 : f32
    %748 = vector.broadcast %cst_326 : f32 to vector<8x32xf32>
    %749 = arith.addf %747, %748 : vector<8x32xf32>
    %cst_327 = arith.constant 5.000000e-01 : f32
    %750 = vector.broadcast %cst_327 : f32 to vector<8x32xf32>
    %751 = arith.mulf %750, %749 : vector<8x32xf32>
    %752 = vector.extract_strided_slice %741 {offsets = [0, 64], sizes = [8, 32], strides = [1, 1]} : vector<8x128xf32> to vector<8x32xf32>
    %753 = vector.extract_strided_slice %741 {offsets = [0, 96], sizes = [8, 32], strides = [1, 1]} : vector<8x128xf32> to vector<8x32xf32>
    %cst_328 = arith.constant 1.000000e+00 : f32
    %754 = vector.broadcast %cst_328 : f32 to vector<8x32xf32>
    %755 = arith.addf %753, %754 : vector<8x32xf32>
    %cst_329 = arith.constant 5.000000e-01 : f32
    %756 = vector.broadcast %cst_329 : f32 to vector<8x32xf32>
    %757 = arith.mulf %756, %755 : vector<8x32xf32>
    %758 = arith.mulf %751, %729 : vector<8x32xf32>
    %759 = arith.mulf %746, %752 : vector<8x32xf32>
    %760 = arith.addf %758, %759 : vector<8x32xf32>
    %761 = math.tanh %760 : vector<8x32xf32>
    %762 = arith.mulf %757, %761 : vector<8x32xf32>
    %763 = arith.index_cast %c2_i32_320 : i32 to index
    %c0_330 = arith.constant 0 : index
    %c0_331 = arith.constant 0 : index
    %764 = vector.load %arg20[%763, %c0_330, %c0_331] : memref<10x8x32xf32, #tpu.memory_space<vmem>>, vector<1x8x32xf32>
    %765 = vector.shape_cast %764 : vector<1x8x32xf32> to vector<8x32xf32>
    %766 = vector.shape_cast %762 : vector<8x32xf32> to vector<1x8x32xf32>
    tpu.vector_store %arg20[%763, %c0_330, %c0_331], %766 {strides = array<i32>} : memref<10x8x32xf32, #tpu.memory_space<vmem>>, vector<1x8x32xf32>,
    %c3_i32_332 = arith.constant 3 : i32
    %767 = arith.index_cast %c3_i32_332 : i32 to index
    %c0_333 = arith.constant 0 : index
    %c0_334 = arith.constant 0 : index
    %768 = vector.load %arg21[%767, %c0_333, %c0_334] : memref<10x8x128xf32, #tpu.memory_space<vmem>>, vector<1x8x128xf32>
    %769 = vector.shape_cast %768 : vector<1x8x128xf32> to vector<8x128xf32>
    %cst_335 = arith.constant dense<0.000000e+00> : vector<8x128xf32>
    %770 = tpu.matmul %762, %669, %cst_335 {dimension_numbers = #tpu.dot_dimension_numbers<[1], [0], [0], [1], [0, 0, 1, 1], [], []>} : vector<8x32xf32>, vector<32x128xf32>, vector<8x128xf32> -> vector<8x128xf32>
    %771 = arith.addf %769, %770 : vector<8x128xf32>
    %772 = math.tanh %771 : vector<8x128xf32>
    %773 = vector.extract_strided_slice %772 {offsets = [0, 0], sizes = [8, 32], strides = [1, 1]} : vector<8x128xf32> to vector<8x32xf32>
    %cst_336 = arith.constant 1.000000e+00 : f32
    %774 = vector.broadcast %cst_336 : f32 to vector<8x32xf32>
    %775 = arith.addf %773, %774 : vector<8x32xf32>
    %cst_337 = arith.constant 5.000000e-01 : f32
    %776 = vector.broadcast %cst_337 : f32 to vector<8x32xf32>
    %777 = arith.mulf %776, %775 : vector<8x32xf32>
    %778 = vector.extract_strided_slice %772 {offsets = [0, 32], sizes = [8, 32], strides = [1, 1]} : vector<8x128xf32> to vector<8x32xf32>
    %cst_338 = arith.constant 1.000000e+00 : f32
    %779 = vector.broadcast %cst_338 : f32 to vector<8x32xf32>
    %780 = arith.addf %778, %779 : vector<8x32xf32>
    %cst_339 = arith.constant 5.000000e-01 : f32
    %781 = vector.broadcast %cst_339 : f32 to vector<8x32xf32>
    %782 = arith.mulf %781, %780 : vector<8x32xf32>
    %783 = vector.extract_strided_slice %772 {offsets = [0, 64], sizes = [8, 32], strides = [1, 1]} : vector<8x128xf32> to vector<8x32xf32>
    %784 = vector.extract_strided_slice %772 {offsets = [0, 96], sizes = [8, 32], strides = [1, 1]} : vector<8x128xf32> to vector<8x32xf32>
    %cst_340 = arith.constant 1.000000e+00 : f32
    %785 = vector.broadcast %cst_340 : f32 to vector<8x32xf32>
    %786 = arith.addf %784, %785 : vector<8x32xf32>
    %cst_341 = arith.constant 5.000000e-01 : f32
    %787 = vector.broadcast %cst_341 : f32 to vector<8x32xf32>
    %788 = arith.mulf %787, %786 : vector<8x32xf32>
    %789 = arith.mulf %782, %760 : vector<8x32xf32>
    %790 = arith.mulf %777, %783 : vector<8x32xf32>
    %791 = arith.addf %789, %790 : vector<8x32xf32>
    %792 = math.tanh %791 : vector<8x32xf32>
    %793 = arith.mulf %788, %792 : vector<8x32xf32>
    %794 = arith.index_cast %c3_i32_332 : i32 to index
    %c0_342 = arith.constant 0 : index
    %c0_343 = arith.constant 0 : index
    %795 = vector.load %arg20[%794, %c0_342, %c0_343] : memref<10x8x32xf32, #tpu.memory_space<vmem>>, vector<1x8x32xf32>
    %796 = vector.shape_cast %795 : vector<1x8x32xf32> to vector<8x32xf32>
    %797 = vector.shape_cast %793 : vector<8x32xf32> to vector<1x8x32xf32>
    tpu.vector_store %arg20[%794, %c0_342, %c0_343], %797 {strides = array<i32>} : memref<10x8x32xf32, #tpu.memory_space<vmem>>, vector<1x8x32xf32>,
    %c4_i32_344 = arith.constant 4 : i32
    %798 = arith.index_cast %c4_i32_344 : i32 to index
    %c0_345 = arith.constant 0 : index
    %c0_346 = arith.constant 0 : index
    %799 = vector.load %arg21[%798, %c0_345, %c0_346] : memref<10x8x128xf32, #tpu.memory_space<vmem>>, vector<1x8x128xf32>
    %800 = vector.shape_cast %799 : vector<1x8x128xf32> to vector<8x128xf32>
    %cst_347 = arith.constant dense<0.000000e+00> : vector<8x128xf32>
    %801 = tpu.matmul %793, %669, %cst_347 {dimension_numbers = #tpu.dot_dimension_numbers<[1], [0], [0], [1], [0, 0, 1, 1], [], []>} : vector<8x32xf32>, vector<32x128xf32>, vector<8x128xf32> -> vector<8x128xf32>
    %802 = arith.addf %800, %801 : vector<8x128xf32>
    %803 = math.tanh %802 : vector<8x128xf32>
    %804 = vector.extract_strided_slice %803 {offsets = [0, 0], sizes = [8, 32], strides = [1, 1]} : vector<8x128xf32> to vector<8x32xf32>
    %cst_348 = arith.constant 1.000000e+00 : f32
    %805 = vector.broadcast %cst_348 : f32 to vector<8x32xf32>
    %806 = arith.addf %804, %805 : vector<8x32xf32>
    %cst_349 = arith.constant 5.000000e-01 : f32
    %807 = vector.broadcast %cst_349 : f32 to vector<8x32xf32>
    %808 = arith.mulf %807, %806 : vector<8x32xf32>
    %809 = vector.extract_strided_slice %803 {offsets = [0, 32], sizes = [8, 32], strides = [1, 1]} : vector<8x128xf32> to vector<8x32xf32>
    %cst_350 = arith.constant 1.000000e+00 : f32
    %810 = vector.broadcast %cst_350 : f32 to vector<8x32xf32>
    %811 = arith.addf %809, %810 : vector<8x32xf32>
    %cst_351 = arith.constant 5.000000e-01 : f32
    %812 = vector.broadcast %cst_351 : f32 to vector<8x32xf32>
    %813 = arith.mulf %812, %811 : vector<8x32xf32>
    %814 = vector.extract_strided_slice %803 {offsets = [0, 64], sizes = [8, 32], strides = [1, 1]} : vector<8x128xf32> to vector<8x32xf32>
    %815 = vector.extract_strided_slice %803 {offsets = [0, 96], sizes = [8, 32], strides = [1, 1]} : vector<8x128xf32> to vector<8x32xf32>
    %cst_352 = arith.constant 1.000000e+00 : f32
    %816 = vector.broadcast %cst_352 : f32 to vector<8x32xf32>
    %817 = arith.addf %815, %816 : vector<8x32xf32>
    %cst_353 = arith.constant 5.000000e-01 : f32
    %818 = vector.broadcast %cst_353 : f32 to vector<8x32xf32>
    %819 = arith.mulf %818, %817 : vector<8x32xf32>
    %820 = arith.mulf %813, %791 : vector<8x32xf32>
    %821 = arith.mulf %808, %814 : vector<8x32xf32>
    %822 = arith.addf %820, %821 : vector<8x32xf32>
    %823 = math.tanh %822 : vector<8x32xf32>
    %824 = arith.mulf %819, %823 : vector<8x32xf32>
    %825 = arith.index_cast %c4_i32_344 : i32 to index
    %c0_354 = arith.constant 0 : index
    %c0_355 = arith.constant 0 : index
    %826 = vector.load %arg20[%825, %c0_354, %c0_355] : memref<10x8x32xf32, #tpu.memory_space<vmem>>, vector<1x8x32xf32>
    %827 = vector.shape_cast %826 : vector<1x8x32xf32> to vector<8x32xf32>
    %828 = vector.shape_cast %824 : vector<8x32xf32> to vector<1x8x32xf32>
    tpu.vector_store %arg20[%825, %c0_354, %c0_355], %828 {strides = array<i32>} : memref<10x8x32xf32, #tpu.memory_space<vmem>>, vector<1x8x32xf32>,
    %c5_i32_356 = arith.constant 5 : i32
    %829 = arith.index_cast %c5_i32_356 : i32 to index
    %c0_357 = arith.constant 0 : index
    %c0_358 = arith.constant 0 : index
    %830 = vector.load %arg21[%829, %c0_357, %c0_358] : memref<10x8x128xf32, #tpu.memory_space<vmem>>, vector<1x8x128xf32>
    %831 = vector.shape_cast %830 : vector<1x8x128xf32> to vector<8x128xf32>
    %cst_359 = arith.constant dense<0.000000e+00> : vector<8x128xf32>
    %832 = tpu.matmul %824, %669, %cst_359 {dimension_numbers = #tpu.dot_dimension_numbers<[1], [0], [0], [1], [0, 0, 1, 1], [], []>} : vector<8x32xf32>, vector<32x128xf32>, vector<8x128xf32> -> vector<8x128xf32>
    %833 = arith.addf %831, %832 : vector<8x128xf32>
    %834 = math.tanh %833 : vector<8x128xf32>
    %835 = vector.extract_strided_slice %834 {offsets = [0, 0], sizes = [8, 32], strides = [1, 1]} : vector<8x128xf32> to vector<8x32xf32>
    %cst_360 = arith.constant 1.000000e+00 : f32
    %836 = vector.broadcast %cst_360 : f32 to vector<8x32xf32>
    %837 = arith.addf %835, %836 : vector<8x32xf32>
    %cst_361 = arith.constant 5.000000e-01 : f32
    %838 = vector.broadcast %cst_361 : f32 to vector<8x32xf32>
    %839 = arith.mulf %838, %837 : vector<8x32xf32>
    %840 = vector.extract_strided_slice %834 {offsets = [0, 32], sizes = [8, 32], strides = [1, 1]} : vector<8x128xf32> to vector<8x32xf32>
    %cst_362 = arith.constant 1.000000e+00 : f32
    %841 = vector.broadcast %cst_362 : f32 to vector<8x32xf32>
    %842 = arith.addf %840, %841 : vector<8x32xf32>
    %cst_363 = arith.constant 5.000000e-01 : f32
    %843 = vector.broadcast %cst_363 : f32 to vector<8x32xf32>
    %844 = arith.mulf %843, %842 : vector<8x32xf32>
    %845 = vector.extract_strided_slice %834 {offsets = [0, 64], sizes = [8, 32], strides = [1, 1]} : vector<8x128xf32> to vector<8x32xf32>
    %846 = vector.extract_strided_slice %834 {offsets = [0, 96], sizes = [8, 32], strides = [1, 1]} : vector<8x128xf32> to vector<8x32xf32>
    %cst_364 = arith.constant 1.000000e+00 : f32
    %847 = vector.broadcast %cst_364 : f32 to vector<8x32xf32>
    %848 = arith.addf %846, %847 : vector<8x32xf32>
    %cst_365 = arith.constant 5.000000e-01 : f32
    %849 = vector.broadcast %cst_365 : f32 to vector<8x32xf32>
    %850 = arith.mulf %849, %848 : vector<8x32xf32>
    %851 = arith.mulf %844, %822 : vector<8x32xf32>
    %852 = arith.mulf %839, %845 : vector<8x32xf32>
    %853 = arith.addf %851, %852 : vector<8x32xf32>
    %854 = math.tanh %853 : vector<8x32xf32>
    %855 = arith.mulf %850, %854 : vector<8x32xf32>
    %856 = arith.index_cast %c5_i32_356 : i32 to index
    %c0_366 = arith.constant 0 : index
    %c0_367 = arith.constant 0 : index
    %857 = vector.load %arg20[%856, %c0_366, %c0_367] : memref<10x8x32xf32, #tpu.memory_space<vmem>>, vector<1x8x32xf32>
    %858 = vector.shape_cast %857 : vector<1x8x32xf32> to vector<8x32xf32>
    %859 = vector.shape_cast %855 : vector<8x32xf32> to vector<1x8x32xf32>
    tpu.vector_store %arg20[%856, %c0_366, %c0_367], %859 {strides = array<i32>} : memref<10x8x32xf32, #tpu.memory_space<vmem>>, vector<1x8x32xf32>,
    %c6_i32_368 = arith.constant 6 : i32
    %860 = arith.index_cast %c6_i32_368 : i32 to index
    %c0_369 = arith.constant 0 : index
    %c0_370 = arith.constant 0 : index
    %861 = vector.load %arg21[%860, %c0_369, %c0_370] : memref<10x8x128xf32, #tpu.memory_space<vmem>>, vector<1x8x128xf32>
    %862 = vector.shape_cast %861 : vector<1x8x128xf32> to vector<8x128xf32>
    %cst_371 = arith.constant dense<0.000000e+00> : vector<8x128xf32>
    %863 = tpu.matmul %855, %669, %cst_371 {dimension_numbers = #tpu.dot_dimension_numbers<[1], [0], [0], [1], [0, 0, 1, 1], [], []>} : vector<8x32xf32>, vector<32x128xf32>, vector<8x128xf32> -> vector<8x128xf32>
    %864 = arith.addf %862, %863 : vector<8x128xf32>
    %865 = math.tanh %864 : vector<8x128xf32>
    %866 = vector.extract_strided_slice %865 {offsets = [0, 0], sizes = [8, 32], strides = [1, 1]} : vector<8x128xf32> to vector<8x32xf32>
    %cst_372 = arith.constant 1.000000e+00 : f32
    %867 = vector.broadcast %cst_372 : f32 to vector<8x32xf32>
    %868 = arith.addf %866, %867 : vector<8x32xf32>
    %cst_373 = arith.constant 5.000000e-01 : f32
    %869 = vector.broadcast %cst_373 : f32 to vector<8x32xf32>
    %870 = arith.mulf %869, %868 : vector<8x32xf32>
    %871 = vector.extract_strided_slice %865 {offsets = [0, 32], sizes = [8, 32], strides = [1, 1]} : vector<8x128xf32> to vector<8x32xf32>
    %cst_374 = arith.constant 1.000000e+00 : f32
    %872 = vector.broadcast %cst_374 : f32 to vector<8x32xf32>
    %873 = arith.addf %871, %872 : vector<8x32xf32>
    %cst_375 = arith.constant 5.000000e-01 : f32
    %874 = vector.broadcast %cst_375 : f32 to vector<8x32xf32>
    %875 = arith.mulf %874, %873 : vector<8x32xf32>
    %876 = vector.extract_strided_slice %865 {offsets = [0, 64], sizes = [8, 32], strides = [1, 1]} : vector<8x128xf32> to vector<8x32xf32>
    %877 = vector.extract_strided_slice %865 {offsets = [0, 96], sizes = [8, 32], strides = [1, 1]} : vector<8x128xf32> to vector<8x32xf32>
    %cst_376 = arith.constant 1.000000e+00 : f32
    %878 = vector.broadcast %cst_376 : f32 to vector<8x32xf32>
    %879 = arith.addf %877, %878 : vector<8x32xf32>
    %cst_377 = arith.constant 5.000000e-01 : f32
    %880 = vector.broadcast %cst_377 : f32 to vector<8x32xf32>
    %881 = arith.mulf %880, %879 : vector<8x32xf32>
    %882 = arith.mulf %875, %853 : vector<8x32xf32>
    %883 = arith.mulf %870, %876 : vector<8x32xf32>
    %884 = arith.addf %882, %883 : vector<8x32xf32>
    %885 = math.tanh %884 : vector<8x32xf32>
    %886 = arith.mulf %881, %885 : vector<8x32xf32>
    %887 = arith.index_cast %c6_i32_368 : i32 to index
    %c0_378 = arith.constant 0 : index
    %c0_379 = arith.constant 0 : index
    %888 = vector.load %arg20[%887, %c0_378, %c0_379] : memref<10x8x32xf32, #tpu.memory_space<vmem>>, vector<1x8x32xf32>
    %889 = vector.shape_cast %888 : vector<1x8x32xf32> to vector<8x32xf32>
    %890 = vector.shape_cast %886 : vector<8x32xf32> to vector<1x8x32xf32>
    tpu.vector_store %arg20[%887, %c0_378, %c0_379], %890 {strides = array<i32>} : memref<10x8x32xf32, #tpu.memory_space<vmem>>, vector<1x8x32xf32>,
    %c7_i32_380 = arith.constant 7 : i32
    %891 = arith.index_cast %c7_i32_380 : i32 to index
    %c0_381 = arith.constant 0 : index
    %c0_382 = arith.constant 0 : index
    %892 = vector.load %arg21[%891, %c0_381, %c0_382] : memref<10x8x128xf32, #tpu.memory_space<vmem>>, vector<1x8x128xf32>
    %893 = vector.shape_cast %892 : vector<1x8x128xf32> to vector<8x128xf32>
    %cst_383 = arith.constant dense<0.000000e+00> : vector<8x128xf32>
    %894 = tpu.matmul %886, %669, %cst_383 {dimension_numbers = #tpu.dot_dimension_numbers<[1], [0], [0], [1], [0, 0, 1, 1], [], []>} : vector<8x32xf32>, vector<32x128xf32>, vector<8x128xf32> -> vector<8x128xf32>
    %895 = arith.addf %893, %894 : vector<8x128xf32>
    %896 = math.tanh %895 : vector<8x128xf32>
    %897 = vector.extract_strided_slice %896 {offsets = [0, 0], sizes = [8, 32], strides = [1, 1]} : vector<8x128xf32> to vector<8x32xf32>
    %cst_384 = arith.constant 1.000000e+00 : f32
    %898 = vector.broadcast %cst_384 : f32 to vector<8x32xf32>
    %899 = arith.addf %897, %898 : vector<8x32xf32>
    %cst_385 = arith.constant 5.000000e-01 : f32
    %900 = vector.broadcast %cst_385 : f32 to vector<8x32xf32>
    %901 = arith.mulf %900, %899 : vector<8x32xf32>
    %902 = vector.extract_strided_slice %896 {offsets = [0, 32], sizes = [8, 32], strides = [1, 1]} : vector<8x128xf32> to vector<8x32xf32>
    %cst_386 = arith.constant 1.000000e+00 : f32
    %903 = vector.broadcast %cst_386 : f32 to vector<8x32xf32>
    %904 = arith.addf %902, %903 : vector<8x32xf32>
    %cst_387 = arith.constant 5.000000e-01 : f32
    %905 = vector.broadcast %cst_387 : f32 to vector<8x32xf32>
    %906 = arith.mulf %905, %904 : vector<8x32xf32>
    %907 = vector.extract_strided_slice %896 {offsets = [0, 64], sizes = [8, 32], strides = [1, 1]} : vector<8x128xf32> to vector<8x32xf32>
    %908 = vector.extract_strided_slice %896 {offsets = [0, 96], sizes = [8, 32], strides = [1, 1]} : vector<8x128xf32> to vector<8x32xf32>
    %cst_388 = arith.constant 1.000000e+00 : f32
    %909 = vector.broadcast %cst_388 : f32 to vector<8x32xf32>
    %910 = arith.addf %908, %909 : vector<8x32xf32>
    %cst_389 = arith.constant 5.000000e-01 : f32
    %911 = vector.broadcast %cst_389 : f32 to vector<8x32xf32>
    %912 = arith.mulf %911, %910 : vector<8x32xf32>
    %913 = arith.mulf %906, %884 : vector<8x32xf32>
    %914 = arith.mulf %901, %907 : vector<8x32xf32>
    %915 = arith.addf %913, %914 : vector<8x32xf32>
    %916 = math.tanh %915 : vector<8x32xf32>
    %917 = arith.mulf %912, %916 : vector<8x32xf32>
    %918 = arith.index_cast %c7_i32_380 : i32 to index
    %c0_390 = arith.constant 0 : index
    %c0_391 = arith.constant 0 : index
    %919 = vector.load %arg20[%918, %c0_390, %c0_391] : memref<10x8x32xf32, #tpu.memory_space<vmem>>, vector<1x8x32xf32>
    %920 = vector.shape_cast %919 : vector<1x8x32xf32> to vector<8x32xf32>
    %921 = vector.shape_cast %917 : vector<8x32xf32> to vector<1x8x32xf32>
    tpu.vector_store %arg20[%918, %c0_390, %c0_391], %921 {strides = array<i32>} : memref<10x8x32xf32, #tpu.memory_space<vmem>>, vector<1x8x32xf32>,
    %c8_i32_392 = arith.constant 8 : i32
    %922 = arith.index_cast %c8_i32_392 : i32 to index
    %c0_393 = arith.constant 0 : index
    %c0_394 = arith.constant 0 : index
    %923 = vector.load %arg21[%922, %c0_393, %c0_394] : memref<10x8x128xf32, #tpu.memory_space<vmem>>, vector<1x8x128xf32>
    %924 = vector.shape_cast %923 : vector<1x8x128xf32> to vector<8x128xf32>
    %cst_395 = arith.constant dense<0.000000e+00> : vector<8x128xf32>
    %925 = tpu.matmul %917, %669, %cst_395 {dimension_numbers = #tpu.dot_dimension_numbers<[1], [0], [0], [1], [0, 0, 1, 1], [], []>} : vector<8x32xf32>, vector<32x128xf32>, vector<8x128xf32> -> vector<8x128xf32>
    %926 = arith.addf %924, %925 : vector<8x128xf32>
    %927 = math.tanh %926 : vector<8x128xf32>
    %928 = vector.extract_strided_slice %927 {offsets = [0, 0], sizes = [8, 32], strides = [1, 1]} : vector<8x128xf32> to vector<8x32xf32>
    %cst_396 = arith.constant 1.000000e+00 : f32
    %929 = vector.broadcast %cst_396 : f32 to vector<8x32xf32>
    %930 = arith.addf %928, %929 : vector<8x32xf32>
    %cst_397 = arith.constant 5.000000e-01 : f32
    %931 = vector.broadcast %cst_397 : f32 to vector<8x32xf32>
    %932 = arith.mulf %931, %930 : vector<8x32xf32>
    %933 = vector.extract_strided_slice %927 {offsets = [0, 32], sizes = [8, 32], strides = [1, 1]} : vector<8x128xf32> to vector<8x32xf32>
    %cst_398 = arith.constant 1.000000e+00 : f32
    %934 = vector.broadcast %cst_398 : f32 to vector<8x32xf32>
    %935 = arith.addf %933, %934 : vector<8x32xf32>
    %cst_399 = arith.constant 5.000000e-01 : f32
    %936 = vector.broadcast %cst_399 : f32 to vector<8x32xf32>
    %937 = arith.mulf %936, %935 : vector<8x32xf32>
    %938 = vector.extract_strided_slice %927 {offsets = [0, 64], sizes = [8, 32], strides = [1, 1]} : vector<8x128xf32> to vector<8x32xf32>
    %939 = vector.extract_strided_slice %927 {offsets = [0, 96], sizes = [8, 32], strides = [1, 1]} : vector<8x128xf32> to vector<8x32xf32>
    %cst_400 = arith.constant 1.000000e+00 : f32
    %940 = vector.broadcast %cst_400 : f32 to vector<8x32xf32>
    %941 = arith.addf %939, %940 : vector<8x32xf32>
    %cst_401 = arith.constant 5.000000e-01 : f32
    %942 = vector.broadcast %cst_401 : f32 to vector<8x32xf32>
    %943 = arith.mulf %942, %941 : vector<8x32xf32>
    %944 = arith.mulf %937, %915 : vector<8x32xf32>
    %945 = arith.mulf %932, %938 : vector<8x32xf32>
    %946 = arith.addf %944, %945 : vector<8x32xf32>
    %947 = math.tanh %946 : vector<8x32xf32>
    %948 = arith.mulf %943, %947 : vector<8x32xf32>
    %949 = arith.index_cast %c8_i32_392 : i32 to index
    %c0_402 = arith.constant 0 : index
    %c0_403 = arith.constant 0 : index
    %950 = vector.load %arg20[%949, %c0_402, %c0_403] : memref<10x8x32xf32, #tpu.memory_space<vmem>>, vector<1x8x32xf32>
    %951 = vector.shape_cast %950 : vector<1x8x32xf32> to vector<8x32xf32>
    %952 = vector.shape_cast %948 : vector<8x32xf32> to vector<1x8x32xf32>
    tpu.vector_store %arg20[%949, %c0_402, %c0_403], %952 {strides = array<i32>} : memref<10x8x32xf32, #tpu.memory_space<vmem>>, vector<1x8x32xf32>,
    %c9_i32_404 = arith.constant 9 : i32
    %953 = arith.index_cast %c9_i32_404 : i32 to index
    %c0_405 = arith.constant 0 : index
    %c0_406 = arith.constant 0 : index
    %954 = vector.load %arg21[%953, %c0_405, %c0_406] : memref<10x8x128xf32, #tpu.memory_space<vmem>>, vector<1x8x128xf32>
    %955 = vector.shape_cast %954 : vector<1x8x128xf32> to vector<8x128xf32>
    %cst_407 = arith.constant dense<0.000000e+00> : vector<8x128xf32>
    %956 = tpu.matmul %948, %669, %cst_407 {dimension_numbers = #tpu.dot_dimension_numbers<[1], [0], [0], [1], [0, 0, 1, 1], [], []>} : vector<8x32xf32>, vector<32x128xf32>, vector<8x128xf32> -> vector<8x128xf32>
    %957 = arith.addf %955, %956 : vector<8x128xf32>
    %958 = math.tanh %957 : vector<8x128xf32>
    %959 = vector.extract_strided_slice %958 {offsets = [0, 0], sizes = [8, 32], strides = [1, 1]} : vector<8x128xf32> to vector<8x32xf32>
    %cst_408 = arith.constant 1.000000e+00 : f32
    %960 = vector.broadcast %cst_408 : f32 to vector<8x32xf32>
    %961 = arith.addf %959, %960 : vector<8x32xf32>
    %cst_409 = arith.constant 5.000000e-01 : f32
    %962 = vector.broadcast %cst_409 : f32 to vector<8x32xf32>
    %963 = arith.mulf %962, %961 : vector<8x32xf32>
    %964 = vector.extract_strided_slice %958 {offsets = [0, 32], sizes = [8, 32], strides = [1, 1]} : vector<8x128xf32> to vector<8x32xf32>
    %cst_410 = arith.constant 1.000000e+00 : f32
    %965 = vector.broadcast %cst_410 : f32 to vector<8x32xf32>
    %966 = arith.addf %964, %965 : vector<8x32xf32>
    %cst_411 = arith.constant 5.000000e-01 : f32
    %967 = vector.broadcast %cst_411 : f32 to vector<8x32xf32>
    %968 = arith.mulf %967, %966 : vector<8x32xf32>
    %969 = vector.extract_strided_slice %958 {offsets = [0, 64], sizes = [8, 32], strides = [1, 1]} : vector<8x128xf32> to vector<8x32xf32>
    %970 = vector.extract_strided_slice %958 {offsets = [0, 96], sizes = [8, 32], strides = [1, 1]} : vector<8x128xf32> to vector<8x32xf32>
    %cst_412 = arith.constant 1.000000e+00 : f32
    %971 = vector.broadcast %cst_412 : f32 to vector<8x32xf32>
    %972 = arith.addf %970, %971 : vector<8x32xf32>
    %cst_413 = arith.constant 5.000000e-01 : f32
    %973 = vector.broadcast %cst_413 : f32 to vector<8x32xf32>
    %974 = arith.mulf %973, %972 : vector<8x32xf32>
    %975 = arith.mulf %968, %946 : vector<8x32xf32>
    %976 = arith.mulf %963, %969 : vector<8x32xf32>
    %977 = arith.addf %975, %976 : vector<8x32xf32>
    %978 = math.tanh %977 : vector<8x32xf32>
    %979 = arith.mulf %974, %978 : vector<8x32xf32>
    %980 = arith.index_cast %c9_i32_404 : i32 to index
    %c0_414 = arith.constant 0 : index
    %c0_415 = arith.constant 0 : index
    %981 = vector.load %arg20[%980, %c0_414, %c0_415] : memref<10x8x32xf32, #tpu.memory_space<vmem>>, vector<1x8x32xf32>
    %982 = vector.shape_cast %981 : vector<1x8x32xf32> to vector<8x32xf32>
    %983 = vector.shape_cast %979 : vector<8x32xf32> to vector<1x8x32xf32>
    tpu.vector_store %arg20[%980, %c0_414, %c0_415], %983 {strides = array<i32>} : memref<10x8x32xf32, #tpu.memory_space<vmem>>, vector<1x8x32xf32>,
    %c10_i32_416 = arith.constant 10 : i32
    %c2_417 = arith.constant 2 : index
    %c0_418 = arith.constant 0 : index
    %c0_419 = arith.constant 0 : index
    %984 = vector.load %arg18[%c2_417, %c0_418, %c0_419] : memref<3x8x32xf32, #tpu.memory_space<vmem>>, vector<1x8x32xf32>
    %985 = vector.shape_cast %984 : vector<1x8x32xf32> to vector<8x32xf32>
    %986 = vector.shape_cast %979 : vector<8x32xf32> to vector<1x8x32xf32>
    tpu.vector_store %arg18[%c2_417, %c0_418, %c0_419], %986 {strides = array<i32>} : memref<3x8x32xf32, #tpu.memory_space<vmem>>, vector<1x8x32xf32>,
    %c2_420 = arith.constant 2 : index
    %c0_421 = arith.constant 0 : index
    %c0_422 = arith.constant 0 : index
    %987 = vector.load %arg19[%c2_420, %c0_421, %c0_422] : memref<3x8x32xf32, #tpu.memory_space<vmem>>, vector<1x8x32xf32>
    %988 = vector.shape_cast %987 : vector<1x8x32xf32> to vector<8x32xf32>
    %989 = vector.shape_cast %977 : vector<8x32xf32> to vector<1x8x32xf32>
    tpu.vector_store %arg19[%c2_420, %c0_421, %c0_422], %989 {strides = array<i32>} : memref<3x8x32xf32, #tpu.memory_space<vmem>>, vector<1x8x32xf32>,
    %c0_423 = arith.constant 0 : index
    %c0_424 = arith.constant 0 : index
    %c0_425 = arith.constant 0 : index
    %990 = vector.load %arg20[%c0_423, %c0_424, %c0_425] : memref<10x8x32xf32, #tpu.memory_space<vmem>>, vector<10x8x32xf32>
    %991 = vector.shape_cast %990 : vector<10x8x32xf32> to vector<80x32xf32>
    %c0_426 = arith.constant 0 : index
    %c0_427 = arith.constant 0 : index
    %992 = vector.load %arg13[%c0_426, %c0_427] : memref<32x32xf32, #tpu.memory_space<vmem>>, vector<32x32xf32>
    %cst_428 = arith.constant dense<0.000000e+00> : vector<80x32xf32>
    %993 = tpu.matmul %991, %992, %cst_428 {dimension_numbers = #tpu.dot_dimension_numbers<[1], [0], [0], [1], [0, 0, 1, 1], [], []>} : vector<80x32xf32>, vector<32x32xf32>, vector<80x32xf32> -> vector<80x32xf32>
    %c0_429 = arith.constant 0 : index
    %c0_430 = arith.constant 0 : index
    %994 = vector.load %arg14[%c0_429, %c0_430] : memref<1x32xf32, #tpu.memory_space<vmem>>, vector<1x32xf32>
    %995 = vector.broadcast %994 : vector<1x32xf32> to vector<80x32xf32>
    %996 = arith.addf %993, %995 : vector<80x32xf32>
    %997 = math.tanh %996 : vector<80x32xf32>
    %c0_431 = arith.constant 0 : index
    %c0_432 = arith.constant 0 : index
    %998 = vector.load %arg15[%c0_431, %c0_432] : memref<32x8xf32, #tpu.memory_space<vmem>>, vector<32x8xf32>
    %cst_433 = arith.constant dense<0.000000e+00> : vector<80x8xf32>
    %999 = tpu.matmul %997, %998, %cst_433 {dimension_numbers = #tpu.dot_dimension_numbers<[1], [0], [0], [1], [0, 0, 1, 1], [], []>} : vector<80x32xf32>, vector<32x8xf32>, vector<80x8xf32> -> vector<80x8xf32>
    %c0_434 = arith.constant 0 : index
    %c0_435 = arith.constant 0 : index
    %1000 = vector.load %arg16[%c0_434, %c0_435] : memref<1x8xf32, #tpu.memory_space<vmem>>, vector<1x8xf32>
    %1001 = vector.broadcast %1000 : vector<1x8xf32> to vector<80x8xf32>
    %1002 = arith.addf %999, %1001 : vector<80x8xf32>
    %1003 = vector.shape_cast %1002 : vector<80x8xf32> to vector<10x8x8xf32>
    %c0_436 = arith.constant 0 : index
    %c0_437 = arith.constant 0 : index
    %c0_438 = arith.constant 0 : index
    %1004 = vector.load %arg17[%c0_436, %c0_437, %c0_438] : memref<10x8x8xf32, #tpu.memory_space<vmem>>, vector<10x8x8xf32>
    tpu.vector_store %arg17[%c0_436, %c0_437, %c0_438], %1003 {strides = array<i32>} : memref<10x8x8xf32, #tpu.memory_space<vmem>>, vector<10x8x8xf32>,
    return
  }
  func.func @transform_0(%arg0: i32) -> (i32, i32, i32) {
    %c0_i32 = arith.constant 0 : i32
    %c0_i32_0 = arith.constant 0 : i32
    %c0_i32_1 = arith.constant 0 : i32
    return %c0_i32, %arg0, %c0_i32_0 : i32, i32, i32
  }
  func.func @transform_1(%arg0: i32) -> (i32, i32, i32) {
    %c0_i32 = arith.constant 0 : i32
    %c0_i32_0 = arith.constant 0 : i32
    %c0_i32_1 = arith.constant 0 : i32
    return %c0_i32, %arg0, %c0_i32_0 : i32, i32, i32
  }
  func.func @transform_2(%arg0: i32) -> (i32, i32, i32) {
    %c0_i32 = arith.constant 0 : i32
    %c0_i32_0 = arith.constant 0 : i32
    %c0_i32_1 = arith.constant 0 : i32
    return %c0_i32, %arg0, %c0_i32_0 : i32, i32, i32
  }
  func.func @transform_3(%arg0: i32) -> (i32, i32) {
    %c0_i32 = arith.constant 0 : i32
    %c0_i32_0 = arith.constant 0 : i32
    %c0_i32_1 = arith.constant 0 : i32
    return %c0_i32, %c0_i32_0 : i32, i32
  }
  func.func @transform_4(%arg0: i32) -> (i32, i32) {
    %c0_i32 = arith.constant 0 : i32
    %c0_i32_0 = arith.constant 0 : i32
    %c0_i32_1 = arith.constant 0 : i32
    return %c0_i32, %c0_i32_0 : i32, i32
  }
  func.func @transform_5(%arg0: i32) -> (i32, i32) {
    %c0_i32 = arith.constant 0 : i32
    %c0_i32_0 = arith.constant 0 : i32
    %c0_i32_1 = arith.constant 0 : i32
    return %c0_i32, %c0_i32_0 : i32, i32
  }
  func.func @transform_6(%arg0: i32) -> (i32, i32) {
    %c0_i32 = arith.constant 0 : i32
    %c0_i32_0 = arith.constant 0 : i32
    %c0_i32_1 = arith.constant 0 : i32
    return %c0_i32, %c0_i32_0 : i32, i32
  }
  func.func @transform_7(%arg0: i32) -> (i32, i32) {
    %c0_i32 = arith.constant 0 : i32
    %c0_i32_0 = arith.constant 0 : i32
    %c0_i32_1 = arith.constant 0 : i32
    return %c0_i32, %c0_i32_0 : i32, i32
  }
  func.func @transform_8(%arg0: i32) -> (i32, i32) {
    %c0_i32 = arith.constant 0 : i32
    %c0_i32_0 = arith.constant 0 : i32
    %c0_i32_1 = arith.constant 0 : i32
    return %c0_i32, %c0_i32_0 : i32, i32
  }
  func.func @transform_9(%arg0: i32) -> (i32, i32) {
    %c0_i32 = arith.constant 0 : i32
    %c0_i32_0 = arith.constant 0 : i32
    %c0_i32_1 = arith.constant 0 : i32
    return %c0_i32, %c0_i32_0 : i32, i32
  }
  func.func @transform_10(%arg0: i32) -> (i32, i32) {
    %c0_i32 = arith.constant 0 : i32
    %c0_i32_0 = arith.constant 0 : i32
    %c0_i32_1 = arith.constant 0 : i32
    return %c0_i32, %c0_i32_0 : i32, i32
  }
  func.func @transform_11(%arg0: i32) -> (i32, i32) {
    %c0_i32 = arith.constant 0 : i32
    %c0_i32_0 = arith.constant 0 : i32
    %c0_i32_1 = arith.constant 0 : i32
    return %c0_i32, %c0_i32_0 : i32, i32
  }
  func.func @transform_12(%arg0: i32) -> (i32, i32) {
    %c0_i32 = arith.constant 0 : i32
    %c0_i32_0 = arith.constant 0 : i32
    %c0_i32_1 = arith.constant 0 : i32
    return %c0_i32, %c0_i32_0 : i32, i32
  }
  func.func @transform_13(%arg0: i32) -> (i32, i32) {
    %c0_i32 = arith.constant 0 : i32
    %c0_i32_0 = arith.constant 0 : i32
    %c0_i32_1 = arith.constant 0 : i32
    return %c0_i32, %c0_i32_0 : i32, i32
  }
  func.func @transform_14(%arg0: i32) -> (i32, i32) {
    %c0_i32 = arith.constant 0 : i32
    %c0_i32_0 = arith.constant 0 : i32
    %c0_i32_1 = arith.constant 0 : i32
    return %c0_i32, %c0_i32_0 : i32, i32
  }
  func.func @transform_15(%arg0: i32) -> (i32, i32) {
    %c0_i32 = arith.constant 0 : i32
    %c0_i32_0 = arith.constant 0 : i32
    %c0_i32_1 = arith.constant 0 : i32
    return %c0_i32, %c0_i32_0 : i32, i32
  }
  func.func @transform_16(%arg0: i32) -> (i32, i32, i32) {
    %c0_i32 = arith.constant 0 : i32
    %c0_i32_0 = arith.constant 0 : i32
    %c0_i32_1 = arith.constant 0 : i32
    return %c0_i32, %arg0, %c0_i32_0 : i32, i32, i32
  }
  func.func @transform_17(%arg0: i32) -> (i32, i32, i32) {
    %c0_i32 = arith.constant 0 : i32
    %c0_i32_0 = arith.constant 0 : i32
    %c0_i32_1 = arith.constant 0 : i32
    return %c0_i32, %arg0, %c0_i32_0 : i32, i32, i32
  }
  func.func @transform_18(%arg0: i32) -> (i32, i32, i32) {
    %c0_i32 = arith.constant 0 : i32
    %c0_i32_0 = arith.constant 0 : i32
    %c0_i32_1 = arith.constant 0 : i32
    return %c0_i32, %arg0, %c0_i32_0 : i32, i32, i32
  }
}

</mosaic_0001>

<llo_original>
// kernel: tpu_custom_call.1
$region0: #{tpu_custom_call.1}
  #allocation0 [shape = 'u32[]', space=smem, size = 0x4, offset = 0x4, fixed_abs, tag = 'smem constant byte address 0x4 - core index']
  #allocation1 [shape = 'u32[72,128]{1,0:T(1,128)}', space=vmem, size = 0x9000, scoped, tag = 'internal scratch']
  #allocation2 [shape = 'f32[10,8,32]{2,1,0:T(8,128)}', space=vmem, size = 0xa000, scoped, tag = 'scratch operand']
  #allocation3 [shape = 'f32[10,8,128]{2,1,0:T(8,128)}', space=vmem, size = 0xa000, scoped, tag = 'scratch operand']
  %s0 = inlined_call_operand.hbm [shape: f32[10,8,16], index: 0, kind: input, shape index: {}]
  %s1 = inlined_call_operand.hbm [shape: f32[3,8,32], index: 1, kind: input, shape index: {}]
  %s2 = inlined_call_operand.hbm [shape: f32[3,8,32], index: 2, kind: input, shape index: {}]
  %s3 = inlined_call_operand.hbm [shape: f32[16,128], index: 3, kind: input, shape index: {}]
  %s4 = inlined_call_operand.vmem [shape: f32[32,128], index: 4, kind: input, shape index: {}]
  %s5 = inlined_call_operand.vmem [shape: f32[1,128], index: 5, kind: input, shape index: {}]
  %s6 = inlined_call_operand.hbm [shape: f32[32,128], index: 6, kind: input, shape index: {}]
  %s7 = inlined_call_operand.hbm [shape: f32[32,128], index: 7, kind: input, shape index: {}]
  %s8 = inlined_call_operand.vmem [shape: f32[1,128], index: 8, kind: input, shape index: {}]
  %s9 = inlined_call_operand.hbm [shape: f32[32,128], index: 9, kind: input, shape index: {}]
  %s10 = inlined_call_operand.hbm [shape: f32[32,128], index: 10, kind: input, shape index: {}]
  %s11 = inlined_call_operand.vmem [shape: f32[1,128], index: 11, kind: input, shape index: {}]
  %s12 = inlined_call_operand.hbm [shape: f32[32,32], index: 12, kind: input, shape index: {}]
  %s13 = inlined_call_operand.vmem [shape: f32[1,32], index: 13, kind: input, shape index: {}]
  %s14 = inlined_call_operand.vmem [shape: f32[32,8], index: 14, kind: input, shape index: {}]
  %s15 = inlined_call_operand.vmem [shape: f32[1,8], index: 15, kind: input, shape index: {}]
  %s16 = inlined_call_operand.vmem [shape: f32[10,8,8], index: 16, kind: output, shape index: {0}]
  %s17 = inlined_call_operand.hbm [shape: f32[3,8,32], index: 17, kind: output, shape index: {1}]
  %s18 = inlined_call_operand.hbm [shape: f32[3,8,32], index: 18, kind: output, shape index: {2}]
  %19 = xla_tuple %s16, %s17, %s18
  %s20 = sld [smem:[#allocation0]]
  $region126: #{tpu_custom_call.1} parent=0
    _
  %s22 = ssub.s32 1, %s20
  %s23 = scalar_select 0, %s22, %s20
  $region1: #{tpu_custom_call.1} parent=0
    #allocation4 [shape = 'u8[40960]{0}', space=vmem, size = 0xa000, scoped, tag = 'input window, operand 0, single buffered']
    #allocation5 [shape = 's32[1]{0}', space=sflag, size = 0x4, scoped, tag = 'scoped memory for tpu_custom_call.1']
    #allocation6 [shape = 's32[1]{0}', space=sflag, size = 0x4, scoped, tag = 'scoped memory for tpu_custom_call.1']
    #allocation7 [shape = 'u8[12288]{0}', space=vmem, size = 0x3000, scoped, tag = 'input window, operand 1, single buffered']
    #allocation8 [shape = 's32[1]{0}', space=sflag, size = 0x4, scoped, tag = 'scoped memory for tpu_custom_call.1']
    #allocation9 [shape = 'u8[12288]{0}', space=vmem, size = 0x3000, scoped, tag = 'input window, operand 2, single buffered']
    #allocation10 [shape = 'u8[8192]{0}', space=vmem, size = 0x2000, scoped, tag = 'input window, operand 3, single buffered']
    #allocation11 [shape = 's32[1]{0}', space=sflag, size = 0x4, scoped, tag = 'scoped memory for tpu_custom_call.1']
    #allocation12 [shape = 'u8[16384]{0}', space=vmem, size = 0x4000, scoped, tag = 'input window, operand 6, single buffered']
    #allocation13 [shape = 'u8[16384]{0}', space=vmem, size = 0x4000, scoped, tag = 'input window, operand 7, single buffered']
    #allocation14 [shape = 's32[1]{0}', space=sflag, size = 0x4, scoped, tag = 'scoped memory for tpu_custom_call.1']
    #allocation15 [shape = 'u8[16384]{0}', space=vmem, size = 0x4000, scoped, tag = 'input window, operand 9, single buffered']
    #allocation16 [shape = 'u8[16384]{0}', space=vmem, size = 0x4000, scoped, tag = 'input window, operand 10, single buffered']
    #allocation17 [shape = 's32[1]{0}', space=sflag, size = 0x4, scoped, tag = 'scoped memory for tpu_custom_call.1']
    #allocation18 [shape = 'u8[16384]{0}', space=vmem, size = 0x4000, scoped, tag = 'input window, operand 12, single buffered']
    #allocation19 [shape = 'u8[12288]{0}', space=vmem, size = 0x3000, scoped, tag = 'output window, operand 1, single buffered']
    #allocation20 [shape = 'u8[12288]{0}', space=vmem, size = 0x3000, scoped, tag = 'output window, operand 2, single buffered']
    #allocation21 [shape = 's32[1]{0}', space=sflag, size = 0x4, scoped, tag = 'scoped memory for tpu_custom_call.1']
    %24 = vsyncpa [#allocation5], 0
    %25 = vsyncpa [#allocation8], 0
    %26 = vsyncpa [#allocation11], 0
    %27 = vsyncpa [#allocation14], 0
    %28 = vsyncpa [#allocation17], 0
    %29 = vsyncpa [#allocation6], 0
    %30 = vsyncpa [#allocation21], 0
    // Predicated region
    $region2: #{tpu_custom_call.1} parent=1 // pred_check
      _
    $region3: #{tpu_custom_call.1} parent=1 // pred_check_branch
      %32 = sbr.rel (0) target = $region5
    $region4: #{tpu_custom_call.1} parent=1 // pred_region
      %34 = vsyncadd [#allocation5], 0
      %s35 = sshll.u32 %s0, 4
      %s36 = int_to_ptr.hbm [resolvable:$true] %s35
      %s37 = sshll.u32 [#allocation4], 4
      %s38 = int_to_ptr.vmem [resolvable:$true] %s37
      %43 = dma.hbm_to_vmem [thread:$0]  %s36, 1280, %s38, [#allocation5], 128, 128, 8
    $region5: #{tpu_custom_call.1} parent=1 // pred_fallthru
      _
    // Predicated region
    $region6: #{tpu_custom_call.1} parent=1 // pred_check
      _
    $region7: #{tpu_custom_call.1} parent=1 // pred_check_branch
      %45 = sbr.rel (0) target = $region9
    $region8: #{tpu_custom_call.1} parent=1 // pred_region
      %47 = vsyncadd [#allocation8], 0
      %s48 = sshll.u32 %s1, 4
      %s49 = int_to_ptr.hbm [resolvable:$true] %s48
      %s50 = sshll.u32 [#allocation7], 4
      %s51 = int_to_ptr.vmem [resolvable:$true] %s50
      %56 = dma.hbm_to_vmem [thread:$0]  %s49, 384, %s51, [#allocation8], 128, 128, 8
    $region9: #{tpu_custom_call.1} parent=1 // pred_fallthru
      _
    // Predicated region
    $region10: #{tpu_custom_call.1} parent=1 // pred_check
      _
    $region11: #{tpu_custom_call.1} parent=1 // pred_check_branch
      %58 = sbr.rel (0) target = $region13
    $region12: #{tpu_custom_call.1} parent=1 // pred_region
      %60 = vsyncadd [#allocation8], 0
      %s61 = sshll.u32 %s2, 4
      %s62 = int_to_ptr.hbm [resolvable:$true] %s61
      %s63 = sshll.u32 [#allocation9], 4
      %s64 = int_to_ptr.vmem [resolvable:$true] %s63
      %69 = dma.hbm_to_vmem [thread:$0]  %s62, 384, %s64, [#allocation8], 128, 128, 8
    $region13: #{tpu_custom_call.1} parent=1 // pred_fallthru
      _
    // Predicated region
    $region14: #{tpu_custom_call.1} parent=1 // pred_check
      _
    $region15: #{tpu_custom_call.1} parent=1 // pred_check_branch
      %71 = sbr.rel (0) target = $region17
    $region16: #{tpu_custom_call.1} parent=1 // pred_region
      %73 = vsyncadd [#allocation11], 0
      %s74 = sshll.u32 %s3, 4
      %s75 = int_to_ptr.hbm [resolvable:$true] %s74
      %s76 = sshll.u32 [#allocation10], 4
      %s77 = int_to_ptr.vmem [resolvable:$true] %s76
      %82 = dma.hbm_to_vmem [thread:$0]  %s75, 256, %s77, [#allocation11], 128, 128, 8
    $region17: #{tpu_custom_call.1} parent=1 // pred_fallthru
      _
    // Predicated region
    $region18: #{tpu_custom_call.1} parent=1 // pred_check
      _
    $region19: #{tpu_custom_call.1} parent=1 // pred_check_branch
      %84 = sbr.rel (0) target = $region21
    $region20: #{tpu_custom_call.1} parent=1 // pred_region
      _
    $region21: #{tpu_custom_call.1} parent=1 // pred_fallthru
      _
    // Predicated region
    $region22: #{tpu_custom_call.1} parent=1 // pred_check
      _
    $region23: #{tpu_custom_call.1} parent=1 // pred_check_branch
      %86 = sbr.rel (0) target = $region25
    $region24: #{tpu_custom_call.1} parent=1 // pred_region
      _
    $region25: #{tpu_custom_call.1} parent=1 // pred_fallthru
      _
    // Predicated region
    $region26: #{tpu_custom_call.1} parent=1 // pred_check
      _
    $region27: #{tpu_custom_call.1} parent=1 // pred_check_branch
      %88 = sbr.rel (0) target = $region29
    $region28: #{tpu_custom_call.1} parent=1 // pred_region
      %90 = vsyncadd [#allocation11], 0
      %s91 = sshll.u32 %s6, 4
      %s92 = int_to_ptr.hbm [resolvable:$true] %s91
      %s93 = sshll.u32 [#allocation12], 4
      %s94 = int_to_ptr.vmem [resolvable:$true] %s93
      %99 = dma.hbm_to_vmem [thread:$0]  %s92, 512, %s94, [#allocation11], 128, 128, 8
    $region29: #{tpu_custom_call.1} parent=1 // pred_fallthru
      _
    // Predicated region
    $region30: #{tpu_custom_call.1} parent=1 // pred_check
      _
    $region31: #{tpu_custom_call.1} parent=1 // pred_check_branch
      %101 = sbr.rel (0) target = $region33
    $region32: #{tpu_custom_call.1} parent=1 // pred_region
      %103 = vsyncadd [#allocation14], 0
      %s104 = sshll.u32 %s7, 4
      %s105 = int_to_ptr.hbm [resolvable:$true] %s104
      %s106 = sshll.u32 [#allocation13], 4
      %s107 = int_to_ptr.vmem [resolvable:$true] %s106
      %112 = dma.hbm_to_vmem [thread:$0]  %s105, 512, %s107, [#allocation14], 128, 128, 8
    $region33: #{tpu_custom_call.1} parent=1 // pred_fallthru
      _
    // Predicated region
    $region34: #{tpu_custom_call.1} parent=1 // pred_check
      _
    $region35: #{tpu_custom_call.1} parent=1 // pred_check_branch
      %114 = sbr.rel (0) target = $region37
    $region36: #{tpu_custom_call.1} parent=1 // pred_region
      _
    $region37: #{tpu_custom_call.1} parent=1 // pred_fallthru
      _
    // Predicated region
    $region38: #{tpu_custom_call.1} parent=1 // pred_check
      _
    $region39: #{tpu_custom_call.1} parent=1 // pred_check_branch
      %116 = sbr.rel (0) target = $region41
    $region40: #{tpu_custom_call.1} parent=1 // pred_region
      %118 = vsyncadd [#allocation14], 0
      %s119 = sshll.u32 %s9, 4
      %s120 = int_to_ptr.hbm [resolvable:$true] %s119
      %s121 = sshll.u32 [#allocation15], 4
      %s122 = int_to_ptr.vmem [resolvable:$true] %s121
      %127 = dma.hbm_to_vmem [thread:$0]  %s120, 512, %s122, [#allocation14], 128, 128, 8
    $region41: #{tpu_custom_call.1} parent=1 // pred_fallthru
      _
    // Predicated region
    $region42: #{tpu_custom_call.1} parent=1 // pred_check
      _
    $region43: #{tpu_custom_call.1} parent=1 // pred_check_branch
      %129 = sbr.rel (0) target = $region45
    $region44: #{tpu_custom_call.1} parent=1 // pred_region
      %131 = vsyncadd [#allocation17], 0
      %s132 = sshll.u32 %s10, 4
      %s133 = int_to_ptr.hbm [resolvable:$true] %s132
      %s134 = sshll.u32 [#allocation16], 4
      %s135 = int_to_ptr.vmem [resolvable:$true] %s134
      %140 = dma.hbm_to_vmem [thread:$0]  %s133, 512, %s135, [#allocation17], 128, 128, 8
    $region45: #{tpu_custom_call.1} parent=1 // pred_fallthru
      _
    // Predicated region
    $region46: #{tpu_custom_call.1} parent=1 // pred_check
      _
    $region47: #{tpu_custom_call.1} parent=1 // pred_check_branch
      %142 = sbr.rel (0) target = $region49
    $region48: #{tpu_custom_call.1} parent=1 // pred_region
      _
    $region49: #{tpu_custom_call.1} parent=1 // pred_fallthru
      _
    // Predicated region
    $region50: #{tpu_custom_call.1} parent=1 // pred_check
      _
    $region51: #{tpu_custom_call.1} parent=1 // pred_check_branch
      %144 = sbr.rel (0) target = $region53
    $region52: #{tpu_custom_call.1} parent=1 // pred_region
      %146 = vsyncadd [#allocation17], 0
      %s147 = sshll.u32 %s12, 4
      %s148 = int_to_ptr.hbm [resolvable:$true] %s147
      %s149 = sshll.u32 [#allocation18], 4
      %s150 = int_to_ptr.vmem [resolvable:$true] %s149
      %155 = dma.hbm_to_vmem [thread:$0]  %s148, 512, %s150, [#allocation17], 128, 128, 8
    $region53: #{tpu_custom_call.1} parent=1 // pred_fallthru
      _
    // Predicated region
    $region54: #{tpu_custom_call.1} parent=1 // pred_check
      _
    $region55: #{tpu_custom_call.1} parent=1 // pred_check_branch
      %157 = sbr.rel (0) target = $region57
    $region56: #{tpu_custom_call.1} parent=1 // pred_region
      _
    $region57: #{tpu_custom_call.1} parent=1 // pred_fallthru
      _
    // Predicated region
    $region58: #{tpu_custom_call.1} parent=1 // pred_check
      _
    $region59: #{tpu_custom_call.1} parent=1 // pred_check_branch
      %159 = sbr.rel (0) target = $region61
    $region60: #{tpu_custom_call.1} parent=1 // pred_region
      _
    $region61: #{tpu_custom_call.1} parent=1 // pred_fallthru
      _
    // Predicated region
    $region62: #{tpu_custom_call.1} parent=1 // pred_check
      _
    $region63: #{tpu_custom_call.1} parent=1 // pred_check_branch
      %161 = sbr.rel (0) target = $region65
    $region64: #{tpu_custom_call.1} parent=1 // pred_region
      _
    $region65: #{tpu_custom_call.1} parent=1 // pred_fallthru
      _
    // Predicated region
    $region66: #{tpu_custom_call.1} parent=1 // pred_check
      _
    $region67: #{tpu_custom_call.1} parent=1 // pred_check_branch
      %163 = sbr.rel (0) target = $region69
    $region68: #{tpu_custom_call.1} parent=1 // pred_region
      %165 = dma.done [#allocation5], 1280
    $region69: #{tpu_custom_call.1} parent=1 // pred_fallthru
      _
    // Predicated region
    $region70: #{tpu_custom_call.1} parent=1 // pred_check
      _
    $region71: #{tpu_custom_call.1} parent=1 // pred_check_branch
      %167 = sbr.rel (0) target = $region73
    $region72: #{tpu_custom_call.1} parent=1 // pred_region
      %169 = dma.done [#allocation8], 384
    $region73: #{tpu_custom_call.1} parent=1 // pred_fallthru
      _
    // Predicated region
    $region74: #{tpu_custom_call.1} parent=1 // pred_check
      _
    $region75: #{tpu_custom_call.1} parent=1 // pred_check_branch
      %171 = sbr.rel (0) target = $region77
    $region76: #{tpu_custom_call.1} parent=1 // pred_region
      %173 = dma.done [#allocation8], 384
    $region77: #{tpu_custom_call.1} parent=1 // pred_fallthru
      _
    // Predicated region
    $region78: #{tpu_custom_call.1} parent=1 // pred_check
      _
    $region79: #{tpu_custom_call.1} parent=1 // pred_check_branch
      %175 = sbr.rel (0) target = $region81
    $region80: #{tpu_custom_call.1} parent=1 // pred_region
      %177 = dma.done [#allocation11], 256
    $region81: #{tpu_custom_call.1} parent=1 // pred_fallthru
      _
    // Predicated region
    $region82: #{tpu_custom_call.1} parent=1 // pred_check
      _
    $region83: #{tpu_custom_call.1} parent=1 // pred_check_branch
      %179 = sbr.rel (0) target = $region85
    $region84: #{tpu_custom_call.1} parent=1 // pred_region
      %181 = dma.done [#allocation11], 512
    $region85: #{tpu_custom_call.1} parent=1 // pred_fallthru
      _
    // Predicated region
    $region86: #{tpu_custom_call.1} parent=1 // pred_check
      _
    $region87: #{tpu_custom_call.1} parent=1 // pred_check_branch
      %183 = sbr.rel (0) target = $region89
    $region88: #{tpu_custom_call.1} parent=1 // pred_region
      %185 = dma.done [#allocation14], 512
    $region89: #{tpu_custom_call.1} parent=1 // pred_fallthru
      _
    // Predicated region
    $region90: #{tpu_custom_call.1} parent=1 // pred_check
      _
    $region91: #{tpu_custom_call.1} parent=1 // pred_check_branch
      %187 = sbr.rel (0) target = $region93
    $region92: #{tpu_custom_call.1} parent=1 // pred_region
      %189 = dma.done [#allocation14], 512
    $region93: #{tpu_custom_call.1} parent=1 // pred_fallthru
      _
    // Predicated region
    $region94: #{tpu_custom_call.1} parent=1 // pred_check
      _
    $region95: #{tpu_custom_call.1} parent=1 // pred_check_branch
      %191 = sbr.rel (0) target = $region97
    $region96: #{tpu_custom_call.1} parent=1 // pred_region
      %193 = dma.done [#allocation17], 512
    $region97: #{tpu_custom_call.1} parent=1 // pred_fallthru
      _
    // Predicated region
    $region98: #{tpu_custom_call.1} parent=1 // pred_check
      _
    $region99: #{tpu_custom_call.1} parent=1 // pred_check_branch
      %195 = sbr.rel (0) target = $region101
    $region100: #{tpu_custom_call.1} parent=1 // pred_region
      %197 = dma.done [#allocation17], 512
    $region101: #{tpu_custom_call.1} parent=1 // pred_fallthru
      _
    %v198 = vld [vmem:[#allocation4] sm:$0xff]
    %v199 = vld [vmem:[#allocation4 + $0x8] sm:$0xff]
    %v200 = vld [vmem:[#allocation4 + $0x10] sm:$0xff]
    %v201 = vld [vmem:[#allocation4 + $0x18] sm:$0xff]
    %v202 = vld [vmem:[#allocation4 + $0x20] sm:$0xff]
    %v203 = vld [vmem:[#allocation4 + $0x28] sm:$0xff]
    %v204 = vld [vmem:[#allocation4 + $0x30] sm:$0xff]
    %v205 = vld [vmem:[#allocation4 + $0x38] sm:$0xff]
    %v206 = vld [vmem:[#allocation4 + $0x40] sm:$0xff]
    %v207 = vld [vmem:[#allocation4 + $0x48] sm:$0xff]
    %v208 = vld [vmem:[#allocation10] sm:$0xff]
    %v209 = vld [vmem:[#allocation10 + $0x8] sm:$0xff]
    %v210 = vld [vmem:[%s5] sm:$0x1]
    %v212 = vperm.slane %v210, 0
    %vm214 = vcmask 130048
    %v216 = vsel %vm214, %v198, 0
    %v219 = vsel %vm214, %v199, 0
    %v222 = vsel %vm214, %v200, 0
    %v225 = vsel %vm214, %v201, 0
    %v228 = vsel %vm214, %v202, 0
    %v231 = vsel %vm214, %v203, 0
    %v234 = vsel %vm214, %v204, 0
    %v237 = vsel %vm214, %v205, 0
    %v240 = vsel %vm214, %v206, 0
    %v243 = vsel %vm214, %v207, 0
    %245 = vmatpush.msra.mxu0 0.0
    %246 = vmatpush.msra.mxu0 0.0
    %247 = vmatpush.msra.mxu0 0.0
    %248 = vmatpush.msra.mxu0 0.0
    %249 = vmatpush.msra.mxu0 0.0
    %250 = vmatpush.msra.mxu0 0.0
    %251 = vmatpush.msra.mxu0 0.0
    %252 = vmatpush.msra.mxu0 0.0
    %253 = vmatpush.msra.mxu0 0.0
    %254 = vmatpush.msra.mxu0 0.0
    %255 = vmatpush.msra.mxu0 0.0
    %256 = vmatpush.msra.mxu0 0.0
    %257 = vmatpush.msra.mxu0 0.0
    %258 = vmatpush.msra.mxu0 0.0
    %259 = vmatpush.msra.mxu0 %v209
    %260 = vmatpush.msra.mxu0 %v208
    %261 = vmatmul.f32.gmra.mxu0 %v216
    %v262 = vpop.f32.mrf.mxu0
    %v263 = vadd.f32 %v212, %v262
    %264 = vmatmul.f32.gmra.mxu0 %v219
    %v265 = vpop.f32.mrf.mxu0
    %v266 = vadd.f32 %v212, %v265
    %267 = vmatmul.f32.gmra.mxu0 %v222
    %v268 = vpop.f32.mrf.mxu0
    %v269 = vadd.f32 %v212, %v268
    %270 = vmatmul.f32.gmra.mxu0 %v225
    %v271 = vpop.f32.mrf.mxu0
    %v272 = vadd.f32 %v212, %v271
    %273 = vmatmul.f32.gmra.mxu0 %v228
    %v274 = vpop.f32.mrf.mxu0
    %v275 = vadd.f32 %v212, %v274
    %276 = vmatmul.f32.gmra.mxu0 %v231
    %v277 = vpop.f32.mrf.mxu0
    %v278 = vadd.f32 %v212, %v277
    %279 = vmatmul.f32.gmra.mxu0 %v234
    %v280 = vpop.f32.mrf.mxu0
    %v281 = vadd.f32 %v212, %v280
    %282 = vmatmul.f32.gmra.mxu0 %v237
    %v283 = vpop.f32.mrf.mxu0
    %v284 = vadd.f32 %v212, %v283
    %285 = vmatmul.f32.gmra.mxu0 %v240
    %v286 = vpop.f32.mrf.mxu0
    %v287 = vadd.f32 %v212, %v286
    %288 = vmatmul.f32.gmra.mxu0 %v243
    %v289 = vpop.f32.mrf.mxu0
    %v290 = vadd.f32 %v212, %v289
    %291 = vdwg.mxu0
    %292 = vst [vmem:[#allocation3] sm:$0xff] %v263
    %293 = vst [vmem:[#allocation3 + $0x8] sm:$0xff] %v266
    %294 = vst [vmem:[#allocation3 + $0x10] sm:$0xff] %v269
    %295 = vst [vmem:[#allocation3 + $0x18] sm:$0xff] %v272
    %296 = vst [vmem:[#allocation3 + $0x20] sm:$0xff] %v275
    %297 = vst [vmem:[#allocation3 + $0x28] sm:$0xff] %v278
    %298 = vst [vmem:[#allocation3 + $0x30] sm:$0xff] %v281
    %299 = vst [vmem:[#allocation3 + $0x38] sm:$0xff] %v284
    %300 = vst [vmem:[#allocation3 + $0x40] sm:$0xff] %v287
    %301 = vst [vmem:[#allocation3 + $0x48] sm:$0xff] %v290
    %v302 = vld [vmem:[%s4] sm:$0xff]
    %v303 = vld [vmem:[%s4 + $0x8] sm:$0xff]
    %v304 = vld [vmem:[%s4 + $0x10] sm:$0xff]
    %v305 = vld [vmem:[%s4 + $0x18] sm:$0xff]
    %v306 = vld [vmem:[#allocation7] sm:$0xff]
    %v307 = vld [vmem:[#allocation9] sm:$0xff]
    %v308 = vld [vmem:[#allocation3] sm:$0xff]
    %vm309 = vcmask 261120
    %v311 = vsel %vm309, %v306, 0
    %313 = vmatpush.msra.mxu0 0.0
    %314 = vmatpush.msra.mxu0 0.0
    %315 = vmatpush.msra.mxu0 0.0
    %316 = vmatpush.msra.mxu0 0.0
    %317 = vmatpush.msra.mxu0 0.0
    %318 = vmatpush.msra.mxu0 0.0
    %319 = vmatpush.msra.mxu0 0.0
    %320 = vmatpush.msra.mxu0 0.0
    %321 = vmatpush.msra.mxu0 0.0
    %322 = vmatpush.msra.mxu0 0.0
    %323 = vmatpush.msra.mxu0 0.0
    %324 = vmatpush.msra.mxu0 0.0
    %325 = vmatpush.msra.mxu0 %v305
    %326 = vmatpush.msra.mxu0 %v304
    %327 = vmatpush.msra.mxu0 %v303
    %328 = vmatpush.msra.mxu0 %v302
    %329 = vmatmul.f32.gmra.mxu0 %v311
    %v330 = vpop.f32.mrf.mxu0
    %v331 = vadd.f32 0.0, %v330
    %332 = vdwg.mxu0
    %v333 = vadd.f32 %v308, %v331
    %v334 = vtanh.pop %v333
    %v335 = vadd.f32 %v334, 1.0
    %v336 = vmul.f32 %v335, 0.5
    %338 = vrot.lane.b32.xlu0 %v307, 32
    %v339 = vpop.permute.xlu0 %338
    %v341 = vmul.f32 %v336, %v339
    %343 = vrot.lane.b32.xlu0 %v334, 64
    %v344 = vpop.permute.xlu0 %343
    %v346 = vmul.f32 %v336, %v344
    %348 = vrot.lane.b32.xlu0 %v346, 32
    %v349 = vpop.permute.xlu0 %348
    %v351 = vadd.f32 %v341, %v349
    %v352 = vtanh.pop %v351
    %354 = vrot.lane.b32.xlu0 %v352, 64
    %v355 = vpop.permute.xlu0 %354
    %v357 = vmul.f32 %v336, %v355
    %359 = vrot.lane.b32.xlu0 %v357, 32
    %v360 = vpop.permute.xlu0 %359
    %362 = vst.msk [vmem:[#allocation2] sm:$0xff] %vm309, %v360
    %s363 = scalar_lea.vmem [#allocation3], 8
    %v364 = vld [vmem:[%s363] sm:$0xff]
    %v365 = vsel %vm309, %v360, 0
    %367 = vmatpush.msra.mxu0 0.0
    %368 = vmatpush.msra.mxu0 0.0
    %369 = vmatpush.msra.mxu0 0.0
    %370 = vmatpush.msra.mxu0 0.0
    %371 = vmatpush.msra.mxu0 0.0
    %372 = vmatpush.msra.mxu0 0.0
    %373 = vmatpush.msra.mxu0 0.0
    %374 = vmatpush.msra.mxu0 0.0
    %375 = vmatpush.msra.mxu0 0.0
    %376 = vmatpush.msra.mxu0 0.0
    %377 = vmatpush.msra.mxu0 0.0
    %378 = vmatpush.msra.mxu0 0.0
    %379 = vmatpush.msra.mxu0 %v305
    %380 = vmatpush.msra.mxu0 %v304
    %381 = vmatpush.msra.mxu0 %v303
    %382 = vmatpush.msra.mxu0 %v302
    %383 = vmatmul.f32.gmra.mxu0 %v365
    %v384 = vpop.f32.mrf.mxu0
    %v385 = vadd.f32 0.0, %v384
    %386 = vdwg.mxu0
    %v387 = vadd.f32 %v364, %v385
    %v388 = vtanh.pop %v387
    %v389 = vadd.f32 %v388, 1.0
    %v390 = vmul.f32 %v389, 0.5
    %v391 = vmul.f32 %v390, %v351
    %393 = vrot.lane.b32.xlu0 %v388, 64
    %v394 = vpop.permute.xlu0 %393
    %v396 = vmul.f32 %v390, %v394
    %398 = vrot.lane.b32.xlu0 %v396, 32
    %v399 = vpop.permute.xlu0 %398
    %v401 = vadd.f32 %v391, %v399
    %v402 = vtanh.pop %v401
    %404 = vrot.lane.b32.xlu0 %v402, 64
    %v405 = vpop.permute.xlu0 %404
    %v407 = vmul.f32 %v390, %v405
    %409 = vrot.lane.b32.xlu0 %v407, 32
    %v410 = vpop.permute.xlu0 %409
    %s412 = scalar_lea.vmem [#allocation2], 8
    %413 = vst.msk [vmem:[%s412] sm:$0xff] %vm309, %v410
    %s414 = scalar_lea.vmem [#allocation3], 16
    %v415 = vld [vmem:[%s414] sm:$0xff]
    %v416 = vsel %vm309, %v410, 0
    %418 = vmatpush.msra.mxu0 0.0
    %419 = vmatpush.msra.mxu0 0.0
    %420 = vmatpush.msra.mxu0 0.0
    %421 = vmatpush.msra.mxu0 0.0
    %422 = vmatpush.msra.mxu0 0.0
    %423 = vmatpush.msra.mxu0 0.0
    %424 = vmatpush.msra.mxu0 0.0
    %425 = vmatpush.msra.mxu0 0.0
    %426 = vmatpush.msra.mxu0 0.0
    %427 = vmatpush.msra.mxu0 0.0
    %428 = vmatpush.msra.mxu0 0.0
    %429 = vmatpush.msra.mxu0 0.0
    %430 = vmatpush.msra.mxu0 %v305
    %431 = vmatpush.msra.mxu0 %v304
    %432 = vmatpush.msra.mxu0 %v303
    %433 = vmatpush.msra.mxu0 %v302
    %434 = vmatmul.f32.gmra.mxu0 %v416
    %v435 = vpop.f32.mrf.mxu0
    %v436 = vadd.f32 0.0, %v435
    %437 = vdwg.mxu0
    %v438 = vadd.f32 %v415, %v436
    %v439 = vtanh.pop %v438
    %v440 = vadd.f32 %v439, 1.0
    %v441 = vmul.f32 %v440, 0.5
    %v442 = vmul.f32 %v441, %v401
    %444 = vrot.lane.b32.xlu0 %v439, 64
    %v445 = vpop.permute.xlu0 %444
    %v447 = vmul.f32 %v441, %v445
    %449 = vrot.lane.b32.xlu0 %v447, 32
    %v450 = vpop.permute.xlu0 %449
    %v452 = vadd.f32 %v442, %v450
    %v453 = vtanh.pop %v452
    %455 = vrot.lane.b32.xlu0 %v453, 64
    %v456 = vpop.permute.xlu0 %455
    %v458 = vmul.f32 %v441, %v456
    %460 = vrot.lane.b32.xlu0 %v458, 32
    %v461 = vpop.permute.xlu0 %460
    %s463 = scalar_lea.vmem [#allocation2], 16
    %464 = vst.msk [vmem:[%s463] sm:$0xff] %vm309, %v461
    %s465 = scalar_lea.vmem [#allocation3], 24
    %v466 = vld [vmem:[%s465] sm:$0xff]
    %v467 = vsel %vm309, %v461, 0
    %469 = vmatpush.msra.mxu0 0.0
    %470 = vmatpush.msra.mxu0 0.0
    %471 = vmatpush.msra.mxu0 0.0
    %472 = vmatpush.msra.mxu0 0.0
    %473 = vmatpush.msra.mxu0 0.0
    %474 = vmatpush.msra.mxu0 0.0
    %475 = vmatpush.msra.mxu0 0.0
    %476 = vmatpush.msra.mxu0 0.0
    %477 = vmatpush.msra.mxu0 0.0
    %478 = vmatpush.msra.mxu0 0.0
    %479 = vmatpush.msra.mxu0 0.0
    %480 = vmatpush.msra.mxu0 0.0
    %481 = vmatpush.msra.mxu0 %v305
    %482 = vmatpush.msra.mxu0 %v304
    %483 = vmatpush.msra.mxu0 %v303
    %484 = vmatpush.msra.mxu0 %v302
    %485 = vmatmul.f32.gmra.mxu0 %v467
    %v486 = vpop.f32.mrf.mxu0
    %v487 = vadd.f32 0.0, %v486
    %488 = vdwg.mxu0
    %v489 = vadd.f32 %v466, %v487
    %v490 = vtanh.pop %v489
    %v491 = vadd.f32 %v490, 1.0
    %v492 = vmul.f32 %v491, 0.5
    %v493 = vmul.f32 %v492, %v452
    %495 = vrot.lane.b32.xlu0 %v490, 64
    %v496 = vpop.permute.xlu0 %495
    %v498 = vmul.f32 %v492, %v496
    %500 = vrot.lane.b32.xlu0 %v498, 32
    %v501 = vpop.permute.xlu0 %500
    %v503 = vadd.f32 %v493, %v501
    %v504 = vtanh.pop %v503
    %506 = vrot.lane.b32.xlu0 %v504, 64
    %v507 = vpop.permute.xlu0 %506
    %v509 = vmul.f32 %v492, %v507
    %511 = vrot.lane.b32.xlu0 %v509, 32
    %v512 = vpop.permute.xlu0 %511
    %s514 = scalar_lea.vmem [#allocation2], 24
    %515 = vst.msk [vmem:[%s514] sm:$0xff] %vm309, %v512
    %s516 = scalar_lea.vmem [#allocation3], 32
    %v517 = vld [vmem:[%s516] sm:$0xff]
    %v518 = vsel %vm309, %v512, 0
    %520 = vmatpush.msra.mxu0 0.0
    %521 = vmatpush.msra.mxu0 0.0
    %522 = vmatpush.msra.mxu0 0.0
    %523 = vmatpush.msra.mxu0 0.0
    %524 = vmatpush.msra.mxu0 0.0
    %525 = vmatpush.msra.mxu0 0.0
    %526 = vmatpush.msra.mxu0 0.0
    %527 = vmatpush.msra.mxu0 0.0
    %528 = vmatpush.msra.mxu0 0.0
    %529 = vmatpush.msra.mxu0 0.0
    %530 = vmatpush.msra.mxu0 0.0
    %531 = vmatpush.msra.mxu0 0.0
    %532 = vmatpush.msra.mxu0 %v305
    %533 = vmatpush.msra.mxu0 %v304
    %534 = vmatpush.msra.mxu0 %v303
    %535 = vmatpush.msra.mxu0 %v302
    %536 = vmatmul.f32.gmra.mxu0 %v518
    %v537 = vpop.f32.mrf.mxu0
    %v538 = vadd.f32 0.0, %v537
    %539 = vdwg.mxu0
    %v540 = vadd.f32 %v517, %v538
    %v541 = vtanh.pop %v540
    %v542 = vadd.f32 %v541, 1.0
    %v543 = vmul.f32 %v542, 0.5
    %v544 = vmul.f32 %v543, %v503
    %546 = vrot.lane.b32.xlu0 %v541, 64
    %v547 = vpop.permute.xlu0 %546
    %v549 = vmul.f32 %v543, %v547
    %551 = vrot.lane.b32.xlu0 %v549, 32
    %v552 = vpop.permute.xlu0 %551
    %v554 = vadd.f32 %v544, %v552
    %v555 = vtanh.pop %v554
    %557 = vrot.lane.b32.xlu0 %v555, 64
    %v558 = vpop.permute.xlu0 %557
    %v560 = vmul.f32 %v543, %v558
    %562 = vrot.lane.b32.xlu0 %v560, 32
    %v563 = vpop.permute.xlu0 %562
    %s565 = scalar_lea.vmem [#allocation2], 32
    %566 = vst.msk [vmem:[%s565] sm:$0xff] %vm309, %v563
    %s567 = scalar_lea.vmem [#allocation3], 40
    %v568 = vld [vmem:[%s567] sm:$0xff]
    %v569 = vsel %vm309, %v563, 0
    %571 = vmatpush.msra.mxu0 0.0
    %572 = vmatpush.msra.mxu0 0.0
    %573 = vmatpush.msra.mxu0 0.0
    %574 = vmatpush.msra.mxu0 0.0
    %575 = vmatpush.msra.mxu0 0.0
    %576 = vmatpush.msra.mxu0 0.0
    %577 = vmatpush.msra.mxu0 0.0
    %578 = vmatpush.msra.mxu0 0.0
    %579 = vmatpush.msra.mxu0 0.0
    %580 = vmatpush.msra.mxu0 0.0
    %581 = vmatpush.msra.mxu0 0.0
    %582 = vmatpush.msra.mxu0 0.0
    %583 = vmatpush.msra.mxu0 %v305
    %584 = vmatpush.msra.mxu0 %v304
    %585 = vmatpush.msra.mxu0 %v303
    %586 = vmatpush.msra.mxu0 %v302
    %587 = vmatmul.f32.gmra.mxu0 %v569
    %v588 = vpop.f32.mrf.mxu0
    %v589 = vadd.f32 0.0, %v588
    %590 = vdwg.mxu0
    %v591 = vadd.f32 %v568, %v589
    %v592 = vtanh.pop %v591
    %v593 = vadd.f32 %v592, 1.0
    %v594 = vmul.f32 %v593, 0.5
    %v595 = vmul.f32 %v594, %v554
    %597 = vrot.lane.b32.xlu0 %v592, 64
    %v598 = vpop.permute.xlu0 %597
    %v600 = vmul.f32 %v594, %v598
    %602 = vrot.lane.b32.xlu0 %v600, 32
    %v603 = vpop.permute.xlu0 %602
    %v605 = vadd.f32 %v595, %v603
    %v606 = vtanh.pop %v605
    %608 = vrot.lane.b32.xlu0 %v606, 64
    %v609 = vpop.permute.xlu0 %608
    %v611 = vmul.f32 %v594, %v609
    %613 = vrot.lane.b32.xlu0 %v611, 32
    %v614 = vpop.permute.xlu0 %613
    %s616 = scalar_lea.vmem [#allocation2], 40
    %617 = vst.msk [vmem:[%s616] sm:$0xff] %vm309, %v614
    %s618 = scalar_lea.vmem [#allocation3], 48
    %v619 = vld [vmem:[%s618] sm:$0xff]
    %v620 = vsel %vm309, %v614, 0
    %622 = vmatpush.msra.mxu0 0.0
    %623 = vmatpush.msra.mxu0 0.0
    %624 = vmatpush.msra.mxu0 0.0
    %625 = vmatpush.msra.mxu0 0.0
    %626 = vmatpush.msra.mxu0 0.0
    %627 = vmatpush.msra.mxu0 0.0
    %628 = vmatpush.msra.mxu0 0.0
    %629 = vmatpush.msra.mxu0 0.0
    %630 = vmatpush.msra.mxu0 0.0
    %631 = vmatpush.msra.mxu0 0.0
    %632 = vmatpush.msra.mxu0 0.0
    %633 = vmatpush.msra.mxu0 0.0
    %634 = vmatpush.msra.mxu0 %v305
    %635 = vmatpush.msra.mxu0 %v304
    %636 = vmatpush.msra.mxu0 %v303
    %637 = vmatpush.msra.mxu0 %v302
    %638 = vmatmul.f32.gmra.mxu0 %v620
    %v639 = vpop.f32.mrf.mxu0
    %v640 = vadd.f32 0.0, %v639
    %641 = vdwg.mxu0
    %v642 = vadd.f32 %v619, %v640
    %v643 = vtanh.pop %v642
    %v644 = vadd.f32 %v643, 1.0
    %v645 = vmul.f32 %v644, 0.5
    %v646 = vmul.f32 %v645, %v605
    %648 = vrot.lane.b32.xlu0 %v643, 64
    %v649 = vpop.permute.xlu0 %648
    %v651 = vmul.f32 %v645, %v649
    %653 = vrot.lane.b32.xlu0 %v651, 32
    %v654 = vpop.permute.xlu0 %653
    %v656 = vadd.f32 %v646, %v654
    %v657 = vtanh.pop %v656
    %659 = vrot.lane.b32.xlu0 %v657, 64
    %v660 = vpop.permute.xlu0 %659
    %v662 = vmul.f32 %v645, %v660
    %664 = vrot.lane.b32.xlu0 %v662, 32
    %v665 = vpop.permute.xlu0 %664
    %s667 = scalar_lea.vmem [#allocation2], 48
    %668 = vst.msk [vmem:[%s667] sm:$0xff] %vm309, %v665
    %s669 = scalar_lea.vmem [#allocation3], 56
    %v670 = vld [vmem:[%s669] sm:$0xff]
    %v671 = vsel %vm309, %v665, 0
    %673 = vmatpush.msra.mxu0 0.0
    %674 = vmatpush.msra.mxu0 0.0
    %675 = vmatpush.msra.mxu0 0.0
    %676 = vmatpush.msra.mxu0 0.0
    %677 = vmatpush.msra.mxu0 0.0
    %678 = vmatpush.msra.mxu0 0.0
    %679 = vmatpush.msra.mxu0 0.0
    %680 = vmatpush.msra.mxu0 0.0
    %681 = vmatpush.msra.mxu0 0.0
    %682 = vmatpush.msra.mxu0 0.0
    %683 = vmatpush.msra.mxu0 0.0
    %684 = vmatpush.msra.mxu0 0.0
    %685 = vmatpush.msra.mxu0 %v305
    %686 = vmatpush.msra.mxu0 %v304
    %687 = vmatpush.msra.mxu0 %v303
    %688 = vmatpush.msra.mxu0 %v302
    %689 = vmatmul.f32.gmra.mxu0 %v671
    %v690 = vpop.f32.mrf.mxu0
    %v691 = vadd.f32 0.0, %v690
    %692 = vdwg.mxu0
    %v693 = vadd.f32 %v670, %v691
    %v694 = vtanh.pop %v693
    %v695 = vadd.f32 %v694, 1.0
    %v696 = vmul.f32 %v695, 0.5
    %v697 = vmul.f32 %v696, %v656
    %699 = vrot.lane.b32.xlu0 %v694, 64
    %v700 = vpop.permute.xlu0 %699
    %v702 = vmul.f32 %v696, %v700
    %704 = vrot.lane.b32.xlu0 %v702, 32
    %v705 = vpop.permute.xlu0 %704
    %v707 = vadd.f32 %v697, %v705
    %v708 = vtanh.pop %v707
    %710 = vrot.lane.b32.xlu0 %v708, 64
    %v711 = vpop.permute.xlu0 %710
    %v713 = vmul.f32 %v696, %v711
    %715 = vrot.lane.b32.xlu0 %v713, 32
    %v716 = vpop.permute.xlu0 %715
    %s718 = scalar_lea.vmem [#allocation2], 56
    %719 = vst.msk [vmem:[%s718] sm:$0xff] %vm309, %v716
    %s720 = scalar_lea.vmem [#allocation3], 64
    %v721 = vld [vmem:[%s720] sm:$0xff]
    %v722 = vsel %vm309, %v716, 0
    %724 = vmatpush.msra.mxu0 0.0
    %725 = vmatpush.msra.mxu0 0.0
    %726 = vmatpush.msra.mxu0 0.0
    %727 = vmatpush.msra.mxu0 0.0
    %728 = vmatpush.msra.mxu0 0.0
    %729 = vmatpush.msra.mxu0 0.0
    %730 = vmatpush.msra.mxu0 0.0
    %731 = vmatpush.msra.mxu0 0.0
    %732 = vmatpush.msra.mxu0 0.0
    %733 = vmatpush.msra.mxu0 0.0
    %734 = vmatpush.msra.mxu0 0.0
    %735 = vmatpush.msra.mxu0 0.0
    %736 = vmatpush.msra.mxu0 %v305
    %737 = vmatpush.msra.mxu0 %v304
    %738 = vmatpush.msra.mxu0 %v303
    %739 = vmatpush.msra.mxu0 %v302
    %740 = vmatmul.f32.gmra.mxu0 %v722
    %v741 = vpop.f32.mrf.mxu0
    %v742 = vadd.f32 0.0, %v741
    %743 = vdwg.mxu0
    %v744 = vadd.f32 %v721, %v742
    %v745 = vtanh.pop %v744
    %v746 = vadd.f32 %v745, 1.0
    %v747 = vmul.f32 %v746, 0.5
    %v748 = vmul.f32 %v747, %v707
    %750 = vrot.lane.b32.xlu0 %v745, 64
    %v751 = vpop.permute.xlu0 %750
    %v753 = vmul.f32 %v747, %v751
    %755 = vrot.lane.b32.xlu0 %v753, 32
    %v756 = vpop.permute.xlu0 %755
    %v758 = vadd.f32 %v748, %v756
    %v759 = vtanh.pop %v758
    %761 = vrot.lane.b32.xlu0 %v759, 64
    %v762 = vpop.permute.xlu0 %761
    %v764 = vmul.f32 %v747, %v762
    %766 = vrot.lane.b32.xlu0 %v764, 32
    %v767 = vpop.permute.xlu0 %766
    %s769 = scalar_lea.vmem [#allocation2], 64
    %770 = vst.msk [vmem:[%s769] sm:$0xff] %vm309, %v767
    %s771 = scalar_lea.vmem [#allocation3], 72
    %v772 = vld [vmem:[%s771] sm:$0xff]
    %v773 = vsel %vm309, %v767, 0
    %775 = vmatpush.msra.mxu0 0.0
    %776 = vmatpush.msra.mxu0 0.0
    %777 = vmatpush.msra.mxu0 0.0
    %778 = vmatpush.msra.mxu0 0.0
    %779 = vmatpush.msra.mxu0 0.0
    %780 = vmatpush.msra.mxu0 0.0
    %781 = vmatpush.msra.mxu0 0.0
    %782 = vmatpush.msra.mxu0 0.0
    %783 = vmatpush.msra.mxu0 0.0
    %784 = vmatpush.msra.mxu0 0.0
    %785 = vmatpush.msra.mxu0 0.0
    %786 = vmatpush.msra.mxu0 0.0
    %787 = vmatpush.msra.mxu0 %v305
    %788 = vmatpush.msra.mxu0 %v304
    %789 = vmatpush.msra.mxu0 %v303
    %790 = vmatpush.msra.mxu0 %v302
    %791 = vmatmul.f32.gmra.mxu0 %v773
    %v792 = vpop.f32.mrf.mxu0
    %v793 = vadd.f32 0.0, %v792
    %794 = vdwg.mxu0
    %v795 = vadd.f32 %v772, %v793
    %v796 = vtanh.pop %v795
    %v797 = vadd.f32 %v796, 1.0
    %v798 = vmul.f32 %v797, 0.5
    %v799 = vmul.f32 %v798, %v758
    %801 = vrot.lane.b32.xlu0 %v796, 64
    %v802 = vpop.permute.xlu0 %801
    %v804 = vmul.f32 %v798, %v802
    %806 = vrot.lane.b32.xlu0 %v804, 32
    %v807 = vpop.permute.xlu0 %806
    %v809 = vadd.f32 %v799, %v807
    %v810 = vtanh.pop %v809
    %812 = vrot.lane.b32.xlu0 %v810, 64
    %v813 = vpop.permute.xlu0 %812
    %v815 = vmul.f32 %v798, %v813
    %817 = vrot.lane.b32.xlu0 %v815, 32
    %v818 = vpop.permute.xlu0 %817
    %s820 = scalar_lea.vmem [#allocation2], 72
    %821 = vst.msk [vmem:[%s820] sm:$0xff] %vm309, %v818
    %822 = vst.msk [vmem:[#allocation19] sm:$0xff] %vm309, %v818
    %824 = vrot.lane.b32.xlu0 %v809, 96
    %v825 = vpop.permute.xlu0 %824
    %827 = vst.msk [vmem:[#allocation20] sm:$0xff] %vm309, %v825
    %v828 = vld [vmem:[#allocation2] sm:$0xff]
    %v829 = vld [vmem:[#allocation2 + $0x8] sm:$0xff]
    %v830 = vld [vmem:[#allocation2 + $0x10] sm:$0xff]
    %v831 = vld [vmem:[#allocation2 + $0x18] sm:$0xff]
    %v832 = vld [vmem:[#allocation2 + $0x20] sm:$0xff]
    %v833 = vld [vmem:[#allocation2 + $0x28] sm:$0xff]
    %v834 = vld [vmem:[#allocation2 + $0x30] sm:$0xff]
    %v835 = vld [vmem:[#allocation2 + $0x38] sm:$0xff]
    %v836 = vld [vmem:[#allocation2 + $0x40] sm:$0xff]
    %v837 = vld [vmem:[#allocation2 + $0x48] sm:$0xff]
    %v838 = vld [vmem:[#allocation12] sm:$0xff]
    %v839 = vld [vmem:[#allocation12 + $0x8] sm:$0xff]
    %v840 = vld [vmem:[#allocation12 + $0x10] sm:$0xff]
    %v841 = vld [vmem:[#allocation12 + $0x18] sm:$0xff]
    %v842 = vld [vmem:[%s8] sm:$0x1]
    %v844 = vperm.slane %v842, 0
    %v847 = vsel %vm309, %v828, 0
    %v850 = vsel %vm309, %v829, 0
    %v853 = vsel %vm309, %v830, 0
    %v856 = vsel %vm309, %v831, 0
    %v859 = vsel %vm309, %v832, 0
    %v862 = vsel %vm309, %v833, 0
    %v865 = vsel %vm309, %v834, 0
    %v868 = vsel %vm309, %v835, 0
    %v871 = vsel %vm309, %v836, 0
    %v874 = vsel %vm309, %v837, 0
    %876 = vmatpush.msra.mxu0 0.0
    %877 = vmatpush.msra.mxu0 0.0
    %878 = vmatpush.msra.mxu0 0.0
    %879 = vmatpush.msra.mxu0 0.0
    %880 = vmatpush.msra.mxu0 0.0
    %881 = vmatpush.msra.mxu0 0.0
    %882 = vmatpush.msra.mxu0 0.0
    %883 = vmatpush.msra.mxu0 0.0
    %884 = vmatpush.msra.mxu0 0.0
    %885 = vmatpush.msra.mxu0 0.0
    %886 = vmatpush.msra.mxu0 0.0
    %887 = vmatpush.msra.mxu0 0.0
    %888 = vmatpush.msra.mxu0 %v841
    %889 = vmatpush.msra.mxu0 %v840
    %890 = vmatpush.msra.mxu0 %v839
    %891 = vmatpush.msra.mxu0 %v838
    %892 = vmatmul.f32.gmra.mxu0 %v847
    %v893 = vpop.f32.mrf.mxu0
    %v894 = vadd.f32 %v844, %v893
    %895 = vmatmul.f32.gmra.mxu0 %v850
    %v896 = vpop.f32.mrf.mxu0
    %v897 = vadd.f32 %v844, %v896
    %898 = vmatmul.f32.gmra.mxu0 %v853
    %v899 = vpop.f32.mrf.mxu0
    %v900 = vadd.f32 %v844, %v899
    %901 = vmatmul.f32.gmra.mxu0 %v856
    %v902 = vpop.f32.mrf.mxu0
    %v903 = vadd.f32 %v844, %v902
    %904 = vmatmul.f32.gmra.mxu0 %v859
    %v905 = vpop.f32.mrf.mxu0
    %v906 = vadd.f32 %v844, %v905
    %907 = vmatmul.f32.gmra.mxu0 %v862
    %v908 = vpop.f32.mrf.mxu0
    %v909 = vadd.f32 %v844, %v908
    %910 = vmatmul.f32.gmra.mxu0 %v865
    %v911 = vpop.f32.mrf.mxu0
    %v912 = vadd.f32 %v844, %v911
    %913 = vmatmul.f32.gmra.mxu0 %v868
    %v914 = vpop.f32.mrf.mxu0
    %v915 = vadd.f32 %v844, %v914
    %916 = vmatmul.f32.gmra.mxu0 %v871
    %v917 = vpop.f32.mrf.mxu0
    %v918 = vadd.f32 %v844, %v917
    %919 = vmatmul.f32.gmra.mxu0 %v874
    %v920 = vpop.f32.mrf.mxu0
    %v921 = vadd.f32 %v844, %v920
    %922 = vdwg.mxu0
    %923 = vst [vmem:[#allocation3] sm:$0xff] %v894
    %924 = vst [vmem:[#allocation3 + $0x8] sm:$0xff] %v897
    %925 = vst [vmem:[#allocation3 + $0x10] sm:$0xff] %v900
    %926 = vst [vmem:[#allocation3 + $0x18] sm:$0xff] %v903
    %927 = vst [vmem:[#allocation3 + $0x20] sm:$0xff] %v906
    %928 = vst [vmem:[#allocation3 + $0x28] sm:$0xff] %v909
    %929 = vst [vmem:[#allocation3 + $0x30] sm:$0xff] %v912
    %930 = vst [vmem:[#allocation3 + $0x38] sm:$0xff] %v915
    %931 = vst [vmem:[#allocation3 + $0x40] sm:$0xff] %v918
    %932 = vst [vmem:[#allocation3 + $0x48] sm:$0xff] %v921
    %v933 = vld [vmem:[#allocation13] sm:$0xff]
    %v934 = vld [vmem:[#allocation13 + $0x8] sm:$0xff]
    %v935 = vld [vmem:[#allocation13 + $0x10] sm:$0xff]
    %v936 = vld [vmem:[#allocation13 + $0x18] sm:$0xff]
    %s937 = scalar_lea.vmem [#allocation7], 8
    %v938 = vld [vmem:[%s937] sm:$0xff]
    %s939 = scalar_lea.vmem [#allocation9], 8
    %v940 = vld [vmem:[%s939] sm:$0xff]
    %v941 = vld [vmem:[#allocation3] sm:$0xff]
    %v943 = vsel %vm309, %v938, 0
    %945 = vmatpush.msra.mxu0 0.0
    %946 = vmatpush.msra.mxu0 0.0
    %947 = vmatpush.msra.mxu0 0.0
    %948 = vmatpush.msra.mxu0 0.0
    %949 = vmatpush.msra.mxu0 0.0
    %950 = vmatpush.msra.mxu0 0.0
    %951 = vmatpush.msra.mxu0 0.0
    %952 = vmatpush.msra.mxu0 0.0
    %953 = vmatpush.msra.mxu0 0.0
    %954 = vmatpush.msra.mxu0 0.0
    %955 = vmatpush.msra.mxu0 0.0
    %956 = vmatpush.msra.mxu0 0.0
    %957 = vmatpush.msra.mxu0 %v936
    %958 = vmatpush.msra.mxu0 %v935
    %959 = vmatpush.msra.mxu0 %v934
    %960 = vmatpush.msra.mxu0 %v933
    %961 = vmatmul.f32.gmra.mxu0 %v943
    %v962 = vpop.f32.mrf.mxu0
    %v963 = vadd.f32 0.0, %v962
    %964 = vdwg.mxu0
    %v965 = vadd.f32 %v941, %v963
    %v966 = vtanh.pop %v965
    %v967 = vadd.f32 %v966, 1.0
    %v968 = vmul.f32 %v967, 0.5
    %970 = vrot.lane.b32.xlu0 %v940, 32
    %v971 = vpop.permute.xlu0 %970
    %v973 = vmul.f32 %v968, %v971
    %975 = vrot.lane.b32.xlu0 %v966, 64
    %v976 = vpop.permute.xlu0 %975
    %v978 = vmul.f32 %v968, %v976
    %980 = vrot.lane.b32.xlu0 %v978, 32
    %v981 = vpop.permute.xlu0 %980
    %v983 = vadd.f32 %v973, %v981
    %v984 = vtanh.pop %v983
    %986 = vrot.lane.b32.xlu0 %v984, 64
    %v987 = vpop.permute.xlu0 %986
    %v989 = vmul.f32 %v968, %v987
    %991 = vrot.lane.b32.xlu0 %v989, 32
    %v992 = vpop.permute.xlu0 %991
    %994 = vst.msk [vmem:[#allocation2] sm:$0xff] %vm309, %v992
    %v995 = vld [vmem:[%s363] sm:$0xff]
    %v996 = vsel %vm309, %v992, 0
    %998 = vmatpush.msra.mxu0 0.0
    %999 = vmatpush.msra.mxu0 0.0
    %1000 = vmatpush.msra.mxu0 0.0
    %1001 = vmatpush.msra.mxu0 0.0
    %1002 = vmatpush.msra.mxu0 0.0
    %1003 = vmatpush.msra.mxu0 0.0
    %1004 = vmatpush.msra.mxu0 0.0
    %1005 = vmatpush.msra.mxu0 0.0
    %1006 = vmatpush.msra.mxu0 0.0
    %1007 = vmatpush.msra.mxu0 0.0
    %1008 = vmatpush.msra.mxu0 0.0
    %1009 = vmatpush.msra.mxu0 0.0
    %1010 = vmatpush.msra.mxu0 %v936
    %1011 = vmatpush.msra.mxu0 %v935
    %1012 = vmatpush.msra.mxu0 %v934
    %1013 = vmatpush.msra.mxu0 %v933
    %1014 = vmatmul.f32.gmra.mxu0 %v996
    %v1015 = vpop.f32.mrf.mxu0
    %v1016 = vadd.f32 0.0, %v1015
    %1017 = vdwg.mxu0
    %v1018 = vadd.f32 %v995, %v1016
    %v1019 = vtanh.pop %v1018
    %v1020 = vadd.f32 %v1019, 1.0
    %v1021 = vmul.f32 %v1020, 0.5
    %v1022 = vmul.f32 %v1021, %v983
    %1024 = vrot.lane.b32.xlu0 %v1019, 64
    %v1025 = vpop.permute.xlu0 %1024
    %v1027 = vmul.f32 %v1021, %v1025
    %1029 = vrot.lane.b32.xlu0 %v1027, 32
    %v1030 = vpop.permute.xlu0 %1029
    %v1032 = vadd.f32 %v1022, %v1030
    %v1033 = vtanh.pop %v1032
    %1035 = vrot.lane.b32.xlu0 %v1033, 64
    %v1036 = vpop.permute.xlu0 %1035
    %v1038 = vmul.f32 %v1021, %v1036
    %1040 = vrot.lane.b32.xlu0 %v1038, 32
    %v1041 = vpop.permute.xlu0 %1040
    %1043 = vst.msk [vmem:[%s412] sm:$0xff] %vm309, %v1041
    %v1044 = vld [vmem:[%s414] sm:$0xff]
    %v1045 = vsel %vm309, %v1041, 0
    %1047 = vmatpush.msra.mxu0 0.0
    %1048 = vmatpush.msra.mxu0 0.0
    %1049 = vmatpush.msra.mxu0 0.0
    %1050 = vmatpush.msra.mxu0 0.0
    %1051 = vmatpush.msra.mxu0 0.0
    %1052 = vmatpush.msra.mxu0 0.0
    %1053 = vmatpush.msra.mxu0 0.0
    %1054 = vmatpush.msra.mxu0 0.0
    %1055 = vmatpush.msra.mxu0 0.0
    %1056 = vmatpush.msra.mxu0 0.0
    %1057 = vmatpush.msra.mxu0 0.0
    %1058 = vmatpush.msra.mxu0 0.0
    %1059 = vmatpush.msra.mxu0 %v936
    %1060 = vmatpush.msra.mxu0 %v935
    %1061 = vmatpush.msra.mxu0 %v934
    %1062 = vmatpush.msra.mxu0 %v933
    %1063 = vmatmul.f32.gmra.mxu0 %v1045
    %v1064 = vpop.f32.mrf.mxu0
    %v1065 = vadd.f32 0.0, %v1064
    %1066 = vdwg.mxu0
    %v1067 = vadd.f32 %v1044, %v1065
    %v1068 = vtanh.pop %v1067
    %v1069 = vadd.f32 %v1068, 1.0
    %v1070 = vmul.f32 %v1069, 0.5
    %v1071 = vmul.f32 %v1070, %v1032
    %1073 = vrot.lane.b32.xlu0 %v1068, 64
    %v1074 = vpop.permute.xlu0 %1073
    %v1076 = vmul.f32 %v1070, %v1074
    %1078 = vrot.lane.b32.xlu0 %v1076, 32
    %v1079 = vpop.permute.xlu0 %1078
    %v1081 = vadd.f32 %v1071, %v1079
    %v1082 = vtanh.pop %v1081
    %1084 = vrot.lane.b32.xlu0 %v1082, 64
    %v1085 = vpop.permute.xlu0 %1084
    %v1087 = vmul.f32 %v1070, %v1085
    %1089 = vrot.lane.b32.xlu0 %v1087, 32
    %v1090 = vpop.permute.xlu0 %1089
    %1092 = vst.msk [vmem:[%s463] sm:$0xff] %vm309, %v1090
    %v1093 = vld [vmem:[%s465] sm:$0xff]
    %v1094 = vsel %vm309, %v1090, 0
    %1096 = vmatpush.msra.mxu0 0.0
    %1097 = vmatpush.msra.mxu0 0.0
    %1098 = vmatpush.msra.mxu0 0.0
    %1099 = vmatpush.msra.mxu0 0.0
    %1100 = vmatpush.msra.mxu0 0.0
    %1101 = vmatpush.msra.mxu0 0.0
    %1102 = vmatpush.msra.mxu0 0.0
    %1103 = vmatpush.msra.mxu0 0.0
    %1104 = vmatpush.msra.mxu0 0.0
    %1105 = vmatpush.msra.mxu0 0.0
    %1106 = vmatpush.msra.mxu0 0.0
    %1107 = vmatpush.msra.mxu0 0.0
    %1108 = vmatpush.msra.mxu0 %v936
    %1109 = vmatpush.msra.mxu0 %v935
    %1110 = vmatpush.msra.mxu0 %v934
    %1111 = vmatpush.msra.mxu0 %v933
    %1112 = vmatmul.f32.gmra.mxu0 %v1094
    %v1113 = vpop.f32.mrf.mxu0
    %v1114 = vadd.f32 0.0, %v1113
    %1115 = vdwg.mxu0
    %v1116 = vadd.f32 %v1093, %v1114
    %v1117 = vtanh.pop %v1116
    %v1118 = vadd.f32 %v1117, 1.0
    %v1119 = vmul.f32 %v1118, 0.5
    %v1120 = vmul.f32 %v1119, %v1081
    %1122 = vrot.lane.b32.xlu0 %v1117, 64
    %v1123 = vpop.permute.xlu0 %1122
    %v1125 = vmul.f32 %v1119, %v1123
    %1127 = vrot.lane.b32.xlu0 %v1125, 32
    %v1128 = vpop.permute.xlu0 %1127
    %v1130 = vadd.f32 %v1120, %v1128
    %v1131 = vtanh.pop %v1130
    %1133 = vrot.lane.b32.xlu0 %v1131, 64
    %v1134 = vpop.permute.xlu0 %1133
    %v1136 = vmul.f32 %v1119, %v1134
    %1138 = vrot.lane.b32.xlu0 %v1136, 32
    %v1139 = vpop.permute.xlu0 %1138
    %1141 = vst.msk [vmem:[%s514] sm:$0xff] %vm309, %v1139
    %v1142 = vld [vmem:[%s516] sm:$0xff]
    %v1143 = vsel %vm309, %v1139, 0
    %1145 = vmatpush.msra.mxu0 0.0
    %1146 = vmatpush.msra.mxu0 0.0
    %1147 = vmatpush.msra.mxu0 0.0
    %1148 = vmatpush.msra.mxu0 0.0
    %1149 = vmatpush.msra.mxu0 0.0
    %1150 = vmatpush.msra.mxu0 0.0
    %1151 = vmatpush.msra.mxu0 0.0
    %1152 = vmatpush.msra.mxu0 0.0
    %1153 = vmatpush.msra.mxu0 0.0
    %1154 = vmatpush.msra.mxu0 0.0
    %1155 = vmatpush.msra.mxu0 0.0
    %1156 = vmatpush.msra.mxu0 0.0
    %1157 = vmatpush.msra.mxu0 %v936
    %1158 = vmatpush.msra.mxu0 %v935
    %1159 = vmatpush.msra.mxu0 %v934
    %1160 = vmatpush.msra.mxu0 %v933
    %1161 = vmatmul.f32.gmra.mxu0 %v1143
    %v1162 = vpop.f32.mrf.mxu0
    %v1163 = vadd.f32 0.0, %v1162
    %1164 = vdwg.mxu0
    %v1165 = vadd.f32 %v1142, %v1163
    %v1166 = vtanh.pop %v1165
    %v1167 = vadd.f32 %v1166, 1.0
    %v1168 = vmul.f32 %v1167, 0.5
    %v1169 = vmul.f32 %v1168, %v1130
    %1171 = vrot.lane.b32.xlu0 %v1166, 64
    %v1172 = vpop.permute.xlu0 %1171
    %v1174 = vmul.f32 %v1168, %v1172
    %1176 = vrot.lane.b32.xlu0 %v1174, 32
    %v1177 = vpop.permute.xlu0 %1176
    %v1179 = vadd.f32 %v1169, %v1177
    %v1180 = vtanh.pop %v1179
    %1182 = vrot.lane.b32.xlu0 %v1180, 64
    %v1183 = vpop.permute.xlu0 %1182
    %v1185 = vmul.f32 %v1168, %v1183
    %1187 = vrot.lane.b32.xlu0 %v1185, 32
    %v1188 = vpop.permute.xlu0 %1187
    %1190 = vst.msk [vmem:[%s565] sm:$0xff] %vm309, %v1188
    %v1191 = vld [vmem:[%s567] sm:$0xff]
    %v1192 = vsel %vm309, %v1188, 0
    %1194 = vmatpush.msra.mxu0 0.0
    %1195 = vmatpush.msra.mxu0 0.0
    %1196 = vmatpush.msra.mxu0 0.0
    %1197 = vmatpush.msra.mxu0 0.0
    %1198 = vmatpush.msra.mxu0 0.0
    %1199 = vmatpush.msra.mxu0 0.0
    %1200 = vmatpush.msra.mxu0 0.0
    %1201 = vmatpush.msra.mxu0 0.0
    %1202 = vmatpush.msra.mxu0 0.0
    %1203 = vmatpush.msra.mxu0 0.0
    %1204 = vmatpush.msra.mxu0 0.0
    %1205 = vmatpush.msra.mxu0 0.0
    %1206 = vmatpush.msra.mxu0 %v936
    %1207 = vmatpush.msra.mxu0 %v935
    %1208 = vmatpush.msra.mxu0 %v934
    %1209 = vmatpush.msra.mxu0 %v933
    %1210 = vmatmul.f32.gmra.mxu0 %v1192
    %v1211 = vpop.f32.mrf.mxu0
    %v1212 = vadd.f32 0.0, %v1211
    %1213 = vdwg.mxu0
    %v1214 = vadd.f32 %v1191, %v1212
    %v1215 = vtanh.pop %v1214
    %v1216 = vadd.f32 %v1215, 1.0
    %v1217 = vmul.f32 %v1216, 0.5
    %v1218 = vmul.f32 %v1217, %v1179
    %1220 = vrot.lane.b32.xlu0 %v1215, 64
    %v1221 = vpop.permute.xlu0 %1220
    %v1223 = vmul.f32 %v1217, %v1221
    %1225 = vrot.lane.b32.xlu0 %v1223, 32
    %v1226 = vpop.permute.xlu0 %1225
    %v1228 = vadd.f32 %v1218, %v1226
    %v1229 = vtanh.pop %v1228
    %1231 = vrot.lane.b32.xlu0 %v1229, 64
    %v1232 = vpop.permute.xlu0 %1231
    %v1234 = vmul.f32 %v1217, %v1232
    %1236 = vrot.lane.b32.xlu0 %v1234, 32
    %v1237 = vpop.permute.xlu0 %1236
    %1239 = vst.msk [vmem:[%s616] sm:$0xff] %vm309, %v1237
    %v1240 = vld [vmem:[%s618] sm:$0xff]
    %v1241 = vsel %vm309, %v1237, 0
    %1243 = vmatpush.msra.mxu0 0.0
    %1244 = vmatpush.msra.mxu0 0.0
    %1245 = vmatpush.msra.mxu0 0.0
    %1246 = vmatpush.msra.mxu0 0.0
    %1247 = vmatpush.msra.mxu0 0.0
    %1248 = vmatpush.msra.mxu0 0.0
    %1249 = vmatpush.msra.mxu0 0.0
    %1250 = vmatpush.msra.mxu0 0.0
    %1251 = vmatpush.msra.mxu0 0.0
    %1252 = vmatpush.msra.mxu0 0.0
    %1253 = vmatpush.msra.mxu0 0.0
    %1254 = vmatpush.msra.mxu0 0.0
    %1255 = vmatpush.msra.mxu0 %v936
    %1256 = vmatpush.msra.mxu0 %v935
    %1257 = vmatpush.msra.mxu0 %v934
    %1258 = vmatpush.msra.mxu0 %v933
    %1259 = vmatmul.f32.gmra.mxu0 %v1241
    %v1260 = vpop.f32.mrf.mxu0
    %v1261 = vadd.f32 0.0, %v1260
    %1262 = vdwg.mxu0
    %v1263 = vadd.f32 %v1240, %v1261
    %v1264 = vtanh.pop %v1263
    %v1265 = vadd.f32 %v1264, 1.0
    %v1266 = vmul.f32 %v1265, 0.5
    %v1267 = vmul.f32 %v1266, %v1228
    %1269 = vrot.lane.b32.xlu0 %v1264, 64
    %v1270 = vpop.permute.xlu0 %1269
    %v1272 = vmul.f32 %v1266, %v1270
    %1274 = vrot.lane.b32.xlu0 %v1272, 32
    %v1275 = vpop.permute.xlu0 %1274
    %v1277 = vadd.f32 %v1267, %v1275
    %v1278 = vtanh.pop %v1277
    %1280 = vrot.lane.b32.xlu0 %v1278, 64
    %v1281 = vpop.permute.xlu0 %1280
    %v1283 = vmul.f32 %v1266, %v1281
    %1285 = vrot.lane.b32.xlu0 %v1283, 32
    %v1286 = vpop.permute.xlu0 %1285
    %1288 = vst.msk [vmem:[%s667] sm:$0xff] %vm309, %v1286
    %v1289 = vld [vmem:[%s669] sm:$0xff]
    %v1290 = vsel %vm309, %v1286, 0
    %1292 = vmatpush.msra.mxu0 0.0
    %1293 = vmatpush.msra.mxu0 0.0
    %1294 = vmatpush.msra.mxu0 0.0
    %1295 = vmatpush.msra.mxu0 0.0
    %1296 = vmatpush.msra.mxu0 0.0
    %1297 = vmatpush.msra.mxu0 0.0
    %1298 = vmatpush.msra.mxu0 0.0
    %1299 = vmatpush.msra.mxu0 0.0
    %1300 = vmatpush.msra.mxu0 0.0
    %1301 = vmatpush.msra.mxu0 0.0
    %1302 = vmatpush.msra.mxu0 0.0
    %1303 = vmatpush.msra.mxu0 0.0
    %1304 = vmatpush.msra.mxu0 %v936
    %1305 = vmatpush.msra.mxu0 %v935
    %1306 = vmatpush.msra.mxu0 %v934
    %1307 = vmatpush.msra.mxu0 %v933
    %1308 = vmatmul.f32.gmra.mxu0 %v1290
    %v1309 = vpop.f32.mrf.mxu0
    %v1310 = vadd.f32 0.0, %v1309
    %1311 = vdwg.mxu0
    %v1312 = vadd.f32 %v1289, %v1310
    %v1313 = vtanh.pop %v1312
    %v1314 = vadd.f32 %v1313, 1.0
    %v1315 = vmul.f32 %v1314, 0.5
    %v1316 = vmul.f32 %v1315, %v1277
    %1318 = vrot.lane.b32.xlu0 %v1313, 64
    %v1319 = vpop.permute.xlu0 %1318
    %v1321 = vmul.f32 %v1315, %v1319
    %1323 = vrot.lane.b32.xlu0 %v1321, 32
    %v1324 = vpop.permute.xlu0 %1323
    %v1326 = vadd.f32 %v1316, %v1324
    %v1327 = vtanh.pop %v1326
    %1329 = vrot.lane.b32.xlu0 %v1327, 64
    %v1330 = vpop.permute.xlu0 %1329
    %v1332 = vmul.f32 %v1315, %v1330
    %1334 = vrot.lane.b32.xlu0 %v1332, 32
    %v1335 = vpop.permute.xlu0 %1334
    %1337 = vst.msk [vmem:[%s718] sm:$0xff] %vm309, %v1335
    %v1338 = vld [vmem:[%s720] sm:$0xff]
    %v1339 = vsel %vm309, %v1335, 0
    %1341 = vmatpush.msra.mxu0 0.0
    %1342 = vmatpush.msra.mxu0 0.0
    %1343 = vmatpush.msra.mxu0 0.0
    %1344 = vmatpush.msra.mxu0 0.0
    %1345 = vmatpush.msra.mxu0 0.0
    %1346 = vmatpush.msra.mxu0 0.0
    %1347 = vmatpush.msra.mxu0 0.0
    %1348 = vmatpush.msra.mxu0 0.0
    %1349 = vmatpush.msra.mxu0 0.0
    %1350 = vmatpush.msra.mxu0 0.0
    %1351 = vmatpush.msra.mxu0 0.0
    %1352 = vmatpush.msra.mxu0 0.0
    %1353 = vmatpush.msra.mxu0 %v936
    %1354 = vmatpush.msra.mxu0 %v935
    %1355 = vmatpush.msra.mxu0 %v934
    %1356 = vmatpush.msra.mxu0 %v933
    %1357 = vmatmul.f32.gmra.mxu0 %v1339
    %v1358 = vpop.f32.mrf.mxu0
    %v1359 = vadd.f32 0.0, %v1358
    %1360 = vdwg.mxu0
    %v1361 = vadd.f32 %v1338, %v1359
    %v1362 = vtanh.pop %v1361
    %v1363 = vadd.f32 %v1362, 1.0
    %v1364 = vmul.f32 %v1363, 0.5
    %v1365 = vmul.f32 %v1364, %v1326
    %1367 = vrot.lane.b32.xlu0 %v1362, 64
    %v1368 = vpop.permute.xlu0 %1367
    %v1370 = vmul.f32 %v1364, %v1368
    %1372 = vrot.lane.b32.xlu0 %v1370, 32
    %v1373 = vpop.permute.xlu0 %1372
    %v1375 = vadd.f32 %v1365, %v1373
    %v1376 = vtanh.pop %v1375
    %1378 = vrot.lane.b32.xlu0 %v1376, 64
    %v1379 = vpop.permute.xlu0 %1378
    %v1381 = vmul.f32 %v1364, %v1379
    %1383 = vrot.lane.b32.xlu0 %v1381, 32
    %v1384 = vpop.permute.xlu0 %1383
    %1386 = vst.msk [vmem:[%s769] sm:$0xff] %vm309, %v1384
    %v1387 = vld [vmem:[%s771] sm:$0xff]
    %v1388 = vsel %vm309, %v1384, 0
    %1390 = vmatpush.msra.mxu0 0.0
    %1391 = vmatpush.msra.mxu0 0.0
    %1392 = vmatpush.msra.mxu0 0.0
    %1393 = vmatpush.msra.mxu0 0.0
    %1394 = vmatpush.msra.mxu0 0.0
    %1395 = vmatpush.msra.mxu0 0.0
    %1396 = vmatpush.msra.mxu0 0.0
    %1397 = vmatpush.msra.mxu0 0.0
    %1398 = vmatpush.msra.mxu0 0.0
    %1399 = vmatpush.msra.mxu0 0.0
    %1400 = vmatpush.msra.mxu0 0.0
    %1401 = vmatpush.msra.mxu0 0.0
    %1402 = vmatpush.msra.mxu0 %v936
    %1403 = vmatpush.msra.mxu0 %v935
    %1404 = vmatpush.msra.mxu0 %v934
    %1405 = vmatpush.msra.mxu0 %v933
    %1406 = vmatmul.f32.gmra.mxu0 %v1388
    %v1407 = vpop.f32.mrf.mxu0
    %v1408 = vadd.f32 0.0, %v1407
    %1409 = vdwg.mxu0
    %v1410 = vadd.f32 %v1387, %v1408
    %v1411 = vtanh.pop %v1410
    %v1412 = vadd.f32 %v1411, 1.0
    %v1413 = vmul.f32 %v1412, 0.5
    %v1414 = vmul.f32 %v1413, %v1375
    %1416 = vrot.lane.b32.xlu0 %v1411, 64
    %v1417 = vpop.permute.xlu0 %1416
    %v1419 = vmul.f32 %v1413, %v1417
    %1421 = vrot.lane.b32.xlu0 %v1419, 32
    %v1422 = vpop.permute.xlu0 %1421
    %v1424 = vadd.f32 %v1414, %v1422
    %v1425 = vtanh.pop %v1424
    %1427 = vrot.lane.b32.xlu0 %v1425, 64
    %v1428 = vpop.permute.xlu0 %1427
    %v1430 = vmul.f32 %v1413, %v1428
    %1432 = vrot.lane.b32.xlu0 %v1430, 32
    %v1433 = vpop.permute.xlu0 %1432
    %1435 = vst.msk [vmem:[%s820] sm:$0xff] %vm309, %v1433
    %s1436 = scalar_lea.vmem [#allocation19], 8
    %1437 = vst.msk [vmem:[%s1436] sm:$0xff] %vm309, %v1433
    %1439 = vrot.lane.b32.xlu0 %v1424, 96
    %v1440 = vpop.permute.xlu0 %1439
    %s1442 = scalar_lea.vmem [#allocation20], 8
    %1443 = vst.msk [vmem:[%s1442] sm:$0xff] %vm309, %v1440
    %v1444 = vld [vmem:[#allocation2] sm:$0xff]
    %v1445 = vld [vmem:[#allocation2 + $0x8] sm:$0xff]
    %v1446 = vld [vmem:[#allocation2 + $0x10] sm:$0xff]
    %v1447 = vld [vmem:[#allocation2 + $0x18] sm:$0xff]
    %v1448 = vld [vmem:[#allocation2 + $0x20] sm:$0xff]
    %v1449 = vld [vmem:[#allocation2 + $0x28] sm:$0xff]
    %v1450 = vld [vmem:[#allocation2 + $0x30] sm:$0xff]
    %v1451 = vld [vmem:[#allocation2 + $0x38] sm:$0xff]
    %v1452 = vld [vmem:[#allocation2 + $0x40] sm:$0xff]
    %v1453 = vld [vmem:[#allocation2 + $0x48] sm:$0xff]
    %v1454 = vld [vmem:[#allocation15] sm:$0xff]
    %v1455 = vld [vmem:[#allocation15 + $0x8] sm:$0xff]
    %v1456 = vld [vmem:[#allocation15 + $0x10] sm:$0xff]
    %v1457 = vld [vmem:[#allocation15 + $0x18] sm:$0xff]
    %v1458 = vld [vmem:[%s11] sm:$0x1]
    %v1460 = vperm.slane %v1458, 0
    %v1463 = vsel %vm309, %v1444, 0
    %v1466 = vsel %vm309, %v1445, 0
    %v1469 = vsel %vm309, %v1446, 0
    %v1472 = vsel %vm309, %v1447, 0
    %v1475 = vsel %vm309, %v1448, 0
    %v1478 = vsel %vm309, %v1449, 0
    %v1481 = vsel %vm309, %v1450, 0
    %v1484 = vsel %vm309, %v1451, 0
    %v1487 = vsel %vm309, %v1452, 0
    %v1490 = vsel %vm309, %v1453, 0
    %1492 = vmatpush.msra.mxu0 0.0
    %1493 = vmatpush.msra.mxu0 0.0
    %1494 = vmatpush.msra.mxu0 0.0
    %1495 = vmatpush.msra.mxu0 0.0
    %1496 = vmatpush.msra.mxu0 0.0
    %1497 = vmatpush.msra.mxu0 0.0
    %1498 = vmatpush.msra.mxu0 0.0
    %1499 = vmatpush.msra.mxu0 0.0
    %1500 = vmatpush.msra.mxu0 0.0
    %1501 = vmatpush.msra.mxu0 0.0
    %1502 = vmatpush.msra.mxu0 0.0
    %1503 = vmatpush.msra.mxu0 0.0
    %1504 = vmatpush.msra.mxu0 %v1457
    %1505 = vmatpush.msra.mxu0 %v1456
    %1506 = vmatpush.msra.mxu0 %v1455
    %1507 = vmatpush.msra.mxu0 %v1454
    %1508 = vmatmul.f32.gmra.mxu0 %v1463
    %v1509 = vpop.f32.mrf.mxu0
    %v1510 = vadd.f32 %v1460, %v1509
    %1511 = vmatmul.f32.gmra.mxu0 %v1466
    %v1512 = vpop.f32.mrf.mxu0
    %v1513 = vadd.f32 %v1460, %v1512
    %1514 = vmatmul.f32.gmra.mxu0 %v1469
    %v1515 = vpop.f32.mrf.mxu0
    %v1516 = vadd.f32 %v1460, %v1515
    %1517 = vmatmul.f32.gmra.mxu0 %v1472
    %v1518 = vpop.f32.mrf.mxu0
    %v1519 = vadd.f32 %v1460, %v1518
    %1520 = vmatmul.f32.gmra.mxu0 %v1475
    %v1521 = vpop.f32.mrf.mxu0
    %v1522 = vadd.f32 %v1460, %v1521
    %1523 = vmatmul.f32.gmra.mxu0 %v1478
    %v1524 = vpop.f32.mrf.mxu0
    %v1525 = vadd.f32 %v1460, %v1524
    %1526 = vmatmul.f32.gmra.mxu0 %v1481
    %v1527 = vpop.f32.mrf.mxu0
    %v1528 = vadd.f32 %v1460, %v1527
    %1529 = vmatmul.f32.gmra.mxu0 %v1484
    %v1530 = vpop.f32.mrf.mxu0
    %v1531 = vadd.f32 %v1460, %v1530
    %1532 = vmatmul.f32.gmra.mxu0 %v1487
    %v1533 = vpop.f32.mrf.mxu0
    %v1534 = vadd.f32 %v1460, %v1533
    %1535 = vmatmul.f32.gmra.mxu0 %v1490
    %v1536 = vpop.f32.mrf.mxu0
    %v1537 = vadd.f32 %v1460, %v1536
    %1538 = vdwg.mxu0
    %1539 = vst [vmem:[#allocation3] sm:$0xff] %v1510
    %1540 = vst [vmem:[#allocation3 + $0x8] sm:$0xff] %v1513
    %1541 = vst [vmem:[#allocation3 + $0x10] sm:$0xff] %v1516
    %1542 = vst [vmem:[#allocation3 + $0x18] sm:$0xff] %v1519
    %1543 = vst [vmem:[#allocation3 + $0x20] sm:$0xff] %v1522
    %1544 = vst [vmem:[#allocation3 + $0x28] sm:$0xff] %v1525
    %1545 = vst [vmem:[#allocation3 + $0x30] sm:$0xff] %v1528
    %1546 = vst [vmem:[#allocation3 + $0x38] sm:$0xff] %v1531
    %1547 = vst [vmem:[#allocation3 + $0x40] sm:$0xff] %v1534
    %1548 = vst [vmem:[#allocation3 + $0x48] sm:$0xff] %v1537
    %v1549 = vld [vmem:[#allocation16] sm:$0xff]
    %v1550 = vld [vmem:[#allocation16 + $0x8] sm:$0xff]
    %v1551 = vld [vmem:[#allocation16 + $0x10] sm:$0xff]
    %v1552 = vld [vmem:[#allocation16 + $0x18] sm:$0xff]
    %s1553 = scalar_lea.vmem [#allocation7], 16
    %v1554 = vld [vmem:[%s1553] sm:$0xff]
    %s1555 = scalar_lea.vmem [#allocation9], 16
    %v1556 = vld [vmem:[%s1555] sm:$0xff]
    %v1557 = vld [vmem:[#allocation3] sm:$0xff]
    %v1559 = vsel %vm309, %v1554, 0
    %1561 = vmatpush.msra.mxu0 0.0
    %1562 = vmatpush.msra.mxu0 0.0
    %1563 = vmatpush.msra.mxu0 0.0
    %1564 = vmatpush.msra.mxu0 0.0
    %1565 = vmatpush.msra.mxu0 0.0
    %1566 = vmatpush.msra.mxu0 0.0
    %1567 = vmatpush.msra.mxu0 0.0
    %1568 = vmatpush.msra.mxu0 0.0
    %1569 = vmatpush.msra.mxu0 0.0
    %1570 = vmatpush.msra.mxu0 0.0
    %1571 = vmatpush.msra.mxu0 0.0
    %1572 = vmatpush.msra.mxu0 0.0
    %1573 = vmatpush.msra.mxu0 %v1552
    %1574 = vmatpush.msra.mxu0 %v1551
    %1575 = vmatpush.msra.mxu0 %v1550
    %1576 = vmatpush.msra.mxu0 %v1549
    %1577 = vmatmul.f32.gmra.mxu0 %v1559
    %v1578 = vpop.f32.mrf.mxu0
    %v1579 = vadd.f32 0.0, %v1578
    %1580 = vdwg.mxu0
    %v1581 = vadd.f32 %v1557, %v1579
    %v1582 = vtanh.pop %v1581
    %v1583 = vadd.f32 %v1582, 1.0
    %v1584 = vmul.f32 %v1583, 0.5
    %1586 = vrot.lane.b32.xlu0 %v1556, 32
    %v1587 = vpop.permute.xlu0 %1586
    %v1589 = vmul.f32 %v1584, %v1587
    %1591 = vrot.lane.b32.xlu0 %v1582, 64
    %v1592 = vpop.permute.xlu0 %1591
    %v1594 = vmul.f32 %v1584, %v1592
    %1596 = vrot.lane.b32.xlu0 %v1594, 32
    %v1597 = vpop.permute.xlu0 %1596
    %v1599 = vadd.f32 %v1589, %v1597
    %v1600 = vtanh.pop %v1599
    %1602 = vrot.lane.b32.xlu0 %v1600, 64
    %v1603 = vpop.permute.xlu0 %1602
    %v1605 = vmul.f32 %v1584, %v1603
    %1607 = vrot.lane.b32.xlu0 %v1605, 32
    %v1608 = vpop.permute.xlu0 %1607
    %1610 = vst.msk [vmem:[#allocation2] sm:$0xff] %vm309, %v1608
    %v1611 = vld [vmem:[%s363] sm:$0xff]
    %v1612 = vsel %vm309, %v1608, 0
    %1614 = vmatpush.msra.mxu0 0.0
    %1615 = vmatpush.msra.mxu0 0.0
    %1616 = vmatpush.msra.mxu0 0.0
    %1617 = vmatpush.msra.mxu0 0.0
    %1618 = vmatpush.msra.mxu0 0.0
    %1619 = vmatpush.msra.mxu0 0.0
    %1620 = vmatpush.msra.mxu0 0.0
    %1621 = vmatpush.msra.mxu0 0.0
    %1622 = vmatpush.msra.mxu0 0.0
    %1623 = vmatpush.msra.mxu0 0.0
    %1624 = vmatpush.msra.mxu0 0.0
    %1625 = vmatpush.msra.mxu0 0.0
    %1626 = vmatpush.msra.mxu0 %v1552
    %1627 = vmatpush.msra.mxu0 %v1551
    %1628 = vmatpush.msra.mxu0 %v1550
    %1629 = vmatpush.msra.mxu0 %v1549
    %1630 = vmatmul.f32.gmra.mxu0 %v1612
    %v1631 = vpop.f32.mrf.mxu0
    %v1632 = vadd.f32 0.0, %v1631
    %1633 = vdwg.mxu0
    %v1634 = vadd.f32 %v1611, %v1632
    %v1635 = vtanh.pop %v1634
    %v1636 = vadd.f32 %v1635, 1.0
    %v1637 = vmul.f32 %v1636, 0.5
    %v1638 = vmul.f32 %v1637, %v1599
    %1640 = vrot.lane.b32.xlu0 %v1635, 64
    %v1641 = vpop.permute.xlu0 %1640
    %v1643 = vmul.f32 %v1637, %v1641
    %1645 = vrot.lane.b32.xlu0 %v1643, 32
    %v1646 = vpop.permute.xlu0 %1645
    %v1648 = vadd.f32 %v1638, %v1646
    %v1649 = vtanh.pop %v1648
    %1651 = vrot.lane.b32.xlu0 %v1649, 64
    %v1652 = vpop.permute.xlu0 %1651
    %v1654 = vmul.f32 %v1637, %v1652
    %1656 = vrot.lane.b32.xlu0 %v1654, 32
    %v1657 = vpop.permute.xlu0 %1656
    %1659 = vst.msk [vmem:[%s412] sm:$0xff] %vm309, %v1657
    %v1660 = vld [vmem:[%s414] sm:$0xff]
    %v1661 = vsel %vm309, %v1657, 0
    %1663 = vmatpush.msra.mxu0 0.0
    %1664 = vmatpush.msra.mxu0 0.0
    %1665 = vmatpush.msra.mxu0 0.0
    %1666 = vmatpush.msra.mxu0 0.0
    %1667 = vmatpush.msra.mxu0 0.0
    %1668 = vmatpush.msra.mxu0 0.0
    %1669 = vmatpush.msra.mxu0 0.0
    %1670 = vmatpush.msra.mxu0 0.0
    %1671 = vmatpush.msra.mxu0 0.0
    %1672 = vmatpush.msra.mxu0 0.0
    %1673 = vmatpush.msra.mxu0 0.0
    %1674 = vmatpush.msra.mxu0 0.0
    %1675 = vmatpush.msra.mxu0 %v1552
    %1676 = vmatpush.msra.mxu0 %v1551
    %1677 = vmatpush.msra.mxu0 %v1550
    %1678 = vmatpush.msra.mxu0 %v1549
    %1679 = vmatmul.f32.gmra.mxu0 %v1661
    %v1680 = vpop.f32.mrf.mxu0
    %v1681 = vadd.f32 0.0, %v1680
    %1682 = vdwg.mxu0
    %v1683 = vadd.f32 %v1660, %v1681
    %v1684 = vtanh.pop %v1683
    %v1685 = vadd.f32 %v1684, 1.0
    %v1686 = vmul.f32 %v1685, 0.5
    %v1687 = vmul.f32 %v1686, %v1648
    %1689 = vrot.lane.b32.xlu0 %v1684, 64
    %v1690 = vpop.permute.xlu0 %1689
    %v1692 = vmul.f32 %v1686, %v1690
    %1694 = vrot.lane.b32.xlu0 %v1692, 32
    %v1695 = vpop.permute.xlu0 %1694
    %v1697 = vadd.f32 %v1687, %v1695
    %v1698 = vtanh.pop %v1697
    %1700 = vrot.lane.b32.xlu0 %v1698, 64
    %v1701 = vpop.permute.xlu0 %1700
    %v1703 = vmul.f32 %v1686, %v1701
    %1705 = vrot.lane.b32.xlu0 %v1703, 32
    %v1706 = vpop.permute.xlu0 %1705
    %1708 = vst.msk [vmem:[%s463] sm:$0xff] %vm309, %v1706
    %v1709 = vld [vmem:[%s465] sm:$0xff]
    %v1710 = vsel %vm309, %v1706, 0
    %1712 = vmatpush.msra.mxu0 0.0
    %1713 = vmatpush.msra.mxu0 0.0
    %1714 = vmatpush.msra.mxu0 0.0
    %1715 = vmatpush.msra.mxu0 0.0
    %1716 = vmatpush.msra.mxu0 0.0
    %1717 = vmatpush.msra.mxu0 0.0
    %1718 = vmatpush.msra.mxu0 0.0
    %1719 = vmatpush.msra.mxu0 0.0
    %1720 = vmatpush.msra.mxu0 0.0
    %1721 = vmatpush.msra.mxu0 0.0
    %1722 = vmatpush.msra.mxu0 0.0
    %1723 = vmatpush.msra.mxu0 0.0
    %1724 = vmatpush.msra.mxu0 %v1552
    %1725 = vmatpush.msra.mxu0 %v1551
    %1726 = vmatpush.msra.mxu0 %v1550
    %1727 = vmatpush.msra.mxu0 %v1549
    %1728 = vmatmul.f32.gmra.mxu0 %v1710
    %v1729 = vpop.f32.mrf.mxu0
    %v1730 = vadd.f32 0.0, %v1729
    %1731 = vdwg.mxu0
    %v1732 = vadd.f32 %v1709, %v1730
    %v1733 = vtanh.pop %v1732
    %v1734 = vadd.f32 %v1733, 1.0
    %v1735 = vmul.f32 %v1734, 0.5
    %v1736 = vmul.f32 %v1735, %v1697
    %1738 = vrot.lane.b32.xlu0 %v1733, 64
    %v1739 = vpop.permute.xlu0 %1738
    %v1741 = vmul.f32 %v1735, %v1739
    %1743 = vrot.lane.b32.xlu0 %v1741, 32
    %v1744 = vpop.permute.xlu0 %1743
    %v1746 = vadd.f32 %v1736, %v1744
    %v1747 = vtanh.pop %v1746
    %1749 = vrot.lane.b32.xlu0 %v1747, 64
    %v1750 = vpop.permute.xlu0 %1749
    %v1752 = vmul.f32 %v1735, %v1750
    %1754 = vrot.lane.b32.xlu0 %v1752, 32
    %v1755 = vpop.permute.xlu0 %1754
    %1757 = vst.msk [vmem:[%s514] sm:$0xff] %vm309, %v1755
    %v1758 = vld [vmem:[%s516] sm:$0xff]
    %v1759 = vsel %vm309, %v1755, 0
    %1761 = vmatpush.msra.mxu0 0.0
    %1762 = vmatpush.msra.mxu0 0.0
    %1763 = vmatpush.msra.mxu0 0.0
    %1764 = vmatpush.msra.mxu0 0.0
    %1765 = vmatpush.msra.mxu0 0.0
    %1766 = vmatpush.msra.mxu0 0.0
    %1767 = vmatpush.msra.mxu0 0.0
    %1768 = vmatpush.msra.mxu0 0.0
    %1769 = vmatpush.msra.mxu0 0.0
    %1770 = vmatpush.msra.mxu0 0.0
    %1771 = vmatpush.msra.mxu0 0.0
    %1772 = vmatpush.msra.mxu0 0.0
    %1773 = vmatpush.msra.mxu0 %v1552
    %1774 = vmatpush.msra.mxu0 %v1551
    %1775 = vmatpush.msra.mxu0 %v1550
    %1776 = vmatpush.msra.mxu0 %v1549
    %1777 = vmatmul.f32.gmra.mxu0 %v1759
    %v1778 = vpop.f32.mrf.mxu0
    %v1779 = vadd.f32 0.0, %v1778
    %1780 = vdwg.mxu0
    %v1781 = vadd.f32 %v1758, %v1779
    %v1782 = vtanh.pop %v1781
    %v1783 = vadd.f32 %v1782, 1.0
    %v1784 = vmul.f32 %v1783, 0.5
    %v1785 = vmul.f32 %v1784, %v1746
    %1787 = vrot.lane.b32.xlu0 %v1782, 64
    %v1788 = vpop.permute.xlu0 %1787
    %v1790 = vmul.f32 %v1784, %v1788
    %1792 = vrot.lane.b32.xlu0 %v1790, 32
    %v1793 = vpop.permute.xlu0 %1792
    %v1795 = vadd.f32 %v1785, %v1793
    %v1796 = vtanh.pop %v1795
    %1798 = vrot.lane.b32.xlu0 %v1796, 64
    %v1799 = vpop.permute.xlu0 %1798
    %v1801 = vmul.f32 %v1784, %v1799
    %1803 = vrot.lane.b32.xlu0 %v1801, 32
    %v1804 = vpop.permute.xlu0 %1803
    %1806 = vst.msk [vmem:[%s565] sm:$0xff] %vm309, %v1804
    %v1807 = vld [vmem:[%s567] sm:$0xff]
    %v1808 = vsel %vm309, %v1804, 0
    %1810 = vmatpush.msra.mxu0 0.0
    %1811 = vmatpush.msra.mxu0 0.0
    %1812 = vmatpush.msra.mxu0 0.0
    %1813 = vmatpush.msra.mxu0 0.0
    %1814 = vmatpush.msra.mxu0 0.0
    %1815 = vmatpush.msra.mxu0 0.0
    %1816 = vmatpush.msra.mxu0 0.0
    %1817 = vmatpush.msra.mxu0 0.0
    %1818 = vmatpush.msra.mxu0 0.0
    %1819 = vmatpush.msra.mxu0 0.0
    %1820 = vmatpush.msra.mxu0 0.0
    %1821 = vmatpush.msra.mxu0 0.0
    %1822 = vmatpush.msra.mxu0 %v1552
    %1823 = vmatpush.msra.mxu0 %v1551
    %1824 = vmatpush.msra.mxu0 %v1550
    %1825 = vmatpush.msra.mxu0 %v1549
    %1826 = vmatmul.f32.gmra.mxu0 %v1808
    %v1827 = vpop.f32.mrf.mxu0
    %v1828 = vadd.f32 0.0, %v1827
    %1829 = vdwg.mxu0
    %v1830 = vadd.f32 %v1807, %v1828
    %v1831 = vtanh.pop %v1830
    %v1832 = vadd.f32 %v1831, 1.0
    %v1833 = vmul.f32 %v1832, 0.5
    %v1834 = vmul.f32 %v1833, %v1795
    %1836 = vrot.lane.b32.xlu0 %v1831, 64
    %v1837 = vpop.permute.xlu0 %1836
    %v1839 = vmul.f32 %v1833, %v1837
    %1841 = vrot.lane.b32.xlu0 %v1839, 32
    %v1842 = vpop.permute.xlu0 %1841
    %v1844 = vadd.f32 %v1834, %v1842
    %v1845 = vtanh.pop %v1844
    %1847 = vrot.lane.b32.xlu0 %v1845, 64
    %v1848 = vpop.permute.xlu0 %1847
    %v1850 = vmul.f32 %v1833, %v1848
    %1852 = vrot.lane.b32.xlu0 %v1850, 32
    %v1853 = vpop.permute.xlu0 %1852
    %1855 = vst.msk [vmem:[%s616] sm:$0xff] %vm309, %v1853
    %v1856 = vld [vmem:[%s618] sm:$0xff]
    %v1857 = vsel %vm309, %v1853, 0
    %1859 = vmatpush.msra.mxu0 0.0
    %1860 = vmatpush.msra.mxu0 0.0
    %1861 = vmatpush.msra.mxu0 0.0
    %1862 = vmatpush.msra.mxu0 0.0
    %1863 = vmatpush.msra.mxu0 0.0
    %1864 = vmatpush.msra.mxu0 0.0
    %1865 = vmatpush.msra.mxu0 0.0
    %1866 = vmatpush.msra.mxu0 0.0
    %1867 = vmatpush.msra.mxu0 0.0
    %1868 = vmatpush.msra.mxu0 0.0
    %1869 = vmatpush.msra.mxu0 0.0
    %1870 = vmatpush.msra.mxu0 0.0
    %1871 = vmatpush.msra.mxu0 %v1552
    %1872 = vmatpush.msra.mxu0 %v1551
    %1873 = vmatpush.msra.mxu0 %v1550
    %1874 = vmatpush.msra.mxu0 %v1549
    %1875 = vmatmul.f32.gmra.mxu0 %v1857
    %v1876 = vpop.f32.mrf.mxu0
    %v1877 = vadd.f32 0.0, %v1876
    %1878 = vdwg.mxu0
    %v1879 = vadd.f32 %v1856, %v1877
    %v1880 = vtanh.pop %v1879
    %v1881 = vadd.f32 %v1880, 1.0
    %v1882 = vmul.f32 %v1881, 0.5
    %v1883 = vmul.f32 %v1882, %v1844
    %1885 = vrot.lane.b32.xlu0 %v1880, 64
    %v1886 = vpop.permute.xlu0 %1885
    %v1888 = vmul.f32 %v1882, %v1886
    %1890 = vrot.lane.b32.xlu0 %v1888, 32
    %v1891 = vpop.permute.xlu0 %1890
    %v1893 = vadd.f32 %v1883, %v1891
    %v1894 = vtanh.pop %v1893
    %1896 = vrot.lane.b32.xlu0 %v1894, 64
    %v1897 = vpop.permute.xlu0 %1896
    %v1899 = vmul.f32 %v1882, %v1897
    %1901 = vrot.lane.b32.xlu0 %v1899, 32
    %v1902 = vpop.permute.xlu0 %1901
    %1904 = vst.msk [vmem:[%s667] sm:$0xff] %vm309, %v1902
    %v1905 = vld [vmem:[%s669] sm:$0xff]
    %v1906 = vsel %vm309, %v1902, 0
    %1908 = vmatpush.msra.mxu0 0.0
    %1909 = vmatpush.msra.mxu0 0.0
    %1910 = vmatpush.msra.mxu0 0.0
    %1911 = vmatpush.msra.mxu0 0.0
    %1912 = vmatpush.msra.mxu0 0.0
    %1913 = vmatpush.msra.mxu0 0.0
    %1914 = vmatpush.msra.mxu0 0.0
    %1915 = vmatpush.msra.mxu0 0.0
    %1916 = vmatpush.msra.mxu0 0.0
    %1917 = vmatpush.msra.mxu0 0.0
    %1918 = vmatpush.msra.mxu0 0.0
    %1919 = vmatpush.msra.mxu0 0.0
    %1920 = vmatpush.msra.mxu0 %v1552
    %1921 = vmatpush.msra.mxu0 %v1551
    %1922 = vmatpush.msra.mxu0 %v1550
    %1923 = vmatpush.msra.mxu0 %v1549
    %1924 = vmatmul.f32.gmra.mxu0 %v1906
    %v1925 = vpop.f32.mrf.mxu0
    %v1926 = vadd.f32 0.0, %v1925
    %1927 = vdwg.mxu0
    %v1928 = vadd.f32 %v1905, %v1926
    %v1929 = vtanh.pop %v1928
    %v1930 = vadd.f32 %v1929, 1.0
    %v1931 = vmul.f32 %v1930, 0.5
    %v1932 = vmul.f32 %v1931, %v1893
    %1934 = vrot.lane.b32.xlu0 %v1929, 64
    %v1935 = vpop.permute.xlu0 %1934
    %v1937 = vmul.f32 %v1931, %v1935
    %1939 = vrot.lane.b32.xlu0 %v1937, 32
    %v1940 = vpop.permute.xlu0 %1939
    %v1942 = vadd.f32 %v1932, %v1940
    %v1943 = vtanh.pop %v1942
    %1945 = vrot.lane.b32.xlu0 %v1943, 64
    %v1946 = vpop.permute.xlu0 %1945
    %v1948 = vmul.f32 %v1931, %v1946
    %1950 = vrot.lane.b32.xlu0 %v1948, 32
    %v1951 = vpop.permute.xlu0 %1950
    %1953 = vst.msk [vmem:[%s718] sm:$0xff] %vm309, %v1951
    %v1954 = vld [vmem:[%s720] sm:$0xff]
    %v1955 = vsel %vm309, %v1951, 0
    %1957 = vmatpush.msra.mxu0 0.0
    %1958 = vmatpush.msra.mxu0 0.0
    %1959 = vmatpush.msra.mxu0 0.0
    %1960 = vmatpush.msra.mxu0 0.0
    %1961 = vmatpush.msra.mxu0 0.0
    %1962 = vmatpush.msra.mxu0 0.0
    %1963 = vmatpush.msra.mxu0 0.0
    %1964 = vmatpush.msra.mxu0 0.0
    %1965 = vmatpush.msra.mxu0 0.0
    %1966 = vmatpush.msra.mxu0 0.0
    %1967 = vmatpush.msra.mxu0 0.0
    %1968 = vmatpush.msra.mxu0 0.0
    %1969 = vmatpush.msra.mxu0 %v1552
    %1970 = vmatpush.msra.mxu0 %v1551
    %1971 = vmatpush.msra.mxu0 %v1550
    %1972 = vmatpush.msra.mxu0 %v1549
    %1973 = vmatmul.f32.gmra.mxu0 %v1955
    %v1974 = vpop.f32.mrf.mxu0
    %v1975 = vadd.f32 0.0, %v1974
    %1976 = vdwg.mxu0
    %v1977 = vadd.f32 %v1954, %v1975
    %v1978 = vtanh.pop %v1977
    %v1979 = vadd.f32 %v1978, 1.0
    %v1980 = vmul.f32 %v1979, 0.5
    %v1981 = vmul.f32 %v1980, %v1942
    %1983 = vrot.lane.b32.xlu0 %v1978, 64
    %v1984 = vpop.permute.xlu0 %1983
    %v1986 = vmul.f32 %v1980, %v1984
    %1988 = vrot.lane.b32.xlu0 %v1986, 32
    %v1989 = vpop.permute.xlu0 %1988
    %v1991 = vadd.f32 %v1981, %v1989
    %v1992 = vtanh.pop %v1991
    %1994 = vrot.lane.b32.xlu0 %v1992, 64
    %v1995 = vpop.permute.xlu0 %1994
    %v1997 = vmul.f32 %v1980, %v1995
    %1999 = vrot.lane.b32.xlu0 %v1997, 32
    %v2000 = vpop.permute.xlu0 %1999
    %2002 = vst.msk [vmem:[%s769] sm:$0xff] %vm309, %v2000
    %v2003 = vld [vmem:[%s771] sm:$0xff]
    %v2004 = vsel %vm309, %v2000, 0
    %2006 = vmatpush.msra.mxu0 0.0
    %2007 = vmatpush.msra.mxu0 0.0
    %2008 = vmatpush.msra.mxu0 0.0
    %2009 = vmatpush.msra.mxu0 0.0
    %2010 = vmatpush.msra.mxu0 0.0
    %2011 = vmatpush.msra.mxu0 0.0
    %2012 = vmatpush.msra.mxu0 0.0
    %2013 = vmatpush.msra.mxu0 0.0
    %2014 = vmatpush.msra.mxu0 0.0
    %2015 = vmatpush.msra.mxu0 0.0
    %2016 = vmatpush.msra.mxu0 0.0
    %2017 = vmatpush.msra.mxu0 0.0
    %2018 = vmatpush.msra.mxu0 %v1552
    %2019 = vmatpush.msra.mxu0 %v1551
    %2020 = vmatpush.msra.mxu0 %v1550
    %2021 = vmatpush.msra.mxu0 %v1549
    %2022 = vmatmul.f32.gmra.mxu0 %v2004
    %v2023 = vpop.f32.mrf.mxu0
    %v2024 = vadd.f32 0.0, %v2023
    %2025 = vdwg.mxu0
    %v2026 = vadd.f32 %v2003, %v2024
    %v2027 = vtanh.pop %v2026
    %v2028 = vadd.f32 %v2027, 1.0
    %v2029 = vmul.f32 %v2028, 0.5
    %v2030 = vmul.f32 %v2029, %v1991
    %2032 = vrot.lane.b32.xlu0 %v2027, 64
    %v2033 = vpop.permute.xlu0 %2032
    %v2035 = vmul.f32 %v2029, %v2033
    %2037 = vrot.lane.b32.xlu0 %v2035, 32
    %v2038 = vpop.permute.xlu0 %2037
    %v2040 = vadd.f32 %v2030, %v2038
    %v2041 = vtanh.pop %v2040
    %2043 = vrot.lane.b32.xlu0 %v2041, 64
    %v2044 = vpop.permute.xlu0 %2043
    %v2046 = vmul.f32 %v2029, %v2044
    %2048 = vrot.lane.b32.xlu0 %v2046, 32
    %v2049 = vpop.permute.xlu0 %2048
    %2051 = vst.msk [vmem:[%s820] sm:$0xff] %vm309, %v2049
    %s2052 = scalar_lea.vmem [#allocation19], 16
    %2053 = vst.msk [vmem:[%s2052] sm:$0xff] %vm309, %v2049
    %2055 = vrot.lane.b32.xlu0 %v2040, 96
    %v2056 = vpop.permute.xlu0 %2055
    %s2058 = scalar_lea.vmem [#allocation20], 16
    %2059 = vst.msk [vmem:[%s2058] sm:$0xff] %vm309, %v2056
    %v2060 = vld [vmem:[#allocation2] sm:$0xff]
    %v2061 = vld [vmem:[#allocation2 + $0x8] sm:$0xff]
    %v2062 = vld [vmem:[#allocation2 + $0x10] sm:$0xff]
    %v2063 = vld [vmem:[#allocation2 + $0x18] sm:$0xff]
    %v2064 = vld [vmem:[#allocation2 + $0x20] sm:$0xff]
    %v2065 = vld [vmem:[#allocation2 + $0x28] sm:$0xff]
    %v2066 = vld [vmem:[#allocation2 + $0x30] sm:$0xff]
    %v2067 = vld [vmem:[#allocation2 + $0x38] sm:$0xff]
    %v2068 = vld [vmem:[#allocation2 + $0x40] sm:$0xff]
    %v2069 = vld [vmem:[#allocation2 + $0x48] sm:$0xff]
    %v2070 = vld [vmem:[#allocation18] sm:$0xff]
    %v2071 = vld [vmem:[#allocation18 + $0x8] sm:$0xff]
    %v2072 = vld [vmem:[#allocation18 + $0x10] sm:$0xff]
    %v2073 = vld [vmem:[#allocation18 + $0x18] sm:$0xff]
    %v2074 = vld [vmem:[%s13] sm:$0x1]
    %v2076 = vperm.slane %v2074, 0
    %v2079 = vsel %vm309, %v2060, 0
    %v2082 = vsel %vm309, %v2061, 0
    %v2085 = vsel %vm309, %v2062, 0
    %v2088 = vsel %vm309, %v2063, 0
    %v2091 = vsel %vm309, %v2064, 0
    %v2094 = vsel %vm309, %v2065, 0
    %v2097 = vsel %vm309, %v2066, 0
    %v2100 = vsel %vm309, %v2067, 0
    %v2103 = vsel %vm309, %v2068, 0
    %v2106 = vsel %vm309, %v2069, 0
    %2108 = vmatpush.msra.mxu0 0.0
    %2109 = vmatpush.msra.mxu0 0.0
    %2110 = vmatpush.msra.mxu0 0.0
    %2111 = vmatpush.msra.mxu0 0.0
    %2112 = vmatpush.msra.mxu0 0.0
    %2113 = vmatpush.msra.mxu0 0.0
    %2114 = vmatpush.msra.mxu0 0.0
    %2115 = vmatpush.msra.mxu0 0.0
    %2116 = vmatpush.msra.mxu0 0.0
    %2117 = vmatpush.msra.mxu0 0.0
    %2118 = vmatpush.msra.mxu0 0.0
    %2119 = vmatpush.msra.mxu0 0.0
    %2120 = vmatpush.msra.mxu0 %v2073
    %2121 = vmatpush.msra.mxu0 %v2072
    %2122 = vmatpush.msra.mxu0 %v2071
    %2123 = vmatpush.msra.mxu0 %v2070
    %2124 = vmatmul.f32.gmra.mxu0 %v2079
    %v2125 = vpop.f32.mrf.mxu0
    %v2126 = vadd.f32 %v2076, %v2125
    %2127 = vmatmul.f32.gmra.mxu0 %v2082
    %v2128 = vpop.f32.mrf.mxu0
    %v2129 = vadd.f32 %v2076, %v2128
    %2130 = vmatmul.f32.gmra.mxu0 %v2085
    %v2131 = vpop.f32.mrf.mxu0
    %v2132 = vadd.f32 %v2076, %v2131
    %2133 = vmatmul.f32.gmra.mxu0 %v2088
    %v2134 = vpop.f32.mrf.mxu0
    %v2135 = vadd.f32 %v2076, %v2134
    %2136 = vmatmul.f32.gmra.mxu0 %v2091
    %v2137 = vpop.f32.mrf.mxu0
    %v2138 = vadd.f32 %v2076, %v2137
    %2139 = vmatmul.f32.gmra.mxu0 %v2094
    %v2140 = vpop.f32.mrf.mxu0
    %v2141 = vadd.f32 %v2076, %v2140
    %2142 = vmatmul.f32.gmra.mxu0 %v2097
    %v2143 = vpop.f32.mrf.mxu0
    %v2144 = vadd.f32 %v2076, %v2143
    %2145 = vmatmul.f32.gmra.mxu0 %v2100
    %v2146 = vpop.f32.mrf.mxu0
    %v2147 = vadd.f32 %v2076, %v2146
    %2148 = vmatmul.f32.gmra.mxu0 %v2103
    %v2149 = vpop.f32.mrf.mxu0
    %v2150 = vadd.f32 %v2076, %v2149
    %2151 = vmatmul.f32.gmra.mxu0 %v2106
    %v2152 = vpop.f32.mrf.mxu0
    %v2153 = vadd.f32 %v2076, %v2152
    %2154 = vdwg.mxu0
    %v2155 = vtanh.pop %v2126
    %v2156 = vtanh.pop %v2129
    %v2157 = vtanh.pop %v2132
    %v2158 = vtanh.pop %v2135
    %v2159 = vtanh.pop %v2138
    %v2160 = vtanh.pop %v2141
    %v2161 = vtanh.pop %v2144
    %v2162 = vtanh.pop %v2147
    %v2163 = vtanh.pop %v2150
    %v2164 = vtanh.pop %v2153
    %v2165 = vld [vmem:[%s14] sm:$0xff]
    %v2166 = vld [vmem:[%s14 + $0x8] sm:$0xff]
    %v2167 = vld [vmem:[%s14 + $0x10] sm:$0xff]
    %v2168 = vld [vmem:[%s14 + $0x18] sm:$0xff]
    %v2169 = vld [vmem:[%s15] sm:$0x1]
    %v2171 = vperm.slane %v2169, 0
    %v2174 = vsel %vm309, %v2155, 0
    %v2177 = vsel %vm309, %v2156, 0
    %v2180 = vsel %vm309, %v2157, 0
    %v2183 = vsel %vm309, %v2158, 0
    %v2186 = vsel %vm309, %v2159, 0
    %v2189 = vsel %vm309, %v2160, 0
    %v2192 = vsel %vm309, %v2161, 0
    %v2195 = vsel %vm309, %v2162, 0
    %v2198 = vsel %vm309, %v2163, 0
    %v2201 = vsel %vm309, %v2164, 0
    %2203 = vmatpush.msra.mxu0 0.0
    %2204 = vmatpush.msra.mxu0 0.0
    %2205 = vmatpush.msra.mxu0 0.0
    %2206 = vmatpush.msra.mxu0 0.0
    %2207 = vmatpush.msra.mxu0 0.0
    %2208 = vmatpush.msra.mxu0 0.0
    %2209 = vmatpush.msra.mxu0 0.0
    %2210 = vmatpush.msra.mxu0 0.0
    %2211 = vmatpush.msra.mxu0 0.0
    %2212 = vmatpush.msra.mxu0 0.0
    %2213 = vmatpush.msra.mxu0 0.0
    %2214 = vmatpush.msra.mxu0 0.0
    %2215 = vmatpush.msra.mxu0 %v2168
    %2216 = vmatpush.msra.mxu0 %v2167
    %2217 = vmatpush.msra.mxu0 %v2166
    %2218 = vmatpush.msra.mxu0 %v2165
    %2219 = vmatmul.f32.gmra.mxu0 %v2174
    %v2220 = vpop.f32.mrf.mxu0
    %v2221 = vadd.f32 %v2171, %v2220
    %2222 = vmatmul.f32.gmra.mxu0 %v2177
    %v2223 = vpop.f32.mrf.mxu0
    %v2224 = vadd.f32 %v2171, %v2223
    %2225 = vmatmul.f32.gmra.mxu0 %v2180
    %v2226 = vpop.f32.mrf.mxu0
    %v2227 = vadd.f32 %v2171, %v2226
    %2228 = vmatmul.f32.gmra.mxu0 %v2183
    %v2229 = vpop.f32.mrf.mxu0
    %v2230 = vadd.f32 %v2171, %v2229
    %2231 = vmatmul.f32.gmra.mxu0 %v2186
    %v2232 = vpop.f32.mrf.mxu0
    %v2233 = vadd.f32 %v2171, %v2232
    %2234 = vmatmul.f32.gmra.mxu0 %v2189
    %v2235 = vpop.f32.mrf.mxu0
    %v2236 = vadd.f32 %v2171, %v2235
    %2237 = vmatmul.f32.gmra.mxu0 %v2192
    %v2238 = vpop.f32.mrf.mxu0
    %v2239 = vadd.f32 %v2171, %v2238
    %2240 = vmatmul.f32.gmra.mxu0 %v2195
    %v2241 = vpop.f32.mrf.mxu0
    %v2242 = vadd.f32 %v2171, %v2241
    %2243 = vmatmul.f32.gmra.mxu0 %v2198
    %v2244 = vpop.f32.mrf.mxu0
    %v2245 = vadd.f32 %v2171, %v2244
    %2246 = vmatmul.f32.gmra.mxu0 %v2201
    %v2247 = vpop.f32.mrf.mxu0
    %v2248 = vadd.f32 %v2171, %v2247
    %2249 = vdwg.mxu0
    %vm2250 = vcmask 64512
    %2251 = vst.msk [vmem:[%s16] sm:$0xff] %vm2250, %v2221
    %2252 = vst.msk [vmem:[%s16 + $0x8] sm:$0xff] %vm2250, %v2224
    %2253 = vst.msk [vmem:[%s16 + $0x10] sm:$0xff] %vm2250, %v2227
    %2254 = vst.msk [vmem:[%s16 + $0x18] sm:$0xff] %vm2250, %v2230
    %2255 = vst.msk [vmem:[%s16 + $0x20] sm:$0xff] %vm2250, %v2233
    %2256 = vst.msk [vmem:[%s16 + $0x28] sm:$0xff] %vm2250, %v2236
    %2257 = vst.msk [vmem:[%s16 + $0x30] sm:$0xff] %vm2250, %v2239
    %2258 = vst.msk [vmem:[%s16 + $0x38] sm:$0xff] %vm2250, %v2242
    %2259 = vst.msk [vmem:[%s16 + $0x40] sm:$0xff] %vm2250, %v2245
    %2260 = vst.msk [vmem:[%s16 + $0x48] sm:$0xff] %vm2250, %v2248
    // Predicated region
    $region102: #{tpu_custom_call.1} parent=1 // pred_check
      _
    $region103: #{tpu_custom_call.1} parent=1 // pred_check_branch
      %2262 = sbr.rel (0) target = $region105
    $region104: #{tpu_custom_call.1} parent=1 // pred_region
      _
    $region105: #{tpu_custom_call.1} parent=1 // pred_fallthru
      _
    // Predicated region
    $region106: #{tpu_custom_call.1} parent=1 // pred_check
      _
    $region107: #{tpu_custom_call.1} parent=1 // pred_check_branch
      %2264 = sbr.rel (0) target = $region109
    $region108: #{tpu_custom_call.1} parent=1 // pred_region
      %2266 = vsyncadd [#allocation6], 0
      %s2267 = sshll.u32 [#allocation19], 4
      %s2268 = int_to_ptr.vmem [resolvable:$true] %s2267
      %s2269 = sshll.u32 %s17, 4
      %s2270 = int_to_ptr.hbm [resolvable:$true] %s2269
      %2275 = dma.vmem_to_hbm [thread:$0]  %s2268, 384, %s2270, [#allocation6], 128, 128, 8
    $region109: #{tpu_custom_call.1} parent=1 // pred_fallthru
      _
    // Predicated region
    $region110: #{tpu_custom_call.1} parent=1 // pred_check
      _
    $region111: #{tpu_custom_call.1} parent=1 // pred_check_branch
      %2277 = sbr.rel (0) target = $region113
    $region112: #{tpu_custom_call.1} parent=1 // pred_region
      %2279 = vsyncadd [#allocation21], 0
      %s2280 = sshll.u32 [#allocation20], 4
      %s2281 = int_to_ptr.vmem [resolvable:$true] %s2280
      %s2282 = sshll.u32 %s18, 4
      %s2283 = int_to_ptr.hbm [resolvable:$true] %s2282
      %2288 = dma.vmem_to_hbm [thread:$0]  %s2281, 384, %s2283, [#allocation21], 128, 128, 8
    $region113: #{tpu_custom_call.1} parent=1 // pred_fallthru
      _
    // Predicated region
    $region114: #{tpu_custom_call.1} parent=1 // pred_check
      _
    $region115: #{tpu_custom_call.1} parent=1 // pred_check_branch
      %2290 = sbr.rel (0) target = $region117
    $region116: #{tpu_custom_call.1} parent=1 // pred_region
      _
    $region117: #{tpu_custom_call.1} parent=1 // pred_fallthru
      _
    // Predicated region
    $region118: #{tpu_custom_call.1} parent=1 // pred_check
      _
    $region119: #{tpu_custom_call.1} parent=1 // pred_check_branch
      %2292 = sbr.rel (0) target = $region121
    $region120: #{tpu_custom_call.1} parent=1 // pred_region
      %2294 = dma.done [#allocation6], 384
    $region121: #{tpu_custom_call.1} parent=1 // pred_fallthru
      _
    // Predicated region
    $region122: #{tpu_custom_call.1} parent=1 // pred_check
      _
    $region123: #{tpu_custom_call.1} parent=1 // pred_check_branch
      %2296 = sbr.rel (0) target = $region125
    $region124: #{tpu_custom_call.1} parent=1 // pred_region
      %2298 = dma.done [#allocation21], 384
    $region125: #{tpu_custom_call.1} parent=1 // pred_fallthru
      _
    %2299 = vsyncpa [#allocation5], 1
    %2300 = vsyncpa [#allocation8], 1
    %2301 = vsyncpa [#allocation11], 1
    %2302 = vsyncpa [#allocation14], 1
    %2303 = vsyncpa [#allocation17], 1
    %2304 = vsyncpa [#allocation6], 1
    %2305 = vsyncpa [#allocation21], 1

</llo_original>
